<compile_context>
chip_gen: v6e
topology: v6e:2x2x1
jax: 0.10.0
libtpu: 0.0.40
codegen_flags: <defaults>
</compile_context>

<pallas_src>
import jax
import jax.numpy as jnp
from jax.experimental import pallas as pl
from jax.experimental.pallas import tpu as pltpu

NB = 8                      # images per grid step (batch-stacked along sublanes)
R1 = NB * 32 - 4            # conv1 output rows in the stacked slab (=252)
R2 = NB * 14 - 4            # conv2 output rows in the stacked slab (=108)
W1C = 28 * 6                # conv1 output lane width  (168)
P1C = 14 * 6                # pool1 output lane width  (84)
W2C = 10 * 16               # conv2 output lane width  (160)
P2C = 5 * 16                # pool2 output lane width  (80)
TPAD = 128                  # lane-aligned offset of the second selector half


# ------------------------------ fused kernel ------------------------------- #

def _lenet_kernel(x_ref, w1_ref, b1_ref, s1_ref, t1_ref,
                  w2_ref, b2_ref, s2_ref, t2_ref,
                  wf1_ref, bf1_ref, wf2_ref, bf2_ref, wf3_ref, bf3_ref,
                  out_ref):
    f32, bf16 = jnp.float32, jnp.bfloat16

    # ---- conv1 (5x5, 3->6) + bias + ReLU over the whole (NB*32, 96) slab ----
    # rows = b*32 + h, cols = w*3 + c.  5 row-shifted taps accumulated in f32.
    acc1 = jnp.dot(x_ref[0:R1, :].astype(bf16), w1_ref[0],
                   preferred_element_type=f32)
    for ky in range(1, 5):
        acc1 = acc1 + jnp.dot(x_ref[ky:ky + R1, :].astype(bf16), w1_ref[ky],
                              preferred_element_type=f32)
    y1 = jnp.maximum(acc1 + b1_ref[...], 0.0).astype(bf16)          # (R1, 168)

    # ---- maxpool1 2x2: one matmul per axis (concatenated selectors) --------
    rr = jnp.dot(s1_ref[...], y1, preferred_element_type=f32)       # (224, 168)
    r1 = jnp.maximum(rr[0:NB * 14, :], rr[NB * 14:2 * NB * 14, :]).astype(bf16)
    cc = jnp.dot(r1, t1_ref[...], preferred_element_type=f32)       # (112, 212)
    p1 = jnp.maximum(cc[:, 0:P1C], cc[:, TPAD:TPAD + P1C])          # (112, 84) f32

    # ---- conv2 (5x5, 6->16) + bias + ReLU -----------------------------------
    acc2 = jnp.dot(p1[0:R2, :].astype(bf16), w2_ref[0],
                   preferred_element_type=f32)
    for ky in range(1, 5):
        acc2 = acc2 + jnp.dot(p1[ky:ky + R2, :].astype(bf16), w2_ref[ky],
                              preferred_element_type=f32)
    y2 = jnp.maximum(acc2 + b2_ref[...], 0.0).astype(bf16)          # (R2, 160)

    # ---- maxpool2 2x2 (rows emitted h-major: hp*NB + b, tile-aligned for fc1)
    rr2 = jnp.dot(s2_ref[...], y2, preferred_element_type=f32)      # (80, 160)
    r2 = jnp.maximum(rr2[0:NB * 5, :], rr2[NB * 5:2 * NB * 5, :]).astype(bf16)
    cc2 = jnp.dot(r2, t2_ref[...], preferred_element_type=f32)      # (40, 208)
    p2 = jnp.maximum(cc2[:, 0:P2C], cc2[:, TPAD:TPAD + P2C])        # (40, 80) f32

    # ---- fc1 + ReLU: batched (NB, 80) @ (80, 120), accumulated over h -------
    h1 = jnp.dot(p2[0:NB, :].astype(bf16), wf1_ref[0],
                 preferred_element_type=f32)
    for hh in range(1, 5):
        h1 = h1 + jnp.dot(p2[hh * NB:(hh + 1) * NB, :].astype(bf16),
                          wf1_ref[hh], preferred_element_type=f32)
    h1 = jnp.maximum(h1 + bf1_ref[...], 0.0)                        # (NB, 120)

    # ---- fc2 + ReLU, fc3 (lane-dense, logits zero-padded to 128) -----------
    h2 = jnp.dot(h1.astype(bf16), wf2_ref[...], preferred_element_type=f32)
    h2 = jnp.maximum(h2 + bf2_ref[...], 0.0)                        # (NB, 84)
    h3 = jnp.dot(h2.astype(bf16), wf3_ref[...], preferred_element_type=f32)
    out_ref[...] = (h3 + bf3_ref[...]).astype(out_ref.dtype)        # (NB, 128)


# ---------------------- one-time parameter preparation ---------------------- #

def _toeplitz_conv_weight(w_oihw, win, wout):
    """Fold im2col's kx window into a (5, win*Cin, wout*Cout) weight.

    Row index of plane ky is w_full*Cin + ci (matches the (H, W*C) activation
    layout); column index is w_out*Cout + co.
    """
    cout, cin, kh, kw = w_oihw.shape                         # (Cout, Cin, 5, 5)
    w_taps = jnp.transpose(w_oihw, (2, 3, 1, 0))             # (ky, kx, ci, co)
    shift = (jnp.arange(win)[None, :, None] ==
             jnp.arange(wout)[None, None, :] + jnp.arange(kw)[:, None, None])
    shift = shift.astype(jnp.float32)                        # (kx, Wfull, Wout)
    big = jnp.einsum("kwv,ykab->ywavb", shift, w_taps)       # (ky,Wf,Ci,Wo,Co)
    return big.reshape(kh, win * cin, wout * cout)


def _pool_row_selector(nb, stride_in, rows_out, total_in, h_major):
    """(2*nb*rows_out, total_in) 0/1 matrix: top half selects the even row of
    each 2x1 pair, bottom half the odd row; garbage boundary rows never hit."""
    j = jnp.arange(nb * rows_out)
    if h_major:
        hp, b = j // nb, j % nb          # output row = hp*nb + b
    else:
        b, hp = j // rows_out, j % rows_out   # output row = b*rows_out + hp
    src = b * stride_in + 2 * hp
    cols = jnp.arange(total_in)
    sa = (cols[None, :] == src[:, None]).astype(jnp.float32)
    sb = (cols[None, :] == (src + 1)[:, None]).astype(jnp.float32)
    return jnp.concatenate([sa, sb], axis=0)


def _pool_col_selector(w, c):
    """(w*c, 128 + (w//2)*c) 0/1 matrix: cols [0, wp*c) select even-w columns,
    cols [128, 128+wp*c) select odd-w columns (second half lane-aligned)."""
    wp = w // 2
    j = jnp.arange(wp * c)
    src = 2 * c * (j // c) + (j % c)
    cols = jnp.arange(w * c)
    ta = (cols[:, None] == src[None, :]).astype(jnp.float32)
    tb = (cols[:, None] == (src + c)[None, :]).astype(jnp.float32)
    pad = jnp.zeros((w * c, TPAD - wp * c), jnp.float32)
    return jnp.concatenate([ta, pad, tb], axis=1)


def init_params(key):
    ks = jax.random.split(key, 10)
    scale = 0.05
    f32 = jnp.float32
    return {
        "conv1_w": scale * jax.random.normal(ks[0], (6, 3, 5, 5), f32),
        "conv1_b": scale * jax.random.normal(ks[1], (6,), f32),
        "conv2_w": scale * jax.random.normal(ks[2], (16, 6, 5, 5), f32),
        "conv2_b": scale * jax.random.normal(ks[3], (16,), f32),
        "fc1_w": scale * jax.random.normal(ks[4], (120, 400), f32),
        "fc1_b": scale * jax.random.normal(ks[5], (120,), f32),
        "fc2_w": scale * jax.random.normal(ks[6], (84, 120), f32),
        "fc2_b": scale * jax.random.normal(ks[7], (84,), f32),
        "fc3_w": scale * jax.random.normal(ks[8], (10, 84), f32),
        "fc3_b": scale * jax.random.normal(ks[9], (10,), f32),
    }


def prepare_params(params):
    """One-time weight folding / layout prep (NOT executed per forward)."""
    bf16, f32 = jnp.bfloat16, jnp.float32
    # fc1 consumes p2's (w*16 + c) columns per h-row; fold torch.flatten's
    # (c, h, w) ordering into the weight: wf1[h, w*16+c, o] = fc1_w[o, c, h, w].
    wf1 = jnp.transpose(params["fc1_w"].reshape(120, 16, 5, 5),
                        (2, 3, 1, 0)).reshape(5, 80, 120)
    wf3 = jnp.zeros((84, TPAD), f32).at[:, :10].set(params["fc3_w"].T)
    bf3 = jnp.zeros((1, TPAD), f32).at[0, :10].set(params["fc3_b"])
    return {
        "w1": _toeplitz_conv_weight(params["conv1_w"], 32, 28).astype(bf16),
        "b1": jnp.tile(params["conv1_b"], 28).reshape(1, W1C).astype(f32),
        "s1": _pool_row_selector(NB, 32, 14, R1, h_major=False).astype(bf16),
        "t1": _pool_col_selector(28, 6).astype(bf16),
        "w2": _toeplitz_conv_weight(params["conv2_w"], 14, 10).astype(bf16),
        "b2": jnp.tile(params["conv2_b"], 10).reshape(1, W2C).astype(f32),
        "s2": _pool_row_selector(NB, 14, 5, R2, h_major=True).astype(bf16),
        "t2": _pool_col_selector(10, 16).astype(bf16),
        "wf1": wf1.astype(bf16),
        "bf1": params["fc1_b"].reshape(1, 120).astype(f32),
        "wf2": params["fc2_w"].T.astype(bf16),
        "bf2": params["fc2_b"].reshape(1, 84).astype(f32),
        "wf3": wf3.astype(bf16),
        "bf3": bf3,
    }


# ------------------------------- forward pass ------------------------------- #

def net_forward(prep, x_nchw):
    n, c, h, w = x_nchw.shape                     # (N, 3, 32, 32)
    n_pad = ((n + NB - 1) // NB) * NB
    if n_pad != n:
        x_nchw = jnp.pad(x_nchw, ((0, n_pad - n), (0, 0), (0, 0), (0, 0)))
    # NCHW -> batch-stacked (N*H, W*C) slab; kept f32 so the row-shifted conv
    # tap loads are plain (unpacked) sublane-offset loads.
    x = jnp.transpose(x_nchw, (0, 2, 3, 1)).reshape(n_pad * h, w * c)
    x = x.astype(jnp.float32)

    operands = [x, prep["w1"], prep["b1"], prep["s1"], prep["t1"],
                prep["w2"], prep["b2"], prep["s2"], prep["t2"],
                prep["wf1"], prep["bf1"], prep["wf2"], prep["bf2"],
                prep["wf3"], prep["bf3"]]

    def _rep(shape):
        zero = (0,) * len(shape)
        return pl.BlockSpec(shape, lambda i, _z=zero: _z)

    in_specs = [pl.BlockSpec((NB * h, w * c), lambda i: (i, 0))]
    in_specs += [_rep(op.shape) for op in operands[1:]]

    steps = n_pad // NB
    macs = (5 * R1 * 96 * W1C + (2 * NB * 14) * R1 * W1C
            + (NB * 14) * W1C * (TPAD + P1C)
            + 5 * R2 * P1C * W2C + (2 * NB * 5) * R2 * W2C
            + (NB * 5) * W2C * (TPAD + P2C)
            + 5 * NB * 80 * 120 + NB * 120 * 84 + NB * 84 * TPAD)
    in_bytes = sum(int(op.size) * op.dtype.itemsize for op in operands)
    cost = pl.CostEstimate(flops=2 * macs * steps, transcendentals=0,
                           bytes_accessed=in_bytes + n_pad * TPAD * 4)

    out = pl.pallas_call(
        _lenet_kernel,
        out_shape=jax.ShapeDtypeStruct((n_pad, TPAD), jnp.float32),
        grid=(steps,),
        in_specs=in_specs,
        out_specs=pl.BlockSpec((NB, TPAD), lambda i: (i, 0)),
        compiler_params=pltpu.CompilerParams(
            dimension_semantics=("parallel",)),
        cost_estimate=cost,
    )(*operands)
    return out[:n, :10]


# ------------------------ pure-JAX f32 reference ---------------------------- #

def net_reference(params, x_nchw):
    y = jax.lax.conv(x_nchw, params["conv1_w"], (1, 1), "VALID")
    y = jax.nn.relu(y + params["conv1_b"][None, :, None, None])
    y = jax.lax.reduce_window(y, -jnp.inf, jax.lax.max,
                              (1, 1, 2, 2), (1, 1, 2, 2), "VALID")
    y = jax.lax.conv(y, params["conv2_w"], (1, 1), "VALID")
    y = jax.nn.relu(y + params["conv2_b"][None, :, None, None])
    y = jax.lax.reduce_window(y, -jnp.inf, jax.lax.max,
                              (1, 1, 2, 2), (1, 1, 2, 2), "VALID")
    y = y.reshape(y.shape[0], -1)                       # torch.flatten(x, 1)
    y = jax.nn.relu(y @ params["fc1_w"].T + params["fc1_b"])
    y = jax.nn.relu(y @ params["fc2_w"].T + params["fc2_b"])
    return y @ params["fc3_w"].T + params["fc3_b"]


if __name__ == "__main__":
    key = jax.random.PRNGKey(0)
    pkey, xkey = jax.random.split(key)
    params = init_params(pkey)
    prep = prepare_params(params)

    # 32x32 RGB input (16*5*5 = 400 flatten); batch 16 -> grid of 2 steps.
    x = jax.random.normal(xkey, (16, 3, 32, 32), jnp.float32)

    out = jax.jit(net_forward)(prep, x)
    out = jax.block_until_ready(out)
    ref = net_reference(params, x)

    assert out.shape == (16, 10), out.shape
    assert out.dtype == jnp.float32
    assert bool(jnp.all(jnp.isfinite(out)))
    max_err = float(jnp.max(jnp.abs(out - ref)))
    assert max_err < 5e-2, f"kernel/reference mismatch: max abs err {max_err}"
    print("KERNEL_OK")
</pallas_src>

<mosaic_0001>
module attributes {stable_mosaic.version = 11 : i64} {
  func.func @_lenet_kernel(%arg0: i32, %arg1: memref<256x96xf32, #tpu.memory_space<vmem>>, %arg2: memref<5x96x168xbf16, #tpu.memory_space<vmem>>, %arg3: memref<1x168xf32, #tpu.memory_space<vmem>>, %arg4: memref<224x252xbf16, #tpu.memory_space<vmem>>, %arg5: memref<168x212xbf16, #tpu.memory_space<vmem>>, %arg6: memref<5x84x160xbf16, #tpu.memory_space<vmem>>, %arg7: memref<1x160xf32, #tpu.memory_space<vmem>>, %arg8: memref<80x108xbf16, #tpu.memory_space<vmem>>, %arg9: memref<160x208xbf16, #tpu.memory_space<vmem>>, %arg10: memref<5x80x120xbf16, #tpu.memory_space<vmem>>, %arg11: memref<1x120xf32, #tpu.memory_space<vmem>>, %arg12: memref<120x84xbf16, #tpu.memory_space<vmem>>, %arg13: memref<1x84xf32, #tpu.memory_space<vmem>>, %arg14: memref<84x128xbf16, #tpu.memory_space<vmem>>, %arg15: memref<1x128xf32, #tpu.memory_space<vmem>>, %arg16: memref<8x128xf32, #tpu.memory_space<vmem>>) attributes {dimension_semantics = [#tpu.dimension_semantics<parallel>], iteration_bounds = array<i64: 2>, scalar_prefetch = 0 : i64, scratch_operands = 0 : i64, tpu.core_type = #tpu.core_type<tc>, window_params = [{transform_indices = @transform_0, window_bounds = array<i64: 256, 96>}, {pipeline_mode = #tpu.pipeline_mode<synchronous>, transform_indices = @transform_1, window_bounds = array<i64: 5, 96, 168>}, {pipeline_mode = #tpu.pipeline_mode<synchronous>, transform_indices = @transform_2, window_bounds = array<i64: 1, 168>}, {pipeline_mode = #tpu.pipeline_mode<synchronous>, transform_indices = @transform_3, window_bounds = array<i64: 224, 252>}, {pipeline_mode = #tpu.pipeline_mode<synchronous>, transform_indices = @transform_4, window_bounds = array<i64: 168, 212>}, {pipeline_mode = #tpu.pipeline_mode<synchronous>, transform_indices = @transform_5, window_bounds = array<i64: 5, 84, 160>}, {pipeline_mode = #tpu.pipeline_mode<synchronous>, transform_indices = @transform_6, window_bounds = array<i64: 1, 160>}, {pipeline_mode = #tpu.pipeline_mode<synchronous>, transform_indices = @transform_7, window_bounds = array<i64: 80, 108>}, {pipeline_mode = #tpu.pipeline_mode<synchronous>, transform_indices = @transform_8, window_bounds = array<i64: 160, 208>}, {pipeline_mode = #tpu.pipeline_mode<synchronous>, transform_indices = @transform_9, window_bounds = array<i64: 5, 80, 120>}, {pipeline_mode = #tpu.pipeline_mode<synchronous>, transform_indices = @transform_10, window_bounds = array<i64: 1, 120>}, {pipeline_mode = #tpu.pipeline_mode<synchronous>, transform_indices = @transform_11, window_bounds = array<i64: 120, 84>}, {pipeline_mode = #tpu.pipeline_mode<synchronous>, transform_indices = @transform_12, window_bounds = array<i64: 1, 84>}, {pipeline_mode = #tpu.pipeline_mode<synchronous>, transform_indices = @transform_13, window_bounds = array<i64: 84, 128>}, {pipeline_mode = #tpu.pipeline_mode<synchronous>, transform_indices = @transform_14, window_bounds = array<i64: 1, 128>}, {transform_indices = @transform_15, window_bounds = array<i64: 8, 128>}]} {
    %c0 = arith.constant 0 : index
    %c0_0 = arith.constant 0 : index
    %0 = vector.load %arg1[%c0, %c0_0] : memref<256x96xf32, #tpu.memory_space<vmem>>, vector<252x96xf32>
    %1 = arith.truncf %0 : vector<252x96xf32> to vector<252x96xbf16>
    %c0_1 = arith.constant 0 : index
    %c0_2 = arith.constant 0 : index
    %c0_3 = arith.constant 0 : index
    %2 = vector.load %arg2[%c0_1, %c0_2, %c0_3] : memref<5x96x168xbf16, #tpu.memory_space<vmem>>, vector<1x96x168xbf16>
    %3 = vector.shape_cast %2 : vector<1x96x168xbf16> to vector<96x168xbf16>
    %cst = arith.constant dense<0.000000e+00> : vector<252x168xf32>
    %4 = tpu.matmul %1, %3, %cst {dimension_numbers = #tpu.dot_dimension_numbers<[1], [0], [0], [1], [0, 0, 1, 1], [], []>} : vector<252x96xbf16>, vector<96x168xbf16>, vector<252x168xf32> -> vector<252x168xf32>
    %c1 = arith.constant 1 : index
    %c0_4 = arith.constant 0 : index
    %5 = vector.load %arg1[%c1, %c0_4] : memref<256x96xf32, #tpu.memory_space<vmem>>, vector<252x96xf32>
    %6 = arith.truncf %5 : vector<252x96xf32> to vector<252x96xbf16>
    %c1_5 = arith.constant 1 : index
    %c0_6 = arith.constant 0 : index
    %c0_7 = arith.constant 0 : index
    %7 = vector.load %arg2[%c1_5, %c0_6, %c0_7] : memref<5x96x168xbf16, #tpu.memory_space<vmem>>, vector<1x96x168xbf16>
    %8 = vector.shape_cast %7 : vector<1x96x168xbf16> to vector<96x168xbf16>
    %cst_8 = arith.constant dense<0.000000e+00> : vector<252x168xf32>
    %9 = tpu.matmul %6, %8, %cst_8 {dimension_numbers = #tpu.dot_dimension_numbers<[1], [0], [0], [1], [0, 0, 1, 1], [], []>} : vector<252x96xbf16>, vector<96x168xbf16>, vector<252x168xf32> -> vector<252x168xf32>
    %10 = arith.addf %4, %9 : vector<252x168xf32>
    %c2 = arith.constant 2 : index
    %c0_9 = arith.constant 0 : index
    %11 = vector.load %arg1[%c2, %c0_9] : memref<256x96xf32, #tpu.memory_space<vmem>>, vector<252x96xf32>
    %12 = arith.truncf %11 : vector<252x96xf32> to vector<252x96xbf16>
    %c2_10 = arith.constant 2 : index
    %c0_11 = arith.constant 0 : index
    %c0_12 = arith.constant 0 : index
    %13 = vector.load %arg2[%c2_10, %c0_11, %c0_12] : memref<5x96x168xbf16, #tpu.memory_space<vmem>>, vector<1x96x168xbf16>
    %14 = vector.shape_cast %13 : vector<1x96x168xbf16> to vector<96x168xbf16>
    %cst_13 = arith.constant dense<0.000000e+00> : vector<252x168xf32>
    %15 = tpu.matmul %12, %14, %cst_13 {dimension_numbers = #tpu.dot_dimension_numbers<[1], [0], [0], [1], [0, 0, 1, 1], [], []>} : vector<252x96xbf16>, vector<96x168xbf16>, vector<252x168xf32> -> vector<252x168xf32>
    %16 = arith.addf %10, %15 : vector<252x168xf32>
    %c3 = arith.constant 3 : index
    %c0_14 = arith.constant 0 : index
    %17 = vector.load %arg1[%c3, %c0_14] : memref<256x96xf32, #tpu.memory_space<vmem>>, vector<252x96xf32>
    %18 = arith.truncf %17 : vector<252x96xf32> to vector<252x96xbf16>
    %c3_15 = arith.constant 3 : index
    %c0_16 = arith.constant 0 : index
    %c0_17 = arith.constant 0 : index
    %19 = vector.load %arg2[%c3_15, %c0_16, %c0_17] : memref<5x96x168xbf16, #tpu.memory_space<vmem>>, vector<1x96x168xbf16>
    %20 = vector.shape_cast %19 : vector<1x96x168xbf16> to vector<96x168xbf16>
    %cst_18 = arith.constant dense<0.000000e+00> : vector<252x168xf32>
    %21 = tpu.matmul %18, %20, %cst_18 {dimension_numbers = #tpu.dot_dimension_numbers<[1], [0], [0], [1], [0, 0, 1, 1], [], []>} : vector<252x96xbf16>, vector<96x168xbf16>, vector<252x168xf32> -> vector<252x168xf32>
    %22 = arith.addf %16, %21 : vector<252x168xf32>
    %c4 = arith.constant 4 : index
    %c0_19 = arith.constant 0 : index
    %23 = vector.load %arg1[%c4, %c0_19] : memref<256x96xf32, #tpu.memory_space<vmem>>, vector<252x96xf32>
    %24 = arith.truncf %23 : vector<252x96xf32> to vector<252x96xbf16>
    %c4_20 = arith.constant 4 : index
    %c0_21 = arith.constant 0 : index
    %c0_22 = arith.constant 0 : index
    %25 = vector.load %arg2[%c4_20, %c0_21, %c0_22] : memref<5x96x168xbf16, #tpu.memory_space<vmem>>, vector<1x96x168xbf16>
    %26 = vector.shape_cast %25 : vector<1x96x168xbf16> to vector<96x168xbf16>
    %cst_23 = arith.constant dense<0.000000e+00> : vector<252x168xf32>
    %27 = tpu.matmul %24, %26, %cst_23 {dimension_numbers = #tpu.dot_dimension_numbers<[1], [0], [0], [1], [0, 0, 1, 1], [], []>} : vector<252x96xbf16>, vector<96x168xbf16>, vector<252x168xf32> -> vector<252x168xf32>
    %28 = arith.addf %22, %27 : vector<252x168xf32>
    %c0_24 = arith.constant 0 : index
    %c0_25 = arith.constant 0 : index
    %29 = vector.load %arg3[%c0_24, %c0_25] : memref<1x168xf32, #tpu.memory_space<vmem>>, vector<1x168xf32>
    %30 = vector.broadcast %29 : vector<1x168xf32> to vector<252x168xf32>
    %31 = arith.addf %28, %30 : vector<252x168xf32>
    %cst_26 = arith.constant 0.000000e+00 : f32
    %32 = vector.broadcast %cst_26 : f32 to vector<252x168xf32>
    %33 = arith.maximumf %31, %32 : vector<252x168xf32>
    %34 = arith.truncf %33 : vector<252x168xf32> to vector<252x168xbf16>
    %c0_27 = arith.constant 0 : index
    %c0_28 = arith.constant 0 : index
    %35 = vector.load %arg4[%c0_27, %c0_28] : memref<224x252xbf16, #tpu.memory_space<vmem>>, vector<224x252xbf16>
    %cst_29 = arith.constant dense<0.000000e+00> : vector<224x168xf32>
    %36 = tpu.matmul %35, %34, %cst_29 {dimension_numbers = #tpu.dot_dimension_numbers<[1], [0], [0], [1], [0, 0, 1, 1], [], []>} : vector<224x252xbf16>, vector<252x168xbf16>, vector<224x168xf32> -> vector<224x168xf32>
    %37 = vector.extract_strided_slice %36 {offsets = [0, 0], sizes = [112, 168], strides = [1, 1]} : vector<224x168xf32> to vector<112x168xf32>
    %38 = vector.extract_strided_slice %36 {offsets = [112, 0], sizes = [112, 168], strides = [1, 1]} : vector<224x168xf32> to vector<112x168xf32>
    %39 = arith.maximumf %37, %38 : vector<112x168xf32>
    %40 = arith.truncf %39 : vector<112x168xf32> to vector<112x168xbf16>
    %c0_30 = arith.constant 0 : index
    %c0_31 = arith.constant 0 : index
    %41 = vector.load %arg5[%c0_30, %c0_31] : memref<168x212xbf16, #tpu.memory_space<vmem>>, vector<168x212xbf16>
    %cst_32 = arith.constant dense<0.000000e+00> : vector<112x212xf32>
    %42 = tpu.matmul %40, %41, %cst_32 {dimension_numbers = #tpu.dot_dimension_numbers<[1], [0], [0], [1], [0, 0, 1, 1], [], []>} : vector<112x168xbf16>, vector<168x212xbf16>, vector<112x212xf32> -> vector<112x212xf32>
    %43 = vector.extract_strided_slice %42 {offsets = [0, 0], sizes = [112, 84], strides = [1, 1]} : vector<112x212xf32> to vector<112x84xf32>
    %44 = vector.extract_strided_slice %42 {offsets = [0, 128], sizes = [112, 84], strides = [1, 1]} : vector<112x212xf32> to vector<112x84xf32>
    %45 = arith.maximumf %43, %44 : vector<112x84xf32>
    %46 = vector.extract_strided_slice %45 {offsets = [0, 0], sizes = [108, 84], strides = [1, 1]} : vector<112x84xf32> to vector<108x84xf32>
    %47 = arith.truncf %46 : vector<108x84xf32> to vector<108x84xbf16>
    %c0_33 = arith.constant 0 : index
    %c0_34 = arith.constant 0 : index
    %c0_35 = arith.constant 0 : index
    %48 = vector.load %arg6[%c0_33, %c0_34, %c0_35] : memref<5x84x160xbf16, #tpu.memory_space<vmem>>, vector<1x84x160xbf16>
    %49 = vector.shape_cast %48 : vector<1x84x160xbf16> to vector<84x160xbf16>
    %cst_36 = arith.constant dense<0.000000e+00> : vector<108x160xf32>
    %50 = tpu.matmul %47, %49, %cst_36 {dimension_numbers = #tpu.dot_dimension_numbers<[1], [0], [0], [1], [0, 0, 1, 1], [], []>} : vector<108x84xbf16>, vector<84x160xbf16>, vector<108x160xf32> -> vector<108x160xf32>
    %51 = vector.extract_strided_slice %45 {offsets = [1, 0], sizes = [108, 84], strides = [1, 1]} : vector<112x84xf32> to vector<108x84xf32>
    %52 = arith.truncf %51 : vector<108x84xf32> to vector<108x84xbf16>
    %c1_37 = arith.constant 1 : index
    %c0_38 = arith.constant 0 : index
    %c0_39 = arith.constant 0 : index
    %53 = vector.load %arg6[%c1_37, %c0_38, %c0_39] : memref<5x84x160xbf16, #tpu.memory_space<vmem>>, vector<1x84x160xbf16>
    %54 = vector.shape_cast %53 : vector<1x84x160xbf16> to vector<84x160xbf16>
    %cst_40 = arith.constant dense<0.000000e+00> : vector<108x160xf32>
    %55 = tpu.matmul %52, %54, %cst_40 {dimension_numbers = #tpu.dot_dimension_numbers<[1], [0], [0], [1], [0, 0, 1, 1], [], []>} : vector<108x84xbf16>, vector<84x160xbf16>, vector<108x160xf32> -> vector<108x160xf32>
    %56 = arith.addf %50, %55 : vector<108x160xf32>
    %57 = vector.extract_strided_slice %45 {offsets = [2, 0], sizes = [108, 84], strides = [1, 1]} : vector<112x84xf32> to vector<108x84xf32>
    %58 = arith.truncf %57 : vector<108x84xf32> to vector<108x84xbf16>
    %c2_41 = arith.constant 2 : index
    %c0_42 = arith.constant 0 : index
    %c0_43 = arith.constant 0 : index
    %59 = vector.load %arg6[%c2_41, %c0_42, %c0_43] : memref<5x84x160xbf16, #tpu.memory_space<vmem>>, vector<1x84x160xbf16>
    %60 = vector.shape_cast %59 : vector<1x84x160xbf16> to vector<84x160xbf16>
    %cst_44 = arith.constant dense<0.000000e+00> : vector<108x160xf32>
    %61 = tpu.matmul %58, %60, %cst_44 {dimension_numbers = #tpu.dot_dimension_numbers<[1], [0], [0], [1], [0, 0, 1, 1], [], []>} : vector<108x84xbf16>, vector<84x160xbf16>, vector<108x160xf32> -> vector<108x160xf32>
    %62 = arith.addf %56, %61 : vector<108x160xf32>
    %63 = vector.extract_strided_slice %45 {offsets = [3, 0], sizes = [108, 84], strides = [1, 1]} : vector<112x84xf32> to vector<108x84xf32>
    %64 = arith.truncf %63 : vector<108x84xf32> to vector<108x84xbf16>
    %c3_45 = arith.constant 3 : index
    %c0_46 = arith.constant 0 : index
    %c0_47 = arith.constant 0 : index
    %65 = vector.load %arg6[%c3_45, %c0_46, %c0_47] : memref<5x84x160xbf16, #tpu.memory_space<vmem>>, vector<1x84x160xbf16>
    %66 = vector.shape_cast %65 : vector<1x84x160xbf16> to vector<84x160xbf16>
    %cst_48 = arith.constant dense<0.000000e+00> : vector<108x160xf32>
    %67 = tpu.matmul %64, %66, %cst_48 {dimension_numbers = #tpu.dot_dimension_numbers<[1], [0], [0], [1], [0, 0, 1, 1], [], []>} : vector<108x84xbf16>, vector<84x160xbf16>, vector<108x160xf32> -> vector<108x160xf32>
    %68 = arith.addf %62, %67 : vector<108x160xf32>
    %69 = vector.extract_strided_slice %45 {offsets = [4, 0], sizes = [108, 84], strides = [1, 1]} : vector<112x84xf32> to vector<108x84xf32>
    %70 = arith.truncf %69 : vector<108x84xf32> to vector<108x84xbf16>
    %c4_49 = arith.constant 4 : index
    %c0_50 = arith.constant 0 : index
    %c0_51 = arith.constant 0 : index
    %71 = vector.load %arg6[%c4_49, %c0_50, %c0_51] : memref<5x84x160xbf16, #tpu.memory_space<vmem>>, vector<1x84x160xbf16>
    %72 = vector.shape_cast %71 : vector<1x84x160xbf16> to vector<84x160xbf16>
    %cst_52 = arith.constant dense<0.000000e+00> : vector<108x160xf32>
    %73 = tpu.matmul %70, %72, %cst_52 {dimension_numbers = #tpu.dot_dimension_numbers<[1], [0], [0], [1], [0, 0, 1, 1], [], []>} : vector<108x84xbf16>, vector<84x160xbf16>, vector<108x160xf32> -> vector<108x160xf32>
    %74 = arith.addf %68, %73 : vector<108x160xf32>
    %c0_53 = arith.constant 0 : index
    %c0_54 = arith.constant 0 : index
    %75 = vector.load %arg7[%c0_53, %c0_54] : memref<1x160xf32, #tpu.memory_space<vmem>>, vector<1x160xf32>
    %76 = vector.broadcast %75 : vector<1x160xf32> to vector<108x160xf32>
    %77 = arith.addf %74, %76 : vector<108x160xf32>
    %cst_55 = arith.constant 0.000000e+00 : f32
    %78 = vector.broadcast %cst_55 : f32 to vector<108x160xf32>
    %79 = arith.maximumf %77, %78 : vector<108x160xf32>
    %80 = arith.truncf %79 : vector<108x160xf32> to vector<108x160xbf16>
    %c0_56 = arith.constant 0 : index
    %c0_57 = arith.constant 0 : index
    %81 = vector.load %arg8[%c0_56, %c0_57] : memref<80x108xbf16, #tpu.memory_space<vmem>>, vector<80x108xbf16>
    %cst_58 = arith.constant dense<0.000000e+00> : vector<80x160xf32>
    %82 = tpu.matmul %81, %80, %cst_58 {dimension_numbers = #tpu.dot_dimension_numbers<[1], [0], [0], [1], [0, 0, 1, 1], [], []>} : vector<80x108xbf16>, vector<108x160xbf16>, vector<80x160xf32> -> vector<80x160xf32>
    %83 = vector.extract_strided_slice %82 {offsets = [0, 0], sizes = [40, 160], strides = [1, 1]} : vector<80x160xf32> to vector<40x160xf32>
    %84 = vector.extract_strided_slice %82 {offsets = [40, 0], sizes = [40, 160], strides = [1, 1]} : vector<80x160xf32> to vector<40x160xf32>
    %85 = arith.maximumf %83, %84 : vector<40x160xf32>
    %86 = arith.truncf %85 : vector<40x160xf32> to vector<40x160xbf16>
    %c0_59 = arith.constant 0 : index
    %c0_60 = arith.constant 0 : index
    %87 = vector.load %arg9[%c0_59, %c0_60] : memref<160x208xbf16, #tpu.memory_space<vmem>>, vector<160x208xbf16>
    %cst_61 = arith.constant dense<0.000000e+00> : vector<40x208xf32>
    %88 = tpu.matmul %86, %87, %cst_61 {dimension_numbers = #tpu.dot_dimension_numbers<[1], [0], [0], [1], [0, 0, 1, 1], [], []>} : vector<40x160xbf16>, vector<160x208xbf16>, vector<40x208xf32> -> vector<40x208xf32>
    %89 = vector.extract_strided_slice %88 {offsets = [0, 0], sizes = [40, 80], strides = [1, 1]} : vector<40x208xf32> to vector<40x80xf32>
    %90 = vector.extract_strided_slice %88 {offsets = [0, 128], sizes = [40, 80], strides = [1, 1]} : vector<40x208xf32> to vector<40x80xf32>
    %91 = arith.maximumf %89, %90 : vector<40x80xf32>
    %92 = vector.extract_strided_slice %91 {offsets = [0, 0], sizes = [8, 80], strides = [1, 1]} : vector<40x80xf32> to vector<8x80xf32>
    %93 = arith.truncf %92 : vector<8x80xf32> to vector<8x80xbf16>
    %c0_62 = arith.constant 0 : index
    %c0_63 = arith.constant 0 : index
    %c0_64 = arith.constant 0 : index
    %94 = vector.load %arg10[%c0_62, %c0_63, %c0_64] : memref<5x80x120xbf16, #tpu.memory_space<vmem>>, vector<1x80x120xbf16>
    %95 = vector.shape_cast %94 : vector<1x80x120xbf16> to vector<80x120xbf16>
    %cst_65 = arith.constant dense<0.000000e+00> : vector<8x120xf32>
    %96 = tpu.matmul %93, %95, %cst_65 {dimension_numbers = #tpu.dot_dimension_numbers<[1], [0], [0], [1], [0, 0, 1, 1], [], []>} : vector<8x80xbf16>, vector<80x120xbf16>, vector<8x120xf32> -> vector<8x120xf32>
    %97 = vector.extract_strided_slice %91 {offsets = [8, 0], sizes = [8, 80], strides = [1, 1]} : vector<40x80xf32> to vector<8x80xf32>
    %98 = arith.truncf %97 : vector<8x80xf32> to vector<8x80xbf16>
    %c1_66 = arith.constant 1 : index
    %c0_67 = arith.constant 0 : index
    %c0_68 = arith.constant 0 : index
    %99 = vector.load %arg10[%c1_66, %c0_67, %c0_68] : memref<5x80x120xbf16, #tpu.memory_space<vmem>>, vector<1x80x120xbf16>
    %100 = vector.shape_cast %99 : vector<1x80x120xbf16> to vector<80x120xbf16>
    %cst_69 = arith.constant dense<0.000000e+00> : vector<8x120xf32>
    %101 = tpu.matmul %98, %100, %cst_69 {dimension_numbers = #tpu.dot_dimension_numbers<[1], [0], [0], [1], [0, 0, 1, 1], [], []>} : vector<8x80xbf16>, vector<80x120xbf16>, vector<8x120xf32> -> vector<8x120xf32>
    %102 = arith.addf %96, %101 : vector<8x120xf32>
    %103 = vector.extract_strided_slice %91 {offsets = [16, 0], sizes = [8, 80], strides = [1, 1]} : vector<40x80xf32> to vector<8x80xf32>
    %104 = arith.truncf %103 : vector<8x80xf32> to vector<8x80xbf16>
    %c2_70 = arith.constant 2 : index
    %c0_71 = arith.constant 0 : index
    %c0_72 = arith.constant 0 : index
    %105 = vector.load %arg10[%c2_70, %c0_71, %c0_72] : memref<5x80x120xbf16, #tpu.memory_space<vmem>>, vector<1x80x120xbf16>
    %106 = vector.shape_cast %105 : vector<1x80x120xbf16> to vector<80x120xbf16>
    %cst_73 = arith.constant dense<0.000000e+00> : vector<8x120xf32>
    %107 = tpu.matmul %104, %106, %cst_73 {dimension_numbers = #tpu.dot_dimension_numbers<[1], [0], [0], [1], [0, 0, 1, 1], [], []>} : vector<8x80xbf16>, vector<80x120xbf16>, vector<8x120xf32> -> vector<8x120xf32>
    %108 = arith.addf %102, %107 : vector<8x120xf32>
    %109 = vector.extract_strided_slice %91 {offsets = [24, 0], sizes = [8, 80], strides = [1, 1]} : vector<40x80xf32> to vector<8x80xf32>
    %110 = arith.truncf %109 : vector<8x80xf32> to vector<8x80xbf16>
    %c3_74 = arith.constant 3 : index
    %c0_75 = arith.constant 0 : index
    %c0_76 = arith.constant 0 : index
    %111 = vector.load %arg10[%c3_74, %c0_75, %c0_76] : memref<5x80x120xbf16, #tpu.memory_space<vmem>>, vector<1x80x120xbf16>
    %112 = vector.shape_cast %111 : vector<1x80x120xbf16> to vector<80x120xbf16>
    %cst_77 = arith.constant dense<0.000000e+00> : vector<8x120xf32>
    %113 = tpu.matmul %110, %112, %cst_77 {dimension_numbers = #tpu.dot_dimension_numbers<[1], [0], [0], [1], [0, 0, 1, 1], [], []>} : vector<8x80xbf16>, vector<80x120xbf16>, vector<8x120xf32> -> vector<8x120xf32>
    %114 = arith.addf %108, %113 : vector<8x120xf32>
    %115 = vector.extract_strided_slice %91 {offsets = [32, 0], sizes = [8, 80], strides = [1, 1]} : vector<40x80xf32> to vector<8x80xf32>
    %116 = arith.truncf %115 : vector<8x80xf32> to vector<8x80xbf16>
    %c4_78 = arith.constant 4 : index
    %c0_79 = arith.constant 0 : index
    %c0_80 = arith.constant 0 : index
    %117 = vector.load %arg10[%c4_78, %c0_79, %c0_80] : memref<5x80x120xbf16, #tpu.memory_space<vmem>>, vector<1x80x120xbf16>
    %118 = vector.shape_cast %117 : vector<1x80x120xbf16> to vector<80x120xbf16>
    %cst_81 = arith.constant dense<0.000000e+00> : vector<8x120xf32>
    %119 = tpu.matmul %116, %118, %cst_81 {dimension_numbers = #tpu.dot_dimension_numbers<[1], [0], [0], [1], [0, 0, 1, 1], [], []>} : vector<8x80xbf16>, vector<80x120xbf16>, vector<8x120xf32> -> vector<8x120xf32>
    %120 = arith.addf %114, %119 : vector<8x120xf32>
    %c0_82 = arith.constant 0 : index
    %c0_83 = arith.constant 0 : index
    %121 = vector.load %arg11[%c0_82, %c0_83] : memref<1x120xf32, #tpu.memory_space<vmem>>, vector<1x120xf32>
    %122 = vector.broadcast %121 : vector<1x120xf32> to vector<8x120xf32>
    %123 = arith.addf %120, %122 : vector<8x120xf32>
    %cst_84 = arith.constant 0.000000e+00 : f32
    %124 = vector.broadcast %cst_84 : f32 to vector<8x120xf32>
    %125 = arith.maximumf %123, %124 : vector<8x120xf32>
    %126 = arith.truncf %125 : vector<8x120xf32> to vector<8x120xbf16>
    %c0_85 = arith.constant 0 : index
    %c0_86 = arith.constant 0 : index
    %127 = vector.load %arg12[%c0_85, %c0_86] : memref<120x84xbf16, #tpu.memory_space<vmem>>, vector<120x84xbf16>
    %cst_87 = arith.constant dense<0.000000e+00> : vector<8x84xf32>
    %128 = tpu.matmul %126, %127, %cst_87 {dimension_numbers = #tpu.dot_dimension_numbers<[1], [0], [0], [1], [0, 0, 1, 1], [], []>} : vector<8x120xbf16>, vector<120x84xbf16>, vector<8x84xf32> -> vector<8x84xf32>
    %c0_88 = arith.constant 0 : index
    %c0_89 = arith.constant 0 : index
    %129 = vector.load %arg13[%c0_88, %c0_89] : memref<1x84xf32, #tpu.memory_space<vmem>>, vector<1x84xf32>
    %130 = vector.broadcast %129 : vector<1x84xf32> to vector<8x84xf32>
    %131 = arith.addf %128, %130 : vector<8x84xf32>
    %cst_90 = arith.constant 0.000000e+00 : f32
    %132 = vector.broadcast %cst_90 : f32 to vector<8x84xf32>
    %133 = arith.maximumf %131, %132 : vector<8x84xf32>
    %134 = arith.truncf %133 : vector<8x84xf32> to vector<8x84xbf16>
    %c0_91 = arith.constant 0 : index
    %c0_92 = arith.constant 0 : index
    %135 = vector.load %arg14[%c0_91, %c0_92] : memref<84x128xbf16, #tpu.memory_space<vmem>>, vector<84x128xbf16>
    %cst_93 = arith.constant dense<0.000000e+00> : vector<8x128xf32>
    %136 = tpu.matmul %134, %135, %cst_93 {dimension_numbers = #tpu.dot_dimension_numbers<[1], [0], [0], [1], [0, 0, 1, 1], [], []>} : vector<8x84xbf16>, vector<84x128xbf16>, vector<8x128xf32> -> vector<8x128xf32>
    %c0_94 = arith.constant 0 : index
    %c0_95 = arith.constant 0 : index
    %137 = vector.load %arg15[%c0_94, %c0_95] : memref<1x128xf32, #tpu.memory_space<vmem>>, vector<1x128xf32>
    %138 = vector.broadcast %137 : vector<1x128xf32> to vector<8x128xf32>
    %139 = arith.addf %136, %138 : vector<8x128xf32>
    %c0_96 = arith.constant 0 : index
    %c0_97 = arith.constant 0 : index
    %140 = vector.load %arg16[%c0_96, %c0_97] : memref<8x128xf32, #tpu.memory_space<vmem>>, vector<8x128xf32>
    tpu.vector_store %arg16[%c0_96, %c0_97], %139 {strides = array<i32>} : memref<8x128xf32, #tpu.memory_space<vmem>>, vector<8x128xf32>,
    return
  }
  func.func @transform_0(%arg0: i32) -> (i32, i32) {
    %c0_i32 = arith.constant 0 : i32
    %c0_i32_0 = arith.constant 0 : i32
    return %arg0, %c0_i32 : i32, i32
  }
  func.func @transform_1(%arg0: i32) -> (i32, i32, i32) {
    %c0_i32 = arith.constant 0 : i32
    %c0_i32_0 = arith.constant 0 : i32
    %c0_i32_1 = arith.constant 0 : i32
    %c0_i32_2 = arith.constant 0 : i32
    return %c0_i32, %c0_i32_0, %c0_i32_1 : i32, i32, i32
  }
  func.func @transform_2(%arg0: i32) -> (i32, i32) {
    %c0_i32 = arith.constant 0 : i32
    %c0_i32_0 = arith.constant 0 : i32
    %c0_i32_1 = arith.constant 0 : i32
    return %c0_i32, %c0_i32_0 : i32, i32
  }
  func.func @transform_3(%arg0: i32) -> (i32, i32) {
    %c0_i32 = arith.constant 0 : i32
    %c0_i32_0 = arith.constant 0 : i32
    %c0_i32_1 = arith.constant 0 : i32
    return %c0_i32, %c0_i32_0 : i32, i32
  }
  func.func @transform_4(%arg0: i32) -> (i32, i32) {
    %c0_i32 = arith.constant 0 : i32
    %c0_i32_0 = arith.constant 0 : i32
    %c0_i32_1 = arith.constant 0 : i32
    return %c0_i32, %c0_i32_0 : i32, i32
  }
  func.func @transform_5(%arg0: i32) -> (i32, i32, i32) {
    %c0_i32 = arith.constant 0 : i32
    %c0_i32_0 = arith.constant 0 : i32
    %c0_i32_1 = arith.constant 0 : i32
    %c0_i32_2 = arith.constant 0 : i32
    return %c0_i32, %c0_i32_0, %c0_i32_1 : i32, i32, i32
  }
  func.func @transform_6(%arg0: i32) -> (i32, i32) {
    %c0_i32 = arith.constant 0 : i32
    %c0_i32_0 = arith.constant 0 : i32
    %c0_i32_1 = arith.constant 0 : i32
    return %c0_i32, %c0_i32_0 : i32, i32
  }
  func.func @transform_7(%arg0: i32) -> (i32, i32) {
    %c0_i32 = arith.constant 0 : i32
    %c0_i32_0 = arith.constant 0 : i32
    %c0_i32_1 = arith.constant 0 : i32
    return %c0_i32, %c0_i32_0 : i32, i32
  }
  func.func @transform_8(%arg0: i32) -> (i32, i32) {
    %c0_i32 = arith.constant 0 : i32
    %c0_i32_0 = arith.constant 0 : i32
    %c0_i32_1 = arith.constant 0 : i32
    return %c0_i32, %c0_i32_0 : i32, i32
  }
  func.func @transform_9(%arg0: i32) -> (i32, i32, i32) {
    %c0_i32 = arith.constant 0 : i32
    %c0_i32_0 = arith.constant 0 : i32
    %c0_i32_1 = arith.constant 0 : i32
    %c0_i32_2 = arith.constant 0 : i32
    return %c0_i32, %c0_i32_0, %c0_i32_1 : i32, i32, i32
  }
  func.func @transform_10(%arg0: i32) -> (i32, i32) {
    %c0_i32 = arith.constant 0 : i32
    %c0_i32_0 = arith.constant 0 : i32
    %c0_i32_1 = arith.constant 0 : i32
    return %c0_i32, %c0_i32_0 : i32, i32
  }
  func.func @transform_11(%arg0: i32) -> (i32, i32) {
    %c0_i32 = arith.constant 0 : i32
    %c0_i32_0 = arith.constant 0 : i32
    %c0_i32_1 = arith.constant 0 : i32
    return %c0_i32, %c0_i32_0 : i32, i32
  }
  func.func @transform_12(%arg0: i32) -> (i32, i32) {
    %c0_i32 = arith.constant 0 : i32
    %c0_i32_0 = arith.constant 0 : i32
    %c0_i32_1 = arith.constant 0 : i32
    return %c0_i32, %c0_i32_0 : i32, i32
  }
  func.func @transform_13(%arg0: i32) -> (i32, i32) {
    %c0_i32 = arith.constant 0 : i32
    %c0_i32_0 = arith.constant 0 : i32
    %c0_i32_1 = arith.constant 0 : i32
    return %c0_i32, %c0_i32_0 : i32, i32
  }
  func.func @transform_14(%arg0: i32) -> (i32, i32) {
    %c0_i32 = arith.constant 0 : i32
    %c0_i32_0 = arith.constant 0 : i32
    %c0_i32_1 = arith.constant 0 : i32
    return %c0_i32, %c0_i32_0 : i32, i32
  }
  func.func @transform_15(%arg0: i32) -> (i32, i32) {
    %c0_i32 = arith.constant 0 : i32
    %c0_i32_0 = arith.constant 0 : i32
    return %arg0, %c0_i32 : i32, i32
  }
}

</mosaic_0001>

<llo_original>
// kernel: net_forward.1
$region0: #{net_forward.1}
  #allocation0 [shape = 'u32[]', space=smem, size = 0x4, offset = 0x4, fixed_abs, tag = 'smem constant byte address 0x4 - core index']
  #allocation1 [shape = 'u32[144,128]{1,0:T(1,128)}', space=vmem, size = 0x12000, scoped, tag = 'internal scratch']
  %s0 = inlined_call_operand.vmem [shape: f32[512,96], index: 0, kind: input, shape index: {}]
  %s1 = inlined_call_operand.vmem [shape: bf16[5,96,168], index: 1, kind: input, shape index: {}]
  %s2 = inlined_call_operand.vmem [shape: f32[1,168], index: 2, kind: input, shape index: {}]
  %s3 = inlined_call_operand.vmem [shape: bf16[224,252], index: 3, kind: input, shape index: {}]
  %s4 = inlined_call_operand.vmem [shape: bf16[168,212], index: 4, kind: input, shape index: {}]
  %s5 = inlined_call_operand.vmem [shape: bf16[5,84,160], index: 5, kind: input, shape index: {}]
  %s6 = inlined_call_operand.vmem [shape: f32[1,160], index: 6, kind: input, shape index: {}]
  %s7 = inlined_call_operand.vmem [shape: bf16[80,108], index: 7, kind: input, shape index: {}]
  %s8 = inlined_call_operand.vmem [shape: bf16[160,208], index: 8, kind: input, shape index: {}]
  %s9 = inlined_call_operand.vmem [shape: bf16[5,80,120], index: 9, kind: input, shape index: {}]
  %s10 = inlined_call_operand.vmem [shape: f32[1,120], index: 10, kind: input, shape index: {}]
  %s11 = inlined_call_operand.vmem [shape: bf16[120,84], index: 11, kind: input, shape index: {}]
  %s12 = inlined_call_operand.vmem [shape: f32[1,84], index: 12, kind: input, shape index: {}]
  %s13 = inlined_call_operand.vmem [shape: bf16[84,128], index: 13, kind: input, shape index: {}]
  %s14 = inlined_call_operand.vmem [shape: f32[1,128], index: 14, kind: input, shape index: {}]
  %s15 = inlined_call_operand.hbm [shape: f32[16,128], index: 15, kind: output, shape index: {}]
  %s16 = sld [smem:[#allocation0]]
  $region93: #{net_forward.1} parent=0
    _
  %s18 = ssub.s32 1, %s16
  %s19 = scalar_select 0, %s18, %s16
  $region1: #{net_forward.1} parent=0
    #allocation2 [shape = 'u8[8192]{0}', space=vmem, size = 0x2000, scoped, tag = 'output window, operand 0']
    #allocation3 [shape = 's32[2]{0}', space=sflag, size = 0x8, scoped, tag = 'scoped memory for net_forward.1']
    %20 = vsyncpa [#allocation3], 0
    %s21 = scalar_lea.sflag [#allocation3], 1
    %22 = vsyncpa %s21, 0
    loop: start=0, step=1, limit=4
    $region2: #{net_forward.1} parent=1 // loop_pre_header
      _
    $region3: #{net_forward.1} parent=1 // loop_header
      %s24 = sphi 0, %s28
      %p25 = scmp.ge.s32.totalorder %s24, 4
      %s34 = sphi 0, %s36
      %s37 = sphi 0, %s34
      %s38 = sphi 0, %s37
      %s54 = sphi 0, %s38
      %s58 = sphi 0, %s58
      %s60 = sphi 0, %s58
      %s61 = sphi 0, %s60
      %s75 = sphi 0, %s61
      %s79 = sphi 0, %s79
      %s81 = sphi 0, %s79
      %s82 = sphi 0, %s81
      %s96 = sphi 0, %s82
      %s100 = sphi 0, %s100
      %s102 = sphi 0, %s100
      %s103 = sphi 0, %s102
      %s117 = sphi 0, %s103
      %s121 = sphi 0, %s121
      %s123 = sphi 0, %s121
      %s124 = sphi 0, %s123
      %s138 = sphi 0, %s124
      %s142 = sphi 0, %s142
      %s144 = sphi 0, %s142
      %s145 = sphi 0, %s144
      %s159 = sphi 0, %s145
      %s163 = sphi 0, %s163
      %s165 = sphi 0, %s163
      %s166 = sphi 0, %s165
      %s180 = sphi 0, %s166
      %s184 = sphi 0, %s184
      %s186 = sphi 0, %s184
      %s187 = sphi 0, %s186
      %s201 = sphi 0, %s187
      %s205 = sphi 0, %s205
      %s207 = sphi 0, %s205
      %s208 = sphi 0, %s207
      %s222 = sphi 0, %s208
      %s226 = sphi 0, %s226
      %s228 = sphi 0, %s226
      %s229 = sphi 0, %s228
      %s243 = sphi 0, %s229
      %s247 = sphi 0, %s247
      %s249 = sphi 0, %s247
      %s250 = sphi 0, %s249
      %s264 = sphi 0, %s250
      %s268 = sphi 0, %s268
      %s270 = sphi 0, %s268
      %s271 = sphi 0, %s270
      %s285 = sphi 0, %s271
      %s289 = sphi 0, %s289
      %s291 = sphi 0, %s289
      %s292 = sphi 0, %s291
      %s306 = sphi 0, %s292
      %s310 = sphi 0, %s310
      %s312 = sphi 0, %s310
      %s313 = sphi 0, %s312
      %s327 = sphi 0, %s313
      %s331 = sphi 0, %s331
      %s333 = sphi 0, %s331
      %s334 = sphi 0, %s333
      %s348 = sphi 0, %s334
      %s354 = sphi 0, %s356
      %s357 = sphi 0, %s354
      %s358 = sphi 0, %s357
      %s374 = sphi 0, %s358
    $region4: #{net_forward.1} parent=1 // loop_header_branch
      %27 = sbr.rel (%p25) target = $region8
    $region5: #{net_forward.1} parent=1 // loop_body
      %s29 = ssub.s32 %s24, 1
      %s30 = ssub.s32 %s24, 2
      %s31 = sadd.s32 %s24, 1
      %s32 = ssub.s32 %s24, %s31
      %p33 = scmp.eq.s32.totalorder %s32, 0
      %s35 = sadd.s32 %s34, 1
      %s36 = scalar_select %p33, %s34, %s35
      %p39 = pneg %p33
      %p40 = scmp.eq.s32.totalorder %s24, 1
      %p41 = por %p39, %p40
      %p42 = scmp.ne.s32.totalorder %s34, %s37
      %p43 = scmp.eq.s32.totalorder %s24, 0
      %p44 = por %p42, %p43
      %p45 = scmp.ne.s32.totalorder %s34, %s37
      %p46 = scmp.eq.s32.totalorder %s29, 1
      %p47 = por %p45, %p46
      %p48 = scmp.ne.s32.totalorder %s37, %s38
      %p49 = scmp.eq.s32.totalorder %s29, 0
      %p50 = por %p48, %p49
      %p51 = scmp.ne.s32.totalorder %s37, %s38
      %p52 = scmp.eq.s32.totalorder %s30, 1
      %p53 = por %p51, %p52
      %p55 = scmp.ne.s32.totalorder %s38, %s54
      %p56 = scmp.eq.s32.totalorder %s30, 0
      %p57 = por %p55, %p56
      %s59 = sadd.s32 %s58, 1
      %p62 = scmp.eq.s32.totalorder %s24, 1
      %p63 = scmp.ne.s32.totalorder %s58, %s60
      %p64 = scmp.eq.s32.totalorder %s24, 0
      %p65 = por %p63, %p64
      %p66 = scmp.ne.s32.totalorder %s58, %s60
      %p67 = scmp.eq.s32.totalorder %s29, 1
      %p68 = por %p66, %p67
      %p69 = scmp.ne.s32.totalorder %s60, %s61
      %p70 = scmp.eq.s32.totalorder %s29, 0
      %p71 = por %p69, %p70
      %p72 = scmp.ne.s32.totalorder %s60, %s61
      %p73 = scmp.eq.s32.totalorder %s30, 1
      %p74 = por %p72, %p73
      %p76 = scmp.ne.s32.totalorder %s61, %s75
      %p77 = scmp.eq.s32.totalorder %s30, 0
      %p78 = por %p76, %p77
      %s80 = sadd.s32 %s79, 1
      %p83 = scmp.eq.s32.totalorder %s24, 1
      %p84 = scmp.ne.s32.totalorder %s79, %s81
      %p85 = scmp.eq.s32.totalorder %s24, 0
      %p86 = por %p84, %p85
      %p87 = scmp.ne.s32.totalorder %s79, %s81
      %p88 = scmp.eq.s32.totalorder %s29, 1
      %p89 = por %p87, %p88
      %p90 = scmp.ne.s32.totalorder %s81, %s82
      %p91 = scmp.eq.s32.totalorder %s29, 0
      %p92 = por %p90, %p91
      %p93 = scmp.ne.s32.totalorder %s81, %s82
      %p94 = scmp.eq.s32.totalorder %s30, 1
      %p95 = por %p93, %p94
      %p97 = scmp.ne.s32.totalorder %s82, %s96
      %p98 = scmp.eq.s32.totalorder %s30, 0
      %p99 = por %p97, %p98
      %s101 = sadd.s32 %s100, 1
      %p104 = scmp.eq.s32.totalorder %s24, 1
      %p105 = scmp.ne.s32.totalorder %s100, %s102
      %p106 = scmp.eq.s32.totalorder %s24, 0
      %p107 = por %p105, %p106
      %p108 = scmp.ne.s32.totalorder %s100, %s102
      %p109 = scmp.eq.s32.totalorder %s29, 1
      %p110 = por %p108, %p109
      %p111 = scmp.ne.s32.totalorder %s102, %s103
      %p112 = scmp.eq.s32.totalorder %s29, 0
      %p113 = por %p111, %p112
      %p114 = scmp.ne.s32.totalorder %s102, %s103
      %p115 = scmp.eq.s32.totalorder %s30, 1
      %p116 = por %p114, %p115
      %p118 = scmp.ne.s32.totalorder %s103, %s117
      %p119 = scmp.eq.s32.totalorder %s30, 0
      %p120 = por %p118, %p119
      %s122 = sadd.s32 %s121, 1
      %p125 = scmp.eq.s32.totalorder %s24, 1
      %p126 = scmp.ne.s32.totalorder %s121, %s123
      %p127 = scmp.eq.s32.totalorder %s24, 0
      %p128 = por %p126, %p127
      %p129 = scmp.ne.s32.totalorder %s121, %s123
      %p130 = scmp.eq.s32.totalorder %s29, 1
      %p131 = por %p129, %p130
      %p132 = scmp.ne.s32.totalorder %s123, %s124
      %p133 = scmp.eq.s32.totalorder %s29, 0
      %p134 = por %p132, %p133
      %p135 = scmp.ne.s32.totalorder %s123, %s124
      %p136 = scmp.eq.s32.totalorder %s30, 1
      %p137 = por %p135, %p136
      %p139 = scmp.ne.s32.totalorder %s124, %s138
      %p140 = scmp.eq.s32.totalorder %s30, 0
      %p141 = por %p139, %p140
      %s143 = sadd.s32 %s142, 1
      %p146 = scmp.eq.s32.totalorder %s24, 1
      %p147 = scmp.ne.s32.totalorder %s142, %s144
      %p148 = scmp.eq.s32.totalorder %s24, 0
      %p149 = por %p147, %p148
      %p150 = scmp.ne.s32.totalorder %s142, %s144
      %p151 = scmp.eq.s32.totalorder %s29, 1
      %p152 = por %p150, %p151
      %p153 = scmp.ne.s32.totalorder %s144, %s145
      %p154 = scmp.eq.s32.totalorder %s29, 0
      %p155 = por %p153, %p154
      %p156 = scmp.ne.s32.totalorder %s144, %s145
      %p157 = scmp.eq.s32.totalorder %s30, 1
      %p158 = por %p156, %p157
      %p160 = scmp.ne.s32.totalorder %s145, %s159
      %p161 = scmp.eq.s32.totalorder %s30, 0
      %p162 = por %p160, %p161
      %s164 = sadd.s32 %s163, 1
      %p167 = scmp.eq.s32.totalorder %s24, 1
      %p168 = scmp.ne.s32.totalorder %s163, %s165
      %p169 = scmp.eq.s32.totalorder %s24, 0
      %p170 = por %p168, %p169
      %p171 = scmp.ne.s32.totalorder %s163, %s165
      %p172 = scmp.eq.s32.totalorder %s29, 1
      %p173 = por %p171, %p172
      %p174 = scmp.ne.s32.totalorder %s165, %s166
      %p175 = scmp.eq.s32.totalorder %s29, 0
      %p176 = por %p174, %p175
      %p177 = scmp.ne.s32.totalorder %s165, %s166
      %p178 = scmp.eq.s32.totalorder %s30, 1
      %p179 = por %p177, %p178
      %p181 = scmp.ne.s32.totalorder %s166, %s180
      %p182 = scmp.eq.s32.totalorder %s30, 0
      %p183 = por %p181, %p182
      %s185 = sadd.s32 %s184, 1
      %p188 = scmp.eq.s32.totalorder %s24, 1
      %p189 = scmp.ne.s32.totalorder %s184, %s186
      %p190 = scmp.eq.s32.totalorder %s24, 0
      %p191 = por %p189, %p190
      %p192 = scmp.ne.s32.totalorder %s184, %s186
      %p193 = scmp.eq.s32.totalorder %s29, 1
      %p194 = por %p192, %p193
      %p195 = scmp.ne.s32.totalorder %s186, %s187
      %p196 = scmp.eq.s32.totalorder %s29, 0
      %p197 = por %p195, %p196
      %p198 = scmp.ne.s32.totalorder %s186, %s187
      %p199 = scmp.eq.s32.totalorder %s30, 1
      %p200 = por %p198, %p199
      %p202 = scmp.ne.s32.totalorder %s187, %s201
      %p203 = scmp.eq.s32.totalorder %s30, 0
      %p204 = por %p202, %p203
      %s206 = sadd.s32 %s205, 1
      %p209 = scmp.eq.s32.totalorder %s24, 1
      %p210 = scmp.ne.s32.totalorder %s205, %s207
      %p211 = scmp.eq.s32.totalorder %s24, 0
      %p212 = por %p210, %p211
      %p213 = scmp.ne.s32.totalorder %s205, %s207
      %p214 = scmp.eq.s32.totalorder %s29, 1
      %p215 = por %p213, %p214
      %p216 = scmp.ne.s32.totalorder %s207, %s208
      %p217 = scmp.eq.s32.totalorder %s29, 0
      %p218 = por %p216, %p217
      %p219 = scmp.ne.s32.totalorder %s207, %s208
      %p220 = scmp.eq.s32.totalorder %s30, 1
      %p221 = por %p219, %p220
      %p223 = scmp.ne.s32.totalorder %s208, %s222
      %p224 = scmp.eq.s32.totalorder %s30, 0
      %p225 = por %p223, %p224
      %s227 = sadd.s32 %s226, 1
      %p230 = scmp.eq.s32.totalorder %s24, 1
      %p231 = scmp.ne.s32.totalorder %s226, %s228
      %p232 = scmp.eq.s32.totalorder %s24, 0
      %p233 = por %p231, %p232
      %p234 = scmp.ne.s32.totalorder %s226, %s228
      %p235 = scmp.eq.s32.totalorder %s29, 1
      %p236 = por %p234, %p235
      %p237 = scmp.ne.s32.totalorder %s228, %s229
      %p238 = scmp.eq.s32.totalorder %s29, 0
      %p239 = por %p237, %p238
      %p240 = scmp.ne.s32.totalorder %s228, %s229
      %p241 = scmp.eq.s32.totalorder %s30, 1
      %p242 = por %p240, %p241
      %p244 = scmp.ne.s32.totalorder %s229, %s243
      %p245 = scmp.eq.s32.totalorder %s30, 0
      %p246 = por %p244, %p245
      %s248 = sadd.s32 %s247, 1
      %p251 = scmp.eq.s32.totalorder %s24, 1
      %p252 = scmp.ne.s32.totalorder %s247, %s249
      %p253 = scmp.eq.s32.totalorder %s24, 0
      %p254 = por %p252, %p253
      %p255 = scmp.ne.s32.totalorder %s247, %s249
      %p256 = scmp.eq.s32.totalorder %s29, 1
      %p257 = por %p255, %p256
      %p258 = scmp.ne.s32.totalorder %s249, %s250
      %p259 = scmp.eq.s32.totalorder %s29, 0
      %p260 = por %p258, %p259
      %p261 = scmp.ne.s32.totalorder %s249, %s250
      %p262 = scmp.eq.s32.totalorder %s30, 1
      %p263 = por %p261, %p262
      %p265 = scmp.ne.s32.totalorder %s250, %s264
      %p266 = scmp.eq.s32.totalorder %s30, 0
      %p267 = por %p265, %p266
      %s269 = sadd.s32 %s268, 1
      %p272 = scmp.eq.s32.totalorder %s24, 1
      %p273 = scmp.ne.s32.totalorder %s268, %s270
      %p274 = scmp.eq.s32.totalorder %s24, 0
      %p275 = por %p273, %p274
      %p276 = scmp.ne.s32.totalorder %s268, %s270
      %p277 = scmp.eq.s32.totalorder %s29, 1
      %p278 = por %p276, %p277
      %p279 = scmp.ne.s32.totalorder %s270, %s271
      %p280 = scmp.eq.s32.totalorder %s29, 0
      %p281 = por %p279, %p280
      %p282 = scmp.ne.s32.totalorder %s270, %s271
      %p283 = scmp.eq.s32.totalorder %s30, 1
      %p284 = por %p282, %p283
      %p286 = scmp.ne.s32.totalorder %s271, %s285
      %p287 = scmp.eq.s32.totalorder %s30, 0
      %p288 = por %p286, %p287
      %s290 = sadd.s32 %s289, 1
      %p293 = scmp.eq.s32.totalorder %s24, 1
      %p294 = scmp.ne.s32.totalorder %s289, %s291
      %p295 = scmp.eq.s32.totalorder %s24, 0
      %p296 = por %p294, %p295
      %p297 = scmp.ne.s32.totalorder %s289, %s291
      %p298 = scmp.eq.s32.totalorder %s29, 1
      %p299 = por %p297, %p298
      %p300 = scmp.ne.s32.totalorder %s291, %s292
      %p301 = scmp.eq.s32.totalorder %s29, 0
      %p302 = por %p300, %p301
      %p303 = scmp.ne.s32.totalorder %s291, %s292
      %p304 = scmp.eq.s32.totalorder %s30, 1
      %p305 = por %p303, %p304
      %p307 = scmp.ne.s32.totalorder %s292, %s306
      %p308 = scmp.eq.s32.totalorder %s30, 0
      %p309 = por %p307, %p308
      %s311 = sadd.s32 %s310, 1
      %p314 = scmp.eq.s32.totalorder %s24, 1
      %p315 = scmp.ne.s32.totalorder %s310, %s312
      %p316 = scmp.eq.s32.totalorder %s24, 0
      %p317 = por %p315, %p316
      %p318 = scmp.ne.s32.totalorder %s310, %s312
      %p319 = scmp.eq.s32.totalorder %s29, 1
      %p320 = por %p318, %p319
      %p321 = scmp.ne.s32.totalorder %s312, %s313
      %p322 = scmp.eq.s32.totalorder %s29, 0
      %p323 = por %p321, %p322
      %p324 = scmp.ne.s32.totalorder %s312, %s313
      %p325 = scmp.eq.s32.totalorder %s30, 1
      %p326 = por %p324, %p325
      %p328 = scmp.ne.s32.totalorder %s313, %s327
      %p329 = scmp.eq.s32.totalorder %s30, 0
      %p330 = por %p328, %p329
      %s332 = sadd.s32 %s331, 1
      %p335 = scmp.eq.s32.totalorder %s24, 1
      %p336 = scmp.ne.s32.totalorder %s331, %s333
      %p337 = scmp.eq.s32.totalorder %s24, 0
      %p338 = por %p336, %p337
      %p339 = scmp.ne.s32.totalorder %s331, %s333
      %p340 = scmp.eq.s32.totalorder %s29, 1
      %p341 = por %p339, %p340
      %p342 = scmp.ne.s32.totalorder %s333, %s334
      %p343 = scmp.eq.s32.totalorder %s29, 0
      %p344 = por %p342, %p343
      %p345 = scmp.ne.s32.totalorder %s333, %s334
      %p346 = scmp.eq.s32.totalorder %s30, 1
      %p347 = por %p345, %p346
      %p349 = scmp.ne.s32.totalorder %s334, %s348
      %p350 = scmp.eq.s32.totalorder %s30, 0
      %p351 = por %p349, %p350
      %s352 = ssub.s32 %s24, %s31
      %p353 = scmp.eq.s32.totalorder %s352, 0
      %s355 = sadd.s32 %s354, 1
      %s356 = scalar_select %p353, %s354, %s355
      %p359 = pneg %p353
      %p360 = scmp.eq.s32.totalorder %s24, 1
      %p361 = por %p359, %p360
      %p362 = scmp.ne.s32.totalorder %s354, %s357
      %p363 = scmp.eq.s32.totalorder %s24, 0
      %p364 = por %p362, %p363
      %p365 = scmp.ne.s32.totalorder %s354, %s357
      %p366 = scmp.eq.s32.totalorder %s29, 1
      %p367 = por %p365, %p366
      %p368 = scmp.ne.s32.totalorder %s357, %s358
      %p369 = scmp.eq.s32.totalorder %s29, 0
      %p370 = por %p368, %p369
      %p371 = scmp.ne.s32.totalorder %s357, %s358
      %p372 = scmp.eq.s32.totalorder %s30, 1
      %p373 = por %p371, %p372
      %p375 = scmp.ne.s32.totalorder %s358, %s374
      %p376 = scmp.eq.s32.totalorder %s30, 0
      %p377 = por %p375, %p376
      %p378 = scmp.le.s32.totalorder 1, %s24
      %p379 = scmp.lt.s32.totalorder %s24, 3
      %p380 = pnand %p378, %p379
      %p381 = pneg %p380
      // Predicated region
      $region9: #{net_forward.1} parent=5 // pred_check
        _
      $region10: #{net_forward.1} parent=5 // pred_check_branch
        %383 = sbr.rel (%p380) target = $region12
      $region11: #{net_forward.1} parent=5 // pred_region
        %s384 = ssub.s32 %s24, 1
        // Predicated region
        $region13: #{net_forward.1} parent=11 // pred_check
          %p385 = pneg %p71
        $region14: #{net_forward.1} parent=11 // pred_check_branch
          %387 = sbr.rel (%p385) target = $region16
        $region15: #{net_forward.1} parent=11 // pred_region
          _
        $region16: #{net_forward.1} parent=11 // pred_fallthru
          _
        // Predicated region
        $region17: #{net_forward.1} parent=11 // pred_check
          %p388 = pneg %p92
        $region18: #{net_forward.1} parent=11 // pred_check_branch
          %390 = sbr.rel (%p388) target = $region20
        $region19: #{net_forward.1} parent=11 // pred_region
          _
        $region20: #{net_forward.1} parent=11 // pred_fallthru
          _
        // Predicated region
        $region21: #{net_forward.1} parent=11 // pred_check
          %p391 = pneg %p113
        $region22: #{net_forward.1} parent=11 // pred_check_branch
          %393 = sbr.rel (%p391) target = $region24
        $region23: #{net_forward.1} parent=11 // pred_region
          _
        $region24: #{net_forward.1} parent=11 // pred_fallthru
          _
        // Predicated region
        $region25: #{net_forward.1} parent=11 // pred_check
          %p394 = pneg %p134
        $region26: #{net_forward.1} parent=11 // pred_check_branch
          %396 = sbr.rel (%p394) target = $region28
        $region27: #{net_forward.1} parent=11 // pred_region
          _
        $region28: #{net_forward.1} parent=11 // pred_fallthru
          _
        // Predicated region
        $region29: #{net_forward.1} parent=11 // pred_check
          %p397 = pneg %p155
        $region30: #{net_forward.1} parent=11 // pred_check_branch
          %399 = sbr.rel (%p397) target = $region32
        $region31: #{net_forward.1} parent=11 // pred_region
          _
        $region32: #{net_forward.1} parent=11 // pred_fallthru
          _
        // Predicated region
        $region33: #{net_forward.1} parent=11 // pred_check
          %p400 = pneg %p176
        $region34: #{net_forward.1} parent=11 // pred_check_branch
          %402 = sbr.rel (%p400) target = $region36
        $region35: #{net_forward.1} parent=11 // pred_region
          _
        $region36: #{net_forward.1} parent=11 // pred_fallthru
          _
        // Predicated region
        $region37: #{net_forward.1} parent=11 // pred_check
          %p403 = pneg %p197
        $region38: #{net_forward.1} parent=11 // pred_check_branch
          %405 = sbr.rel (%p403) target = $region40
        $region39: #{net_forward.1} parent=11 // pred_region
          _
        $region40: #{net_forward.1} parent=11 // pred_fallthru
          _
        // Predicated region
        $region41: #{net_forward.1} parent=11 // pred_check
          %p406 = pneg %p218
        $region42: #{net_forward.1} parent=11 // pred_check_branch
          %408 = sbr.rel (%p406) target = $region44
        $region43: #{net_forward.1} parent=11 // pred_region
          _
        $region44: #{net_forward.1} parent=11 // pred_fallthru
          _
        // Predicated region
        $region45: #{net_forward.1} parent=11 // pred_check
          %p409 = pneg %p239
        $region46: #{net_forward.1} parent=11 // pred_check_branch
          %411 = sbr.rel (%p409) target = $region48
        $region47: #{net_forward.1} parent=11 // pred_region
          _
        $region48: #{net_forward.1} parent=11 // pred_fallthru
          _
        // Predicated region
        $region49: #{net_forward.1} parent=11 // pred_check
          %p412 = pneg %p260
        $region50: #{net_forward.1} parent=11 // pred_check_branch
          %414 = sbr.rel (%p412) target = $region52
        $region51: #{net_forward.1} parent=11 // pred_region
          _
        $region52: #{net_forward.1} parent=11 // pred_fallthru
          _
        // Predicated region
        $region53: #{net_forward.1} parent=11 // pred_check
          %p415 = pneg %p281
        $region54: #{net_forward.1} parent=11 // pred_check_branch
          %417 = sbr.rel (%p415) target = $region56
        $region55: #{net_forward.1} parent=11 // pred_region
          _
        $region56: #{net_forward.1} parent=11 // pred_fallthru
          _
        // Predicated region
        $region57: #{net_forward.1} parent=11 // pred_check
          %p418 = pneg %p302
        $region58: #{net_forward.1} parent=11 // pred_check_branch
          %420 = sbr.rel (%p418) target = $region60
        $region59: #{net_forward.1} parent=11 // pred_region
          _
        $region60: #{net_forward.1} parent=11 // pred_fallthru
          _
        // Predicated region
        $region61: #{net_forward.1} parent=11 // pred_check
          %p421 = pneg %p323
        $region62: #{net_forward.1} parent=11 // pred_check_branch
          %423 = sbr.rel (%p421) target = $region64
        $region63: #{net_forward.1} parent=11 // pred_region
          _
        $region64: #{net_forward.1} parent=11 // pred_fallthru
          _
        // Predicated region
        $region65: #{net_forward.1} parent=11 // pred_check
          %p424 = pneg %p344
        $region66: #{net_forward.1} parent=11 // pred_check_branch
          %426 = sbr.rel (%p424) target = $region68
        $region67: #{net_forward.1} parent=11 // pred_region
          _
        $region68: #{net_forward.1} parent=11 // pred_fallthru
          _
      $region12: #{net_forward.1} parent=5 // pred_fallthru
        _
      %p427 = scmp.lt.s32.totalorder %s24, 2
      // Predicated region
      $region69: #{net_forward.1} parent=5 // pred_check
        %p428 = pneg %p427
      $region70: #{net_forward.1} parent=5 // pred_check_branch
        %430 = sbr.rel (%p428) target = $region72
      $region71: #{net_forward.1} parent=5 // pred_region
        // Predicated region
        $region73: #{net_forward.1} parent=71 // pred_check
          %p431 = pneg %p44
        $region74: #{net_forward.1} parent=71 // pred_check_branch
          %433 = sbr.rel (%p431) target = $region76
        $region75: #{net_forward.1} parent=71 // pred_region
          %s434 = smul.u32 32, %s24
          %p435 = scmp.lt.s32.totalorder %s434, 63
          %s436 = scalar_select %p435, %s434, 63
          %s437 = smul.addr %s436, 8
          %s438 = scalar_lea.vmem %s0, %s437
          %s439 = smul.u32 32, %s24
        $region76: #{net_forward.1} parent=71 // pred_fallthru
          _
      $region72: #{net_forward.1} parent=5 // pred_fallthru
        _
      %p440 = scmp.le.s32.totalorder 1, %s24
      %p441 = scmp.lt.s32.totalorder %s24, 3
      %p442 = pnand %p440, %p441
      %p443 = pneg %p442
      // Predicated region
      $region77: #{net_forward.1} parent=5 // pred_check
        _
      $region78: #{net_forward.1} parent=5 // pred_check_branch
        %445 = sbr.rel (%p442) target = $region80
      $region79: #{net_forward.1} parent=5 // pred_region
        %s446 = ssub.s32 %s24, 1
        %s447 = smul.u32 32, %s29
        %p448 = scmp.lt.s32.totalorder %s447, 63
        %s449 = scalar_select %p448, %s447, 63
        %s450 = smul.addr %s449, 8
        %s451 = scalar_lea.vmem %s0, %s450
        %p452 = pneg %p50
        %p453 = pneg %p47
        %p454 = pneg %p71
        %p455 = pneg %p68
        %p456 = pneg %p92
        %p457 = pneg %p89
        %p458 = pneg %p113
        %p459 = pneg %p110
        %p460 = pneg %p134
        %p461 = pneg %p131
        %p462 = pneg %p155
        %p463 = pneg %p152
        %p464 = pneg %p176
        %p465 = pneg %p173
        %p466 = pneg %p197
        %p467 = pneg %p194
        %p468 = pneg %p218
        %p469 = pneg %p215
        %p470 = pneg %p239
        %p471 = pneg %p236
        %p472 = pneg %p260
        %p473 = pneg %p257
        %p474 = pneg %p281
        %p475 = pneg %p278
        %p476 = pneg %p302
        %p477 = pneg %p299
        %p478 = pneg %p323
        %p479 = pneg %p320
        %p480 = pneg %p344
        %p481 = pneg %p341
        %p482 = pneg %p370
        %p483 = pneg %p367
        %s484 = sand.u32 %s357, 1
        %s485 = scalar_lea.sflag [#allocation3], %s484
        %s486 = sand.u32 %s357, 1
        %s487 = smul.addr %s486, 8
        %s488 = scalar_lea.vmem [#allocation2], %s487
        %s489 = smul.u32 32, %s29
        %p490 = scmp.lt.s32.totalorder %s489, 63
        %s491 = scalar_select %p490, %s489, 63
        %s492 = smul.addr %s491, 8
        %s493 = scalar_lea.vmem %s0, %s492
        %s494 = smul.u32 32, %s29
        %v496 = vld [vmem:[%s493] sm:$0xff]
        %v497 = vld [vmem:[%s493 + $0x8] sm:$0xff]
        %v498 = vld [vmem:[%s493 + $0x10] sm:$0xff]
        %v499 = vld [vmem:[%s493 + $0x18] sm:$0xff]
        %v500 = vld [vmem:[%s493 + $0x20] sm:$0xff]
        %v501 = vld [vmem:[%s493 + $0x28] sm:$0xff]
        %v502 = vld [vmem:[%s493 + $0x30] sm:$0xff]
        %v503 = vld [vmem:[%s493 + $0x38] sm:$0xff]
        %v504 = vld [vmem:[%s493 + $0x40] sm:$0xff]
        %v505 = vld [vmem:[%s493 + $0x48] sm:$0xff]
        %v506 = vld [vmem:[%s493 + $0x50] sm:$0xff]
        %v507 = vld [vmem:[%s493 + $0x58] sm:$0xff]
        %v508 = vld [vmem:[%s493 + $0x60] sm:$0xff]
        %v509 = vld [vmem:[%s493 + $0x68] sm:$0xff]
        %v510 = vld [vmem:[%s493 + $0x70] sm:$0xff]
        %v511 = vld [vmem:[%s493 + $0x78] sm:$0xff]
        %v512 = vld [vmem:[%s493 + $0x80] sm:$0xff]
        %v513 = vld [vmem:[%s493 + $0x88] sm:$0xff]
        %v514 = vld [vmem:[%s493 + $0x90] sm:$0xff]
        %v515 = vld [vmem:[%s493 + $0x98] sm:$0xff]
        %v516 = vld [vmem:[%s493 + $0xa0] sm:$0xff]
        %v517 = vld [vmem:[%s493 + $0xa8] sm:$0xff]
        %v518 = vld [vmem:[%s493 + $0xb0] sm:$0xff]
        %v519 = vld [vmem:[%s493 + $0xb8] sm:$0xff]
        %v520 = vld [vmem:[%s493 + $0xc0] sm:$0xff]
        %v521 = vld [vmem:[%s493 + $0xc8] sm:$0xff]
        %v522 = vld [vmem:[%s493 + $0xd0] sm:$0xff]
        %v523 = vld [vmem:[%s493 + $0xd8] sm:$0xff]
        %v524 = vld [vmem:[%s493 + $0xe0] sm:$0xff]
        %v525 = vld [vmem:[%s493 + $0xe8] sm:$0xff]
        %v526 = vld [vmem:[%s493 + $0xf0] sm:$0xff]
        %v527 = vld [vmem:[%s493 + $0xf8] sm:$0xf]
        %v528 = vpack.c.bf16 %v497, %v496
        %v529 = vpack.c.bf16 %v499, %v498
        %v530 = vpack.c.bf16 %v501, %v500
        %v531 = vpack.c.bf16 %v503, %v502
        %v532 = vpack.c.bf16 %v505, %v504
        %v533 = vpack.c.bf16 %v507, %v506
        %v534 = vpack.c.bf16 %v509, %v508
        %v535 = vpack.c.bf16 %v511, %v510
        %v536 = vpack.c.bf16 %v513, %v512
        %v537 = vpack.c.bf16 %v515, %v514
        %v538 = vpack.c.bf16 %v517, %v516
        %v539 = vpack.c.bf16 %v519, %v518
        %v540 = vpack.c.bf16 %v521, %v520
        %v541 = vpack.c.bf16 %v523, %v522
        %v542 = vpack.c.bf16 %v525, %v524
        %v543 = vpack.c.bf16 %v527, %v526
        %v544 = vld [vmem:[%s1] sm:$0xff]
        %v545 = vld [vmem:[%s1 + $0x8] sm:$0xff]
        %v546 = vld [vmem:[%s1 + $0x10] sm:$0xff]
        %v547 = vld [vmem:[%s1 + $0x18] sm:$0xff]
        %v548 = vld [vmem:[%s1 + $0x20] sm:$0xff]
        %v549 = vld [vmem:[%s1 + $0x28] sm:$0xff]
        %v550 = vld [vmem:[%s1 + $0x30] sm:$0xff]
        %v551 = vld [vmem:[%s1 + $0x38] sm:$0xff]
        %v552 = vld [vmem:[%s1 + $0x40] sm:$0xff]
        %v553 = vld [vmem:[%s1 + $0x48] sm:$0xff]
        %v554 = vld [vmem:[%s1 + $0x50] sm:$0xff]
        %v555 = vld [vmem:[%s1 + $0x58] sm:$0xff]
        %v556 = vld [vmem:[%s493 + $0x1] sm:$0xff]
        %v557 = vld [vmem:[%s493 + $0x9] sm:$0xff]
        %v558 = vld [vmem:[%s493 + $0x11] sm:$0xff]
        %v559 = vld [vmem:[%s493 + $0x19] sm:$0xff]
        %v560 = vld [vmem:[%s493 + $0x21] sm:$0xff]
        %v561 = vld [vmem:[%s493 + $0x29] sm:$0xff]
        %v562 = vld [vmem:[%s493 + $0x31] sm:$0xff]
        %v563 = vld [vmem:[%s493 + $0x39] sm:$0xff]
        %v564 = vld [vmem:[%s493 + $0x41] sm:$0xff]
        %v565 = vld [vmem:[%s493 + $0x49] sm:$0xff]
        %v566 = vld [vmem:[%s493 + $0x51] sm:$0xff]
        %v567 = vld [vmem:[%s493 + $0x59] sm:$0xff]
        %v568 = vld [vmem:[%s493 + $0x61] sm:$0xff]
        %v569 = vld [vmem:[%s493 + $0x69] sm:$0xff]
        %v570 = vld [vmem:[%s493 + $0x71] sm:$0xff]
        %v571 = vld [vmem:[%s493 + $0x79] sm:$0xff]
        %v572 = vld [vmem:[%s493 + $0x81] sm:$0xff]
        %v573 = vld [vmem:[%s493 + $0x89] sm:$0xff]
        %v574 = vld [vmem:[%s493 + $0x91] sm:$0xff]
        %v575 = vld [vmem:[%s493 + $0x99] sm:$0xff]
        %v576 = vld [vmem:[%s493 + $0xa1] sm:$0xff]
        %v577 = vld [vmem:[%s493 + $0xa9] sm:$0xff]
        %v578 = vld [vmem:[%s493 + $0xb1] sm:$0xff]
        %v579 = vld [vmem:[%s493 + $0xb9] sm:$0xff]
        %v580 = vld [vmem:[%s493 + $0xc1] sm:$0xff]
        %v581 = vld [vmem:[%s493 + $0xc9] sm:$0xff]
        %v582 = vld [vmem:[%s493 + $0xd1] sm:$0xff]
        %v583 = vld [vmem:[%s493 + $0xd9] sm:$0xff]
        %v584 = vld [vmem:[%s493 + $0xe1] sm:$0xff]
        %v585 = vld [vmem:[%s493 + $0xe9] sm:$0xff]
        %v586 = vld [vmem:[%s493 + $0xf1] sm:$0xff]
        %v587 = vld [vmem:[%s493 + $0xf9] sm:$0xf]
        %v588 = vpack.c.bf16 %v557, %v556
        %v589 = vpack.c.bf16 %v559, %v558
        %v590 = vpack.c.bf16 %v561, %v560
        %v591 = vpack.c.bf16 %v563, %v562
        %v592 = vpack.c.bf16 %v565, %v564
        %v593 = vpack.c.bf16 %v567, %v566
        %v594 = vpack.c.bf16 %v569, %v568
        %v595 = vpack.c.bf16 %v571, %v570
        %v596 = vpack.c.bf16 %v573, %v572
        %v597 = vpack.c.bf16 %v575, %v574
        %v598 = vpack.c.bf16 %v577, %v576
        %v599 = vpack.c.bf16 %v579, %v578
        %v600 = vpack.c.bf16 %v581, %v580
        %v601 = vpack.c.bf16 %v583, %v582
        %v602 = vpack.c.bf16 %v585, %v584
        %v603 = vpack.c.bf16 %v587, %v586
        %s604 = scalar_lea.vmem %s1, 96
        %v605 = vld [vmem:[%s604] sm:$0xff]
        %v606 = vld [vmem:[%s604 + $0x8] sm:$0xff]
        %v607 = vld [vmem:[%s604 + $0x10] sm:$0xff]
        %v608 = vld [vmem:[%s604 + $0x18] sm:$0xff]
        %v609 = vld [vmem:[%s604 + $0x20] sm:$0xff]
        %v610 = vld [vmem:[%s604 + $0x28] sm:$0xff]
        %v611 = vld [vmem:[%s604 + $0x30] sm:$0xff]
        %v612 = vld [vmem:[%s604 + $0x38] sm:$0xff]
        %v613 = vld [vmem:[%s604 + $0x40] sm:$0xff]
        %v614 = vld [vmem:[%s604 + $0x48] sm:$0xff]
        %v615 = vld [vmem:[%s604 + $0x50] sm:$0xff]
        %v616 = vld [vmem:[%s604 + $0x58] sm:$0xff]
        %v629 = vunpack.c.l.b16 %v605
        %v630 = vunpack.c.h.b16 %v605
        %v631 = vunpack.c.l.b16 %v606
        %v632 = vunpack.c.h.b16 %v606
        %v633 = vunpack.c.l.b16 %v607
        %v634 = vunpack.c.h.b16 %v607
        %v635 = vunpack.c.l.b16 %v608
        %v636 = vunpack.c.h.b16 %v608
        %v637 = vunpack.c.l.b16 %v609
        %v638 = vunpack.c.h.b16 %v609
        %v639 = vunpack.c.l.b16 %v610
        %v640 = vunpack.c.h.b16 %v610
        %v641 = vunpack.c.l.b16 %v611
        %v642 = vunpack.c.h.b16 %v611
        %v643 = vunpack.c.l.b16 %v612
        %v644 = vunpack.c.h.b16 %v612
        %v645 = vunpack.c.l.b16 %v613
        %v646 = vunpack.c.h.b16 %v613
        %v647 = vunpack.c.l.b16 %v614
        %v648 = vunpack.c.h.b16 %v614
        %v649 = vunpack.c.l.b16 %v615
        %v650 = vunpack.c.h.b16 %v615
        %v651 = vunpack.c.l.b16 %v616
        %v652 = vunpack.c.h.b16 %v616
        %v653 = vpack.c.b16 %v631, %v629
        %v654 = vpack.c.b16 %v632, %v630
        %v655 = vpack.c.b16 %v635, %v633
        %v656 = vpack.c.b16 %v636, %v634
        %v657 = vpack.c.b16 %v639, %v637
        %v658 = vpack.c.b16 %v640, %v638
        %v659 = vpack.c.b16 %v643, %v641
        %v660 = vpack.c.b16 %v644, %v642
        %v661 = vpack.c.b16 %v647, %v645
        %v662 = vpack.c.b16 %v648, %v646
        %v663 = vpack.c.b16 %v651, %v649
        %v664 = vpack.c.b16 %v652, %v650
        %vm677 = vcmask 785408
        %v679 = vsel %vm677, %v588, 0
        %v682 = vsel %vm677, %v589, 0
        %v685 = vsel %vm677, %v590, 0
        %v688 = vsel %vm677, %v591, 0
        %v691 = vsel %vm677, %v592, 0
        %v694 = vsel %vm677, %v593, 0
        %v697 = vsel %vm677, %v594, 0
        %v700 = vsel %vm677, %v595, 0
        %v703 = vsel %vm677, %v596, 0
        %v706 = vsel %vm677, %v597, 0
        %v709 = vsel %vm677, %v598, 0
        %v712 = vsel %vm677, %v599, 0
        %v715 = vsel %vm677, %v600, 0
        %v718 = vsel %vm677, %v601, 0
        %v721 = vsel %vm677, %v602, 0
        %v724 = vsel %vm677, %v603, 0
        %726 = vmatprep.subr.bf16.mxu0 0
        %727 = vmatpush1.bf16.msra.mxu0 0
        %728 = vmatprep.subr.bf16.mxu0 0
        %729 = vmatpush1.bf16.msra.mxu0 0
        %730 = vmatprep.subr.bf16.mxu0 %v664
        %731 = vmatpush1.bf16.msra.mxu0 %v663
        %732 = vmatprep.subr.bf16.mxu0 %v662
        %733 = vmatpush1.bf16.msra.mxu0 %v661
        %734 = vmatprep.subr.bf16.mxu0 %v660
        %735 = vmatpush1.bf16.msra.mxu0 %v659
        %736 = vmatprep.subr.bf16.mxu0 %v658
        %737 = vmatpush1.bf16.msra.mxu0 %v657
        %738 = vmatprep.subr.bf16.mxu0 %v656
        %739 = vmatpush1.bf16.msra.mxu0 %v655
        %740 = vmatprep.subr.bf16.mxu0 %v654
        %741 = vmatpush1.bf16.msra.mxu0 %v653
        %742 = vmatprep.subr.bf16.mxu0 0
        %743 = vmatpush2.bf16.msra.mxu0 0
        %744 = vmatprep.subr.bf16.mxu0 0
        %745 = vmatpush2.bf16.msra.mxu0 0
        %746 = vmatprep.subr.bf16.mxu0 0
        %747 = vmatpush2.bf16.msra.mxu0 0
        %748 = vmatprep.subr.bf16.mxu0 0
        %749 = vmatpush2.bf16.msra.mxu0 0
        %750 = vmatprep.subr.bf16.mxu0 0
        %751 = vmatpush2.bf16.msra.mxu0 0
        %752 = vmatprep.subr.bf16.mxu0 0
        %753 = vmatpush2.bf16.msra.mxu0 0
        %754 = vmatprep.subr.bf16.mxu0 0
        %755 = vmatpush2.bf16.msra.mxu0 0
        %756 = vmatprep.subr.bf16.mxu0 0
        %757 = vmatpush2.bf16.msra.mxu0 0
        %758 = vmatprep.mubr.bf16.mxu0 0
        %759 = vmatmul.mubr.bf16.gmra.mxu0 %v679
        %v760 = vpop.f32.mrf.mxu0
        %v761 = vadd.f32 0.0, %v760
        %v762 = vpop.f32.mrf.mxu0
        %v763 = vadd.f32 0.0, %v762
        %v764 = vpop.f32.mrf.mxu0
        %v765 = vadd.f32 0.0, %v764
        %v766 = vpop.f32.mrf.mxu0
        %v767 = vadd.f32 0.0, %v766
        %768 = vmatprep.mubr.bf16.mxu0 0
        %769 = vmatmul.mubr.bf16.gmra.mxu0 %v682
        %v770 = vpop.f32.mrf.mxu0
        %v771 = vadd.f32 0.0, %v770
        %v772 = vpop.f32.mrf.mxu0
        %v773 = vadd.f32 0.0, %v772
        %v774 = vpop.f32.mrf.mxu0
        %v775 = vadd.f32 0.0, %v774
        %v776 = vpop.f32.mrf.mxu0
        %v777 = vadd.f32 0.0, %v776
        %778 = vmatprep.mubr.bf16.mxu0 0
        %779 = vmatmul.mubr.bf16.gmra.mxu0 %v685
        %v780 = vpop.f32.mrf.mxu0
        %v781 = vadd.f32 0.0, %v780
        %v782 = vpop.f32.mrf.mxu0
        %v783 = vadd.f32 0.0, %v782
        %v784 = vpop.f32.mrf.mxu0
        %v785 = vadd.f32 0.0, %v784
        %v786 = vpop.f32.mrf.mxu0
        %v787 = vadd.f32 0.0, %v786
        %788 = vmatprep.mubr.bf16.mxu0 0
        %789 = vmatmul.mubr.bf16.gmra.mxu0 %v688
        %v790 = vpop.f32.mrf.mxu0
        %v791 = vadd.f32 0.0, %v790
        %v792 = vpop.f32.mrf.mxu0
        %v793 = vadd.f32 0.0, %v792
        %v794 = vpop.f32.mrf.mxu0
        %v795 = vadd.f32 0.0, %v794
        %v796 = vpop.f32.mrf.mxu0
        %v797 = vadd.f32 0.0, %v796
        %798 = vmatprep.mubr.bf16.mxu0 0
        %799 = vmatmul.mubr.bf16.gmra.mxu0 %v691
        %v800 = vpop.f32.mrf.mxu0
        %v801 = vadd.f32 0.0, %v800
        %v802 = vpop.f32.mrf.mxu0
        %v803 = vadd.f32 0.0, %v802
        %v804 = vpop.f32.mrf.mxu0
        %v805 = vadd.f32 0.0, %v804
        %v806 = vpop.f32.mrf.mxu0
        %v807 = vadd.f32 0.0, %v806
        %808 = vmatprep.mubr.bf16.mxu0 0
        %809 = vmatmul.mubr.bf16.gmra.mxu0 %v694
        %v810 = vpop.f32.mrf.mxu0
        %v811 = vadd.f32 0.0, %v810
        %v812 = vpop.f32.mrf.mxu0
        %v813 = vadd.f32 0.0, %v812
        %v814 = vpop.f32.mrf.mxu0
        %v815 = vadd.f32 0.0, %v814
        %v816 = vpop.f32.mrf.mxu0
        %v817 = vadd.f32 0.0, %v816
        %818 = vmatprep.mubr.bf16.mxu0 0
        %819 = vmatmul.mubr.bf16.gmra.mxu0 %v697
        %v820 = vpop.f32.mrf.mxu0
        %v821 = vadd.f32 0.0, %v820
        %v822 = vpop.f32.mrf.mxu0
        %v823 = vadd.f32 0.0, %v822
        %v824 = vpop.f32.mrf.mxu0
        %v825 = vadd.f32 0.0, %v824
        %v826 = vpop.f32.mrf.mxu0
        %v827 = vadd.f32 0.0, %v826
        %828 = vmatprep.mubr.bf16.mxu0 0
        %829 = vmatmul.mubr.bf16.gmra.mxu0 %v700
        %v830 = vpop.f32.mrf.mxu0
        %v831 = vadd.f32 0.0, %v830
        %v832 = vpop.f32.mrf.mxu0
        %v833 = vadd.f32 0.0, %v832
        %v834 = vpop.f32.mrf.mxu0
        %v835 = vadd.f32 0.0, %v834
        %v836 = vpop.f32.mrf.mxu0
        %v837 = vadd.f32 0.0, %v836
        %838 = vmatprep.mubr.bf16.mxu0 0
        %839 = vmatmul.mubr.bf16.gmra.mxu0 %v703
        %v840 = vpop.f32.mrf.mxu0
        %v841 = vadd.f32 0.0, %v840
        %v842 = vpop.f32.mrf.mxu0
        %v843 = vadd.f32 0.0, %v842
        %v844 = vpop.f32.mrf.mxu0
        %v845 = vadd.f32 0.0, %v844
        %v846 = vpop.f32.mrf.mxu0
        %v847 = vadd.f32 0.0, %v846
        %848 = vmatprep.mubr.bf16.mxu0 0
        %849 = vmatmul.mubr.bf16.gmra.mxu0 %v706
        %v850 = vpop.f32.mrf.mxu0
        %v851 = vadd.f32 0.0, %v850
        %v852 = vpop.f32.mrf.mxu0
        %v853 = vadd.f32 0.0, %v852
        %v854 = vpop.f32.mrf.mxu0
        %v855 = vadd.f32 0.0, %v854
        %v856 = vpop.f32.mrf.mxu0
        %v857 = vadd.f32 0.0, %v856
        %858 = vmatprep.mubr.bf16.mxu0 0
        %859 = vmatmul.mubr.bf16.gmra.mxu0 %v709
        %v860 = vpop.f32.mrf.mxu0
        %v861 = vadd.f32 0.0, %v860
        %v862 = vpop.f32.mrf.mxu0
        %v863 = vadd.f32 0.0, %v862
        %v864 = vpop.f32.mrf.mxu0
        %v865 = vadd.f32 0.0, %v864
        %v866 = vpop.f32.mrf.mxu0
        %v867 = vadd.f32 0.0, %v866
        %868 = vmatprep.mubr.bf16.mxu0 0
        %869 = vmatmul.mubr.bf16.gmra.mxu0 %v712
        %v870 = vpop.f32.mrf.mxu0
        %v871 = vadd.f32 0.0, %v870
        %v872 = vpop.f32.mrf.mxu0
        %v873 = vadd.f32 0.0, %v872
        %v874 = vpop.f32.mrf.mxu0
        %v875 = vadd.f32 0.0, %v874
        %v876 = vpop.f32.mrf.mxu0
        %v877 = vadd.f32 0.0, %v876
        %878 = vmatprep.mubr.bf16.mxu0 0
        %879 = vmatmul.mubr.bf16.gmra.mxu0 %v715
        %v880 = vpop.f32.mrf.mxu0
        %v881 = vadd.f32 0.0, %v880
        %v882 = vpop.f32.mrf.mxu0
        %v883 = vadd.f32 0.0, %v882
        %v884 = vpop.f32.mrf.mxu0
        %v885 = vadd.f32 0.0, %v884
        %v886 = vpop.f32.mrf.mxu0
        %v887 = vadd.f32 0.0, %v886
        %888 = vmatprep.mubr.bf16.mxu0 0
        %889 = vmatmul.mubr.bf16.gmra.mxu0 %v718
        %v890 = vpop.f32.mrf.mxu0
        %v891 = vadd.f32 0.0, %v890
        %v892 = vpop.f32.mrf.mxu0
        %v893 = vadd.f32 0.0, %v892
        %v894 = vpop.f32.mrf.mxu0
        %v895 = vadd.f32 0.0, %v894
        %v896 = vpop.f32.mrf.mxu0
        %v897 = vadd.f32 0.0, %v896
        %898 = vmatprep.mubr.bf16.mxu0 0
        %899 = vmatmul.mubr.bf16.gmra.mxu0 %v721
        %v900 = vpop.f32.mrf.mxu0
        %v901 = vadd.f32 0.0, %v900
        %v902 = vpop.f32.mrf.mxu0
        %v903 = vadd.f32 0.0, %v902
        %v904 = vpop.f32.mrf.mxu0
        %v905 = vadd.f32 0.0, %v904
        %v906 = vpop.f32.mrf.mxu0
        %v907 = vadd.f32 0.0, %v906
        %908 = vmatprep.mubr.bf16.mxu0 0
        %909 = vmatmul.mubr.bf16.gmra.mxu0 %v724
        %v910 = vpop.f32.mrf.mxu0
        %v911 = vadd.f32 0.0, %v910
        %v912 = vpop.f32.mrf.mxu0
        %v913 = vadd.f32 0.0, %v912
        %v914 = vpop.f32.mrf.mxu0
        %v915 = vadd.f32 0.0, %v914
        %v916 = vpop.f32.mrf.mxu0
        %v917 = vadd.f32 0.0, %v916
        %918 = vdwg.mxu0
        %v931 = vunpack.c.l.b16 %v544
        %v932 = vunpack.c.h.b16 %v544
        %v933 = vunpack.c.l.b16 %v545
        %v934 = vunpack.c.h.b16 %v545
        %v935 = vunpack.c.l.b16 %v546
        %v936 = vunpack.c.h.b16 %v546
        %v937 = vunpack.c.l.b16 %v547
        %v938 = vunpack.c.h.b16 %v547
        %v939 = vunpack.c.l.b16 %v548
        %v940 = vunpack.c.h.b16 %v548
        %v941 = vunpack.c.l.b16 %v549
        %v942 = vunpack.c.h.b16 %v549
        %v943 = vunpack.c.l.b16 %v550
        %v944 = vunpack.c.h.b16 %v550
        %v945 = vunpack.c.l.b16 %v551
        %v946 = vunpack.c.h.b16 %v551
        %v947 = vunpack.c.l.b16 %v552
        %v948 = vunpack.c.h.b16 %v552
        %v949 = vunpack.c.l.b16 %v553
        %v950 = vunpack.c.h.b16 %v553
        %v951 = vunpack.c.l.b16 %v554
        %v952 = vunpack.c.h.b16 %v554
        %v953 = vunpack.c.l.b16 %v555
        %v954 = vunpack.c.h.b16 %v555
        %v955 = vpack.c.b16 %v933, %v931
        %v956 = vpack.c.b16 %v934, %v932
        %v957 = vpack.c.b16 %v937, %v935
        %v958 = vpack.c.b16 %v938, %v936
        %v959 = vpack.c.b16 %v941, %v939
        %v960 = vpack.c.b16 %v942, %v940
        %v961 = vpack.c.b16 %v945, %v943
        %v962 = vpack.c.b16 %v946, %v944
        %v963 = vpack.c.b16 %v949, %v947
        %v964 = vpack.c.b16 %v950, %v948
        %v965 = vpack.c.b16 %v953, %v951
        %v966 = vpack.c.b16 %v954, %v952
        %v980 = vsel %vm677, %v528, 0
        %v983 = vsel %vm677, %v529, 0
        %v986 = vsel %vm677, %v530, 0
        %v989 = vsel %vm677, %v531, 0
        %v992 = vsel %vm677, %v532, 0
        %v995 = vsel %vm677, %v533, 0
        %v998 = vsel %vm677, %v534, 0
        %v1001 = vsel %vm677, %v535, 0
        %v1004 = vsel %vm677, %v536, 0
        %v1007 = vsel %vm677, %v537, 0
        %v1010 = vsel %vm677, %v538, 0
        %v1013 = vsel %vm677, %v539, 0
        %v1016 = vsel %vm677, %v540, 0
        %v1019 = vsel %vm677, %v541, 0
        %v1022 = vsel %vm677, %v542, 0
        %v1025 = vsel %vm677, %v543, 0
        %1027 = vmatprep.subr.bf16.mxu0 0
        %1028 = vmatpush1.bf16.msra.mxu0 0
        %1029 = vmatprep.subr.bf16.mxu0 0
        %1030 = vmatpush1.bf16.msra.mxu0 0
        %1031 = vmatprep.subr.bf16.mxu0 %v966
        %1032 = vmatpush1.bf16.msra.mxu0 %v965
        %1033 = vmatprep.subr.bf16.mxu0 %v964
        %1034 = vmatpush1.bf16.msra.mxu0 %v963
        %1035 = vmatprep.subr.bf16.mxu0 %v962
        %1036 = vmatpush1.bf16.msra.mxu0 %v961
        %1037 = vmatprep.subr.bf16.mxu0 %v960
        %1038 = vmatpush1.bf16.msra.mxu0 %v959
        %1039 = vmatprep.subr.bf16.mxu0 %v958
        %1040 = vmatpush1.bf16.msra.mxu0 %v957
        %1041 = vmatprep.subr.bf16.mxu0 %v956
        %1042 = vmatpush1.bf16.msra.mxu0 %v955
        %1043 = vmatprep.subr.bf16.mxu0 0
        %1044 = vmatpush2.bf16.msra.mxu0 0
        %1045 = vmatprep.subr.bf16.mxu0 0
        %1046 = vmatpush2.bf16.msra.mxu0 0
        %1047 = vmatprep.subr.bf16.mxu0 0
        %1048 = vmatpush2.bf16.msra.mxu0 0
        %1049 = vmatprep.subr.bf16.mxu0 0
        %1050 = vmatpush2.bf16.msra.mxu0 0
        %1051 = vmatprep.subr.bf16.mxu0 0
        %1052 = vmatpush2.bf16.msra.mxu0 0
        %1053 = vmatprep.subr.bf16.mxu0 0
        %1054 = vmatpush2.bf16.msra.mxu0 0
        %1055 = vmatprep.subr.bf16.mxu0 0
        %1056 = vmatpush2.bf16.msra.mxu0 0
        %1057 = vmatprep.subr.bf16.mxu0 0
        %1058 = vmatpush2.bf16.msra.mxu0 0
        %1059 = vmatprep.mubr.bf16.mxu0 0
        %1060 = vmatmul.mubr.bf16.gmra.mxu0 %v980
        %v1061 = vpop.f32.mrf.mxu0
        %v1062 = vadd.f32 %v761, %v1061
        %v1063 = vpop.f32.mrf.mxu0
        %v1064 = vadd.f32 %v763, %v1063
        %v1065 = vpop.f32.mrf.mxu0
        %v1066 = vadd.f32 %v765, %v1065
        %v1067 = vpop.f32.mrf.mxu0
        %v1068 = vadd.f32 %v767, %v1067
        %1069 = vmatprep.mubr.bf16.mxu0 0
        %1070 = vmatmul.mubr.bf16.gmra.mxu0 %v983
        %v1071 = vpop.f32.mrf.mxu0
        %v1072 = vadd.f32 %v771, %v1071
        %v1073 = vpop.f32.mrf.mxu0
        %v1074 = vadd.f32 %v773, %v1073
        %v1075 = vpop.f32.mrf.mxu0
        %v1076 = vadd.f32 %v775, %v1075
        %v1077 = vpop.f32.mrf.mxu0
        %v1078 = vadd.f32 %v777, %v1077
        %1079 = vmatprep.mubr.bf16.mxu0 0
        %1080 = vmatmul.mubr.bf16.gmra.mxu0 %v986
        %v1081 = vpop.f32.mrf.mxu0
        %v1082 = vadd.f32 %v781, %v1081
        %v1083 = vpop.f32.mrf.mxu0
        %v1084 = vadd.f32 %v783, %v1083
        %v1085 = vpop.f32.mrf.mxu0
        %v1086 = vadd.f32 %v785, %v1085
        %v1087 = vpop.f32.mrf.mxu0
        %v1088 = vadd.f32 %v787, %v1087
        %1089 = vmatprep.mubr.bf16.mxu0 0
        %1090 = vmatmul.mubr.bf16.gmra.mxu0 %v989
        %v1091 = vpop.f32.mrf.mxu0
        %v1092 = vadd.f32 %v791, %v1091
        %v1093 = vpop.f32.mrf.mxu0
        %v1094 = vadd.f32 %v793, %v1093
        %v1095 = vpop.f32.mrf.mxu0
        %v1096 = vadd.f32 %v795, %v1095
        %v1097 = vpop.f32.mrf.mxu0
        %v1098 = vadd.f32 %v797, %v1097
        %1099 = vmatprep.mubr.bf16.mxu0 0
        %1100 = vmatmul.mubr.bf16.gmra.mxu0 %v992
        %v1101 = vpop.f32.mrf.mxu0
        %v1102 = vadd.f32 %v801, %v1101
        %v1103 = vpop.f32.mrf.mxu0
        %v1104 = vadd.f32 %v803, %v1103
        %v1105 = vpop.f32.mrf.mxu0
        %v1106 = vadd.f32 %v805, %v1105
        %v1107 = vpop.f32.mrf.mxu0
        %v1108 = vadd.f32 %v807, %v1107
        %1109 = vmatprep.mubr.bf16.mxu0 0
        %1110 = vmatmul.mubr.bf16.gmra.mxu0 %v995
        %v1111 = vpop.f32.mrf.mxu0
        %v1112 = vadd.f32 %v811, %v1111
        %v1113 = vpop.f32.mrf.mxu0
        %v1114 = vadd.f32 %v813, %v1113
        %v1115 = vpop.f32.mrf.mxu0
        %v1116 = vadd.f32 %v815, %v1115
        %v1117 = vpop.f32.mrf.mxu0
        %v1118 = vadd.f32 %v817, %v1117
        %1119 = vmatprep.mubr.bf16.mxu0 0
        %1120 = vmatmul.mubr.bf16.gmra.mxu0 %v998
        %v1121 = vpop.f32.mrf.mxu0
        %v1122 = vadd.f32 %v821, %v1121
        %v1123 = vpop.f32.mrf.mxu0
        %v1124 = vadd.f32 %v823, %v1123
        %v1125 = vpop.f32.mrf.mxu0
        %v1126 = vadd.f32 %v825, %v1125
        %v1127 = vpop.f32.mrf.mxu0
        %v1128 = vadd.f32 %v827, %v1127
        %1129 = vmatprep.mubr.bf16.mxu0 0
        %1130 = vmatmul.mubr.bf16.gmra.mxu0 %v1001
        %v1131 = vpop.f32.mrf.mxu0
        %v1132 = vadd.f32 %v831, %v1131
        %v1133 = vpop.f32.mrf.mxu0
        %v1134 = vadd.f32 %v833, %v1133
        %v1135 = vpop.f32.mrf.mxu0
        %v1136 = vadd.f32 %v835, %v1135
        %v1137 = vpop.f32.mrf.mxu0
        %v1138 = vadd.f32 %v837, %v1137
        %1139 = vmatprep.mubr.bf16.mxu0 0
        %1140 = vmatmul.mubr.bf16.gmra.mxu0 %v1004
        %v1141 = vpop.f32.mrf.mxu0
        %v1142 = vadd.f32 %v841, %v1141
        %v1143 = vpop.f32.mrf.mxu0
        %v1144 = vadd.f32 %v843, %v1143
        %v1145 = vpop.f32.mrf.mxu0
        %v1146 = vadd.f32 %v845, %v1145
        %v1147 = vpop.f32.mrf.mxu0
        %v1148 = vadd.f32 %v847, %v1147
        %1149 = vmatprep.mubr.bf16.mxu0 0
        %1150 = vmatmul.mubr.bf16.gmra.mxu0 %v1007
        %v1151 = vpop.f32.mrf.mxu0
        %v1152 = vadd.f32 %v851, %v1151
        %v1153 = vpop.f32.mrf.mxu0
        %v1154 = vadd.f32 %v853, %v1153
        %v1155 = vpop.f32.mrf.mxu0
        %v1156 = vadd.f32 %v855, %v1155
        %v1157 = vpop.f32.mrf.mxu0
        %v1158 = vadd.f32 %v857, %v1157
        %1159 = vmatprep.mubr.bf16.mxu0 0
        %1160 = vmatmul.mubr.bf16.gmra.mxu0 %v1010
        %v1161 = vpop.f32.mrf.mxu0
        %v1162 = vadd.f32 %v861, %v1161
        %v1163 = vpop.f32.mrf.mxu0
        %v1164 = vadd.f32 %v863, %v1163
        %v1165 = vpop.f32.mrf.mxu0
        %v1166 = vadd.f32 %v865, %v1165
        %v1167 = vpop.f32.mrf.mxu0
        %v1168 = vadd.f32 %v867, %v1167
        %1169 = vmatprep.mubr.bf16.mxu0 0
        %1170 = vmatmul.mubr.bf16.gmra.mxu0 %v1013
        %v1171 = vpop.f32.mrf.mxu0
        %v1172 = vadd.f32 %v871, %v1171
        %v1173 = vpop.f32.mrf.mxu0
        %v1174 = vadd.f32 %v873, %v1173
        %v1175 = vpop.f32.mrf.mxu0
        %v1176 = vadd.f32 %v875, %v1175
        %v1177 = vpop.f32.mrf.mxu0
        %v1178 = vadd.f32 %v877, %v1177
        %1179 = vmatprep.mubr.bf16.mxu0 0
        %1180 = vmatmul.mubr.bf16.gmra.mxu0 %v1016
        %v1181 = vpop.f32.mrf.mxu0
        %v1182 = vadd.f32 %v881, %v1181
        %v1183 = vpop.f32.mrf.mxu0
        %v1184 = vadd.f32 %v883, %v1183
        %v1185 = vpop.f32.mrf.mxu0
        %v1186 = vadd.f32 %v885, %v1185
        %v1187 = vpop.f32.mrf.mxu0
        %v1188 = vadd.f32 %v887, %v1187
        %1189 = vmatprep.mubr.bf16.mxu0 0
        %1190 = vmatmul.mubr.bf16.gmra.mxu0 %v1019
        %v1191 = vpop.f32.mrf.mxu0
        %v1192 = vadd.f32 %v891, %v1191
        %v1193 = vpop.f32.mrf.mxu0
        %v1194 = vadd.f32 %v893, %v1193
        %v1195 = vpop.f32.mrf.mxu0
        %v1196 = vadd.f32 %v895, %v1195
        %v1197 = vpop.f32.mrf.mxu0
        %v1198 = vadd.f32 %v897, %v1197
        %1199 = vmatprep.mubr.bf16.mxu0 0
        %1200 = vmatmul.mubr.bf16.gmra.mxu0 %v1022
        %v1201 = vpop.f32.mrf.mxu0
        %v1202 = vadd.f32 %v901, %v1201
        %v1203 = vpop.f32.mrf.mxu0
        %v1204 = vadd.f32 %v903, %v1203
        %v1205 = vpop.f32.mrf.mxu0
        %v1206 = vadd.f32 %v905, %v1205
        %v1207 = vpop.f32.mrf.mxu0
        %v1208 = vadd.f32 %v907, %v1207
        %1209 = vmatprep.mubr.bf16.mxu0 0
        %1210 = vmatmul.mubr.bf16.gmra.mxu0 %v1025
        %v1211 = vpop.f32.mrf.mxu0
        %v1212 = vadd.f32 %v911, %v1211
        %v1213 = vpop.f32.mrf.mxu0
        %v1214 = vadd.f32 %v913, %v1213
        %v1215 = vpop.f32.mrf.mxu0
        %v1216 = vadd.f32 %v915, %v1215
        %v1217 = vpop.f32.mrf.mxu0
        %v1218 = vadd.f32 %v917, %v1217
        %1219 = vdwg.mxu0
        %v1220 = vld [vmem:[%s493 + $0x2] sm:$0xff]
        %v1221 = vld [vmem:[%s493 + $0xa] sm:$0xff]
        %v1222 = vld [vmem:[%s493 + $0x12] sm:$0xff]
        %v1223 = vld [vmem:[%s493 + $0x1a] sm:$0xff]
        %v1224 = vld [vmem:[%s493 + $0x22] sm:$0xff]
        %v1225 = vld [vmem:[%s493 + $0x2a] sm:$0xff]
        %v1226 = vld [vmem:[%s493 + $0x32] sm:$0xff]
        %v1227 = vld [vmem:[%s493 + $0x3a] sm:$0xff]
        %v1228 = vld [vmem:[%s493 + $0x42] sm:$0xff]
        %v1229 = vld [vmem:[%s493 + $0x4a] sm:$0xff]
        %v1230 = vld [vmem:[%s493 + $0x52] sm:$0xff]
        %v1231 = vld [vmem:[%s493 + $0x5a] sm:$0xff]
        %v1232 = vld [vmem:[%s493 + $0x62] sm:$0xff]
        %v1233 = vld [vmem:[%s493 + $0x6a] sm:$0xff]
        %v1234 = vld [vmem:[%s493 + $0x72] sm:$0xff]
        %v1235 = vld [vmem:[%s493 + $0x7a] sm:$0xff]
        %v1236 = vld [vmem:[%s493 + $0x82] sm:$0xff]
        %v1237 = vld [vmem:[%s493 + $0x8a] sm:$0xff]
        %v1238 = vld [vmem:[%s493 + $0x92] sm:$0xff]
        %v1239 = vld [vmem:[%s493 + $0x9a] sm:$0xff]
        %v1240 = vld [vmem:[%s493 + $0xa2] sm:$0xff]
        %v1241 = vld [vmem:[%s493 + $0xaa] sm:$0xff]
        %v1242 = vld [vmem:[%s493 + $0xb2] sm:$0xff]
        %v1243 = vld [vmem:[%s493 + $0xba] sm:$0xff]
        %v1244 = vld [vmem:[%s493 + $0xc2] sm:$0xff]
        %v1245 = vld [vmem:[%s493 + $0xca] sm:$0xff]
        %v1246 = vld [vmem:[%s493 + $0xd2] sm:$0xff]
        %v1247 = vld [vmem:[%s493 + $0xda] sm:$0xff]
        %v1248 = vld [vmem:[%s493 + $0xe2] sm:$0xff]
        %v1249 = vld [vmem:[%s493 + $0xea] sm:$0xff]
        %v1250 = vld [vmem:[%s493 + $0xf2] sm:$0xff]
        %v1251 = vld [vmem:[%s493 + $0xfa] sm:$0xf]
        %v1252 = vpack.c.bf16 %v1221, %v1220
        %v1253 = vpack.c.bf16 %v1223, %v1222
        %v1254 = vpack.c.bf16 %v1225, %v1224
        %v1255 = vpack.c.bf16 %v1227, %v1226
        %v1256 = vpack.c.bf16 %v1229, %v1228
        %v1257 = vpack.c.bf16 %v1231, %v1230
        %v1258 = vpack.c.bf16 %v1233, %v1232
        %v1259 = vpack.c.bf16 %v1235, %v1234
        %v1260 = vpack.c.bf16 %v1237, %v1236
        %v1261 = vpack.c.bf16 %v1239, %v1238
        %v1262 = vpack.c.bf16 %v1241, %v1240
        %v1263 = vpack.c.bf16 %v1243, %v1242
        %v1264 = vpack.c.bf16 %v1245, %v1244
        %v1265 = vpack.c.bf16 %v1247, %v1246
        %v1266 = vpack.c.bf16 %v1249, %v1248
        %v1267 = vpack.c.bf16 %v1251, %v1250
        %s1268 = scalar_lea.vmem %s1, 192
        %v1269 = vld [vmem:[%s1268] sm:$0xff]
        %v1270 = vld [vmem:[%s1268 + $0x8] sm:$0xff]
        %v1271 = vld [vmem:[%s1268 + $0x10] sm:$0xff]
        %v1272 = vld [vmem:[%s1268 + $0x18] sm:$0xff]
        %v1273 = vld [vmem:[%s1268 + $0x20] sm:$0xff]
        %v1274 = vld [vmem:[%s1268 + $0x28] sm:$0xff]
        %v1275 = vld [vmem:[%s1268 + $0x30] sm:$0xff]
        %v1276 = vld [vmem:[%s1268 + $0x38] sm:$0xff]
        %v1277 = vld [vmem:[%s1268 + $0x40] sm:$0xff]
        %v1278 = vld [vmem:[%s1268 + $0x48] sm:$0xff]
        %v1279 = vld [vmem:[%s1268 + $0x50] sm:$0xff]
        %v1280 = vld [vmem:[%s1268 + $0x58] sm:$0xff]
        %v1293 = vunpack.c.l.b16 %v1269
        %v1294 = vunpack.c.h.b16 %v1269
        %v1295 = vunpack.c.l.b16 %v1270
        %v1296 = vunpack.c.h.b16 %v1270
        %v1297 = vunpack.c.l.b16 %v1271
        %v1298 = vunpack.c.h.b16 %v1271
        %v1299 = vunpack.c.l.b16 %v1272
        %v1300 = vunpack.c.h.b16 %v1272
        %v1301 = vunpack.c.l.b16 %v1273
        %v1302 = vunpack.c.h.b16 %v1273
        %v1303 = vunpack.c.l.b16 %v1274
        %v1304 = vunpack.c.h.b16 %v1274
        %v1305 = vunpack.c.l.b16 %v1275
        %v1306 = vunpack.c.h.b16 %v1275
        %v1307 = vunpack.c.l.b16 %v1276
        %v1308 = vunpack.c.h.b16 %v1276
        %v1309 = vunpack.c.l.b16 %v1277
        %v1310 = vunpack.c.h.b16 %v1277
        %v1311 = vunpack.c.l.b16 %v1278
        %v1312 = vunpack.c.h.b16 %v1278
        %v1313 = vunpack.c.l.b16 %v1279
        %v1314 = vunpack.c.h.b16 %v1279
        %v1315 = vunpack.c.l.b16 %v1280
        %v1316 = vunpack.c.h.b16 %v1280
        %v1317 = vpack.c.b16 %v1295, %v1293
        %v1318 = vpack.c.b16 %v1296, %v1294
        %v1319 = vpack.c.b16 %v1299, %v1297
        %v1320 = vpack.c.b16 %v1300, %v1298
        %v1321 = vpack.c.b16 %v1303, %v1301
        %v1322 = vpack.c.b16 %v1304, %v1302
        %v1323 = vpack.c.b16 %v1307, %v1305
        %v1324 = vpack.c.b16 %v1308, %v1306
        %v1325 = vpack.c.b16 %v1311, %v1309
        %v1326 = vpack.c.b16 %v1312, %v1310
        %v1327 = vpack.c.b16 %v1315, %v1313
        %v1328 = vpack.c.b16 %v1316, %v1314
        %v1342 = vsel %vm677, %v1252, 0
        %v1345 = vsel %vm677, %v1253, 0
        %v1348 = vsel %vm677, %v1254, 0
        %v1351 = vsel %vm677, %v1255, 0
        %v1354 = vsel %vm677, %v1256, 0
        %v1357 = vsel %vm677, %v1257, 0
        %v1360 = vsel %vm677, %v1258, 0
        %v1363 = vsel %vm677, %v1259, 0
        %v1366 = vsel %vm677, %v1260, 0
        %v1369 = vsel %vm677, %v1261, 0
        %v1372 = vsel %vm677, %v1262, 0
        %v1375 = vsel %vm677, %v1263, 0
        %v1378 = vsel %vm677, %v1264, 0
        %v1381 = vsel %vm677, %v1265, 0
        %v1384 = vsel %vm677, %v1266, 0
        %v1387 = vsel %vm677, %v1267, 0
        %1389 = vmatprep.subr.bf16.mxu0 0
        %1390 = vmatpush1.bf16.msra.mxu0 0
        %1391 = vmatprep.subr.bf16.mxu0 0
        %1392 = vmatpush1.bf16.msra.mxu0 0
        %1393 = vmatprep.subr.bf16.mxu0 %v1328
        %1394 = vmatpush1.bf16.msra.mxu0 %v1327
        %1395 = vmatprep.subr.bf16.mxu0 %v1326
        %1396 = vmatpush1.bf16.msra.mxu0 %v1325
        %1397 = vmatprep.subr.bf16.mxu0 %v1324
        %1398 = vmatpush1.bf16.msra.mxu0 %v1323
        %1399 = vmatprep.subr.bf16.mxu0 %v1322
        %1400 = vmatpush1.bf16.msra.mxu0 %v1321
        %1401 = vmatprep.subr.bf16.mxu0 %v1320
        %1402 = vmatpush1.bf16.msra.mxu0 %v1319
        %1403 = vmatprep.subr.bf16.mxu0 %v1318
        %1404 = vmatpush1.bf16.msra.mxu0 %v1317
        %1405 = vmatprep.subr.bf16.mxu0 0
        %1406 = vmatpush2.bf16.msra.mxu0 0
        %1407 = vmatprep.subr.bf16.mxu0 0
        %1408 = vmatpush2.bf16.msra.mxu0 0
        %1409 = vmatprep.subr.bf16.mxu0 0
        %1410 = vmatpush2.bf16.msra.mxu0 0
        %1411 = vmatprep.subr.bf16.mxu0 0
        %1412 = vmatpush2.bf16.msra.mxu0 0
        %1413 = vmatprep.subr.bf16.mxu0 0
        %1414 = vmatpush2.bf16.msra.mxu0 0
        %1415 = vmatprep.subr.bf16.mxu0 0
        %1416 = vmatpush2.bf16.msra.mxu0 0
        %1417 = vmatprep.subr.bf16.mxu0 0
        %1418 = vmatpush2.bf16.msra.mxu0 0
        %1419 = vmatprep.subr.bf16.mxu0 0
        %1420 = vmatpush2.bf16.msra.mxu0 0
        %1421 = vmatprep.mubr.bf16.mxu0 0
        %1422 = vmatmul.mubr.bf16.gmra.mxu0 %v1342
        %v1423 = vpop.f32.mrf.mxu0
        %v1424 = vadd.f32 0.0, %v1423
        %v1425 = vpop.f32.mrf.mxu0
        %v1426 = vadd.f32 0.0, %v1425
        %v1427 = vpop.f32.mrf.mxu0
        %v1428 = vadd.f32 0.0, %v1427
        %v1429 = vpop.f32.mrf.mxu0
        %v1430 = vadd.f32 0.0, %v1429
        %1431 = vmatprep.mubr.bf16.mxu0 0
        %1432 = vmatmul.mubr.bf16.gmra.mxu0 %v1345
        %v1433 = vpop.f32.mrf.mxu0
        %v1434 = vadd.f32 0.0, %v1433
        %v1435 = vpop.f32.mrf.mxu0
        %v1436 = vadd.f32 0.0, %v1435
        %v1437 = vpop.f32.mrf.mxu0
        %v1438 = vadd.f32 0.0, %v1437
        %v1439 = vpop.f32.mrf.mxu0
        %v1440 = vadd.f32 0.0, %v1439
        %1441 = vmatprep.mubr.bf16.mxu0 0
        %1442 = vmatmul.mubr.bf16.gmra.mxu0 %v1348
        %v1443 = vpop.f32.mrf.mxu0
        %v1444 = vadd.f32 0.0, %v1443
        %v1445 = vpop.f32.mrf.mxu0
        %v1446 = vadd.f32 0.0, %v1445
        %v1447 = vpop.f32.mrf.mxu0
        %v1448 = vadd.f32 0.0, %v1447
        %v1449 = vpop.f32.mrf.mxu0
        %v1450 = vadd.f32 0.0, %v1449
        %1451 = vmatprep.mubr.bf16.mxu0 0
        %1452 = vmatmul.mubr.bf16.gmra.mxu0 %v1351
        %v1453 = vpop.f32.mrf.mxu0
        %v1454 = vadd.f32 0.0, %v1453
        %v1455 = vpop.f32.mrf.mxu0
        %v1456 = vadd.f32 0.0, %v1455
        %v1457 = vpop.f32.mrf.mxu0
        %v1458 = vadd.f32 0.0, %v1457
        %v1459 = vpop.f32.mrf.mxu0
        %v1460 = vadd.f32 0.0, %v1459
        %1461 = vmatprep.mubr.bf16.mxu0 0
        %1462 = vmatmul.mubr.bf16.gmra.mxu0 %v1354
        %v1463 = vpop.f32.mrf.mxu0
        %v1464 = vadd.f32 0.0, %v1463
        %v1465 = vpop.f32.mrf.mxu0
        %v1466 = vadd.f32 0.0, %v1465
        %v1467 = vpop.f32.mrf.mxu0
        %v1468 = vadd.f32 0.0, %v1467
        %v1469 = vpop.f32.mrf.mxu0
        %v1470 = vadd.f32 0.0, %v1469
        %1471 = vmatprep.mubr.bf16.mxu0 0
        %1472 = vmatmul.mubr.bf16.gmra.mxu0 %v1357
        %v1473 = vpop.f32.mrf.mxu0
        %v1474 = vadd.f32 0.0, %v1473
        %v1475 = vpop.f32.mrf.mxu0
        %v1476 = vadd.f32 0.0, %v1475
        %v1477 = vpop.f32.mrf.mxu0
        %v1478 = vadd.f32 0.0, %v1477
        %v1479 = vpop.f32.mrf.mxu0
        %v1480 = vadd.f32 0.0, %v1479
        %1481 = vmatprep.mubr.bf16.mxu0 0
        %1482 = vmatmul.mubr.bf16.gmra.mxu0 %v1360
        %v1483 = vpop.f32.mrf.mxu0
        %v1484 = vadd.f32 0.0, %v1483
        %v1485 = vpop.f32.mrf.mxu0
        %v1486 = vadd.f32 0.0, %v1485
        %v1487 = vpop.f32.mrf.mxu0
        %v1488 = vadd.f32 0.0, %v1487
        %v1489 = vpop.f32.mrf.mxu0
        %v1490 = vadd.f32 0.0, %v1489
        %1491 = vmatprep.mubr.bf16.mxu0 0
        %1492 = vmatmul.mubr.bf16.gmra.mxu0 %v1363
        %v1493 = vpop.f32.mrf.mxu0
        %v1494 = vadd.f32 0.0, %v1493
        %v1495 = vpop.f32.mrf.mxu0
        %v1496 = vadd.f32 0.0, %v1495
        %v1497 = vpop.f32.mrf.mxu0
        %v1498 = vadd.f32 0.0, %v1497
        %v1499 = vpop.f32.mrf.mxu0
        %v1500 = vadd.f32 0.0, %v1499
        %1501 = vmatprep.mubr.bf16.mxu0 0
        %1502 = vmatmul.mubr.bf16.gmra.mxu0 %v1366
        %v1503 = vpop.f32.mrf.mxu0
        %v1504 = vadd.f32 0.0, %v1503
        %v1505 = vpop.f32.mrf.mxu0
        %v1506 = vadd.f32 0.0, %v1505
        %v1507 = vpop.f32.mrf.mxu0
        %v1508 = vadd.f32 0.0, %v1507
        %v1509 = vpop.f32.mrf.mxu0
        %v1510 = vadd.f32 0.0, %v1509
        %1511 = vmatprep.mubr.bf16.mxu0 0
        %1512 = vmatmul.mubr.bf16.gmra.mxu0 %v1369
        %v1513 = vpop.f32.mrf.mxu0
        %v1514 = vadd.f32 0.0, %v1513
        %v1515 = vpop.f32.mrf.mxu0
        %v1516 = vadd.f32 0.0, %v1515
        %v1517 = vpop.f32.mrf.mxu0
        %v1518 = vadd.f32 0.0, %v1517
        %v1519 = vpop.f32.mrf.mxu0
        %v1520 = vadd.f32 0.0, %v1519
        %1521 = vmatprep.mubr.bf16.mxu0 0
        %1522 = vmatmul.mubr.bf16.gmra.mxu0 %v1372
        %v1523 = vpop.f32.mrf.mxu0
        %v1524 = vadd.f32 0.0, %v1523
        %v1525 = vpop.f32.mrf.mxu0
        %v1526 = vadd.f32 0.0, %v1525
        %v1527 = vpop.f32.mrf.mxu0
        %v1528 = vadd.f32 0.0, %v1527
        %v1529 = vpop.f32.mrf.mxu0
        %v1530 = vadd.f32 0.0, %v1529
        %1531 = vmatprep.mubr.bf16.mxu0 0
        %1532 = vmatmul.mubr.bf16.gmra.mxu0 %v1375
        %v1533 = vpop.f32.mrf.mxu0
        %v1534 = vadd.f32 0.0, %v1533
        %v1535 = vpop.f32.mrf.mxu0
        %v1536 = vadd.f32 0.0, %v1535
        %v1537 = vpop.f32.mrf.mxu0
        %v1538 = vadd.f32 0.0, %v1537
        %v1539 = vpop.f32.mrf.mxu0
        %v1540 = vadd.f32 0.0, %v1539
        %1541 = vmatprep.mubr.bf16.mxu0 0
        %1542 = vmatmul.mubr.bf16.gmra.mxu0 %v1378
        %v1543 = vpop.f32.mrf.mxu0
        %v1544 = vadd.f32 0.0, %v1543
        %v1545 = vpop.f32.mrf.mxu0
        %v1546 = vadd.f32 0.0, %v1545
        %v1547 = vpop.f32.mrf.mxu0
        %v1548 = vadd.f32 0.0, %v1547
        %v1549 = vpop.f32.mrf.mxu0
        %v1550 = vadd.f32 0.0, %v1549
        %1551 = vmatprep.mubr.bf16.mxu0 0
        %1552 = vmatmul.mubr.bf16.gmra.mxu0 %v1381
        %v1553 = vpop.f32.mrf.mxu0
        %v1554 = vadd.f32 0.0, %v1553
        %v1555 = vpop.f32.mrf.mxu0
        %v1556 = vadd.f32 0.0, %v1555
        %v1557 = vpop.f32.mrf.mxu0
        %v1558 = vadd.f32 0.0, %v1557
        %v1559 = vpop.f32.mrf.mxu0
        %v1560 = vadd.f32 0.0, %v1559
        %1561 = vmatprep.mubr.bf16.mxu0 0
        %1562 = vmatmul.mubr.bf16.gmra.mxu0 %v1384
        %v1563 = vpop.f32.mrf.mxu0
        %v1564 = vadd.f32 0.0, %v1563
        %v1565 = vpop.f32.mrf.mxu0
        %v1566 = vadd.f32 0.0, %v1565
        %v1567 = vpop.f32.mrf.mxu0
        %v1568 = vadd.f32 0.0, %v1567
        %v1569 = vpop.f32.mrf.mxu0
        %v1570 = vadd.f32 0.0, %v1569
        %1571 = vmatprep.mubr.bf16.mxu0 0
        %1572 = vmatmul.mubr.bf16.gmra.mxu0 %v1387
        %v1573 = vpop.f32.mrf.mxu0
        %v1574 = vadd.f32 0.0, %v1573
        %v1575 = vpop.f32.mrf.mxu0
        %v1576 = vadd.f32 0.0, %v1575
        %v1577 = vpop.f32.mrf.mxu0
        %v1578 = vadd.f32 0.0, %v1577
        %v1579 = vpop.f32.mrf.mxu0
        %v1580 = vadd.f32 0.0, %v1579
        %1581 = vdwg.mxu0
        %v1582 = vadd.f32 %v1062, %v1424
        %v1583 = vadd.f32 %v1064, %v1426
        %v1584 = vadd.f32 %v1066, %v1428
        %v1585 = vadd.f32 %v1068, %v1430
        %v1586 = vadd.f32 %v1072, %v1434
        %v1587 = vadd.f32 %v1074, %v1436
        %v1588 = vadd.f32 %v1076, %v1438
        %v1589 = vadd.f32 %v1078, %v1440
        %v1590 = vadd.f32 %v1082, %v1444
        %v1591 = vadd.f32 %v1084, %v1446
        %v1592 = vadd.f32 %v1086, %v1448
        %v1593 = vadd.f32 %v1088, %v1450
        %v1594 = vadd.f32 %v1092, %v1454
        %v1595 = vadd.f32 %v1094, %v1456
        %v1596 = vadd.f32 %v1096, %v1458
        %v1597 = vadd.f32 %v1098, %v1460
        %v1598 = vadd.f32 %v1102, %v1464
        %v1599 = vadd.f32 %v1104, %v1466
        %v1600 = vadd.f32 %v1106, %v1468
        %v1601 = vadd.f32 %v1108, %v1470
        %v1602 = vadd.f32 %v1112, %v1474
        %v1603 = vadd.f32 %v1114, %v1476
        %v1604 = vadd.f32 %v1116, %v1478
        %v1605 = vadd.f32 %v1118, %v1480
        %v1606 = vadd.f32 %v1122, %v1484
        %v1607 = vadd.f32 %v1124, %v1486
        %v1608 = vadd.f32 %v1126, %v1488
        %v1609 = vadd.f32 %v1128, %v1490
        %v1610 = vadd.f32 %v1132, %v1494
        %v1611 = vadd.f32 %v1134, %v1496
        %v1612 = vadd.f32 %v1136, %v1498
        %v1613 = vadd.f32 %v1138, %v1500
        %v1614 = vadd.f32 %v1142, %v1504
        %v1615 = vadd.f32 %v1144, %v1506
        %v1616 = vadd.f32 %v1146, %v1508
        %v1617 = vadd.f32 %v1148, %v1510
        %v1618 = vadd.f32 %v1152, %v1514
        %v1619 = vadd.f32 %v1154, %v1516
        %v1620 = vadd.f32 %v1156, %v1518
        %v1621 = vadd.f32 %v1158, %v1520
        %v1622 = vadd.f32 %v1162, %v1524
        %v1623 = vadd.f32 %v1164, %v1526
        %v1624 = vadd.f32 %v1166, %v1528
        %v1625 = vadd.f32 %v1168, %v1530
        %v1626 = vadd.f32 %v1172, %v1534
        %v1627 = vadd.f32 %v1174, %v1536
        %v1628 = vadd.f32 %v1176, %v1538
        %v1629 = vadd.f32 %v1178, %v1540
        %v1630 = vadd.f32 %v1182, %v1544
        %v1631 = vadd.f32 %v1184, %v1546
        %v1632 = vadd.f32 %v1186, %v1548
        %v1633 = vadd.f32 %v1188, %v1550
        %v1634 = vadd.f32 %v1192, %v1554
        %v1635 = vadd.f32 %v1194, %v1556
        %v1636 = vadd.f32 %v1196, %v1558
        %v1637 = vadd.f32 %v1198, %v1560
        %v1638 = vadd.f32 %v1202, %v1564
        %v1639 = vadd.f32 %v1204, %v1566
        %v1640 = vadd.f32 %v1206, %v1568
        %v1641 = vadd.f32 %v1208, %v1570
        %v1642 = vadd.f32 %v1212, %v1574
        %v1643 = vadd.f32 %v1214, %v1576
        %v1644 = vadd.f32 %v1216, %v1578
        %v1645 = vadd.f32 %v1218, %v1580
        %v1646 = vld [vmem:[%s493 + $0x3] sm:$0xff]
        %v1647 = vld [vmem:[%s493 + $0xb] sm:$0xff]
        %v1648 = vld [vmem:[%s493 + $0x13] sm:$0xff]
        %v1649 = vld [vmem:[%s493 + $0x1b] sm:$0xff]
        %v1650 = vld [vmem:[%s493 + $0x23] sm:$0xff]
        %v1651 = vld [vmem:[%s493 + $0x2b] sm:$0xff]
        %v1652 = vld [vmem:[%s493 + $0x33] sm:$0xff]
        %v1653 = vld [vmem:[%s493 + $0x3b] sm:$0xff]
        %v1654 = vld [vmem:[%s493 + $0x43] sm:$0xff]
        %v1655 = vld [vmem:[%s493 + $0x4b] sm:$0xff]
        %v1656 = vld [vmem:[%s493 + $0x53] sm:$0xff]
        %v1657 = vld [vmem:[%s493 + $0x5b] sm:$0xff]
        %v1658 = vld [vmem:[%s493 + $0x63] sm:$0xff]
        %v1659 = vld [vmem:[%s493 + $0x6b] sm:$0xff]
        %v1660 = vld [vmem:[%s493 + $0x73] sm:$0xff]
        %v1661 = vld [vmem:[%s493 + $0x7b] sm:$0xff]
        %v1662 = vld [vmem:[%s493 + $0x83] sm:$0xff]
        %v1663 = vld [vmem:[%s493 + $0x8b] sm:$0xff]
        %v1664 = vld [vmem:[%s493 + $0x93] sm:$0xff]
        %v1665 = vld [vmem:[%s493 + $0x9b] sm:$0xff]
        %v1666 = vld [vmem:[%s493 + $0xa3] sm:$0xff]
        %v1667 = vld [vmem:[%s493 + $0xab] sm:$0xff]
        %v1668 = vld [vmem:[%s493 + $0xb3] sm:$0xff]
        %v1669 = vld [vmem:[%s493 + $0xbb] sm:$0xff]
        %v1670 = vld [vmem:[%s493 + $0xc3] sm:$0xff]
        %v1671 = vld [vmem:[%s493 + $0xcb] sm:$0xff]
        %v1672 = vld [vmem:[%s493 + $0xd3] sm:$0xff]
        %v1673 = vld [vmem:[%s493 + $0xdb] sm:$0xff]
        %v1674 = vld [vmem:[%s493 + $0xe3] sm:$0xff]
        %v1675 = vld [vmem:[%s493 + $0xeb] sm:$0xff]
        %v1676 = vld [vmem:[%s493 + $0xf3] sm:$0xff]
        %v1677 = vld [vmem:[%s493 + $0xfb] sm:$0xf]
        %v1678 = vpack.c.bf16 %v1647, %v1646
        %v1679 = vpack.c.bf16 %v1649, %v1648
        %v1680 = vpack.c.bf16 %v1651, %v1650
        %v1681 = vpack.c.bf16 %v1653, %v1652
        %v1682 = vpack.c.bf16 %v1655, %v1654
        %v1683 = vpack.c.bf16 %v1657, %v1656
        %v1684 = vpack.c.bf16 %v1659, %v1658
        %v1685 = vpack.c.bf16 %v1661, %v1660
        %v1686 = vpack.c.bf16 %v1663, %v1662
        %v1687 = vpack.c.bf16 %v1665, %v1664
        %v1688 = vpack.c.bf16 %v1667, %v1666
        %v1689 = vpack.c.bf16 %v1669, %v1668
        %v1690 = vpack.c.bf16 %v1671, %v1670
        %v1691 = vpack.c.bf16 %v1673, %v1672
        %v1692 = vpack.c.bf16 %v1675, %v1674
        %v1693 = vpack.c.bf16 %v1677, %v1676
        %s1694 = scalar_lea.vmem %s1, 288
        %v1695 = vld [vmem:[%s1694] sm:$0xff]
        %v1696 = vld [vmem:[%s1694 + $0x8] sm:$0xff]
        %v1697 = vld [vmem:[%s1694 + $0x10] sm:$0xff]
        %v1698 = vld [vmem:[%s1694 + $0x18] sm:$0xff]
        %v1699 = vld [vmem:[%s1694 + $0x20] sm:$0xff]
        %v1700 = vld [vmem:[%s1694 + $0x28] sm:$0xff]
        %v1701 = vld [vmem:[%s1694 + $0x30] sm:$0xff]
        %v1702 = vld [vmem:[%s1694 + $0x38] sm:$0xff]
        %v1703 = vld [vmem:[%s1694 + $0x40] sm:$0xff]
        %v1704 = vld [vmem:[%s1694 + $0x48] sm:$0xff]
        %v1705 = vld [vmem:[%s1694 + $0x50] sm:$0xff]
        %v1706 = vld [vmem:[%s1694 + $0x58] sm:$0xff]
        %v1719 = vunpack.c.l.b16 %v1695
        %v1720 = vunpack.c.h.b16 %v1695
        %v1721 = vunpack.c.l.b16 %v1696
        %v1722 = vunpack.c.h.b16 %v1696
        %v1723 = vunpack.c.l.b16 %v1697
        %v1724 = vunpack.c.h.b16 %v1697
        %v1725 = vunpack.c.l.b16 %v1698
        %v1726 = vunpack.c.h.b16 %v1698
        %v1727 = vunpack.c.l.b16 %v1699
        %v1728 = vunpack.c.h.b16 %v1699
        %v1729 = vunpack.c.l.b16 %v1700
        %v1730 = vunpack.c.h.b16 %v1700
        %v1731 = vunpack.c.l.b16 %v1701
        %v1732 = vunpack.c.h.b16 %v1701
        %v1733 = vunpack.c.l.b16 %v1702
        %v1734 = vunpack.c.h.b16 %v1702
        %v1735 = vunpack.c.l.b16 %v1703
        %v1736 = vunpack.c.h.b16 %v1703
        %v1737 = vunpack.c.l.b16 %v1704
        %v1738 = vunpack.c.h.b16 %v1704
        %v1739 = vunpack.c.l.b16 %v1705
        %v1740 = vunpack.c.h.b16 %v1705
        %v1741 = vunpack.c.l.b16 %v1706
        %v1742 = vunpack.c.h.b16 %v1706
        %v1743 = vpack.c.b16 %v1721, %v1719
        %v1744 = vpack.c.b16 %v1722, %v1720
        %v1745 = vpack.c.b16 %v1725, %v1723
        %v1746 = vpack.c.b16 %v1726, %v1724
        %v1747 = vpack.c.b16 %v1729, %v1727
        %v1748 = vpack.c.b16 %v1730, %v1728
        %v1749 = vpack.c.b16 %v1733, %v1731
        %v1750 = vpack.c.b16 %v1734, %v1732
        %v1751 = vpack.c.b16 %v1737, %v1735
        %v1752 = vpack.c.b16 %v1738, %v1736
        %v1753 = vpack.c.b16 %v1741, %v1739
        %v1754 = vpack.c.b16 %v1742, %v1740
        %v1768 = vsel %vm677, %v1678, 0
        %v1771 = vsel %vm677, %v1679, 0
        %v1774 = vsel %vm677, %v1680, 0
        %v1777 = vsel %vm677, %v1681, 0
        %v1780 = vsel %vm677, %v1682, 0
        %v1783 = vsel %vm677, %v1683, 0
        %v1786 = vsel %vm677, %v1684, 0
        %v1789 = vsel %vm677, %v1685, 0
        %v1792 = vsel %vm677, %v1686, 0
        %v1795 = vsel %vm677, %v1687, 0
        %v1798 = vsel %vm677, %v1688, 0
        %v1801 = vsel %vm677, %v1689, 0
        %v1804 = vsel %vm677, %v1690, 0
        %v1807 = vsel %vm677, %v1691, 0
        %v1810 = vsel %vm677, %v1692, 0
        %v1813 = vsel %vm677, %v1693, 0
        %1815 = vmatprep.subr.bf16.mxu0 0
        %1816 = vmatpush1.bf16.msra.mxu0 0
        %1817 = vmatprep.subr.bf16.mxu0 0
        %1818 = vmatpush1.bf16.msra.mxu0 0
        %1819 = vmatprep.subr.bf16.mxu0 %v1754
        %1820 = vmatpush1.bf16.msra.mxu0 %v1753
        %1821 = vmatprep.subr.bf16.mxu0 %v1752
        %1822 = vmatpush1.bf16.msra.mxu0 %v1751
        %1823 = vmatprep.subr.bf16.mxu0 %v1750
        %1824 = vmatpush1.bf16.msra.mxu0 %v1749
        %1825 = vmatprep.subr.bf16.mxu0 %v1748
        %1826 = vmatpush1.bf16.msra.mxu0 %v1747
        %1827 = vmatprep.subr.bf16.mxu0 %v1746
        %1828 = vmatpush1.bf16.msra.mxu0 %v1745
        %1829 = vmatprep.subr.bf16.mxu0 %v1744
        %1830 = vmatpush1.bf16.msra.mxu0 %v1743
        %1831 = vmatprep.subr.bf16.mxu0 0
        %1832 = vmatpush2.bf16.msra.mxu0 0
        %1833 = vmatprep.subr.bf16.mxu0 0
        %1834 = vmatpush2.bf16.msra.mxu0 0
        %1835 = vmatprep.subr.bf16.mxu0 0
        %1836 = vmatpush2.bf16.msra.mxu0 0
        %1837 = vmatprep.subr.bf16.mxu0 0
        %1838 = vmatpush2.bf16.msra.mxu0 0
        %1839 = vmatprep.subr.bf16.mxu0 0
        %1840 = vmatpush2.bf16.msra.mxu0 0
        %1841 = vmatprep.subr.bf16.mxu0 0
        %1842 = vmatpush2.bf16.msra.mxu0 0
        %1843 = vmatprep.subr.bf16.mxu0 0
        %1844 = vmatpush2.bf16.msra.mxu0 0
        %1845 = vmatprep.subr.bf16.mxu0 0
        %1846 = vmatpush2.bf16.msra.mxu0 0
        %1847 = vmatprep.mubr.bf16.mxu0 0
        %1848 = vmatmul.mubr.bf16.gmra.mxu0 %v1768
        %v1849 = vpop.f32.mrf.mxu0
        %v1850 = vadd.f32 0.0, %v1849
        %v1851 = vpop.f32.mrf.mxu0
        %v1852 = vadd.f32 0.0, %v1851
        %v1853 = vpop.f32.mrf.mxu0
        %v1854 = vadd.f32 0.0, %v1853
        %v1855 = vpop.f32.mrf.mxu0
        %v1856 = vadd.f32 0.0, %v1855
        %1857 = vmatprep.mubr.bf16.mxu0 0
        %1858 = vmatmul.mubr.bf16.gmra.mxu0 %v1771
        %v1859 = vpop.f32.mrf.mxu0
        %v1860 = vadd.f32 0.0, %v1859
        %v1861 = vpop.f32.mrf.mxu0
        %v1862 = vadd.f32 0.0, %v1861
        %v1863 = vpop.f32.mrf.mxu0
        %v1864 = vadd.f32 0.0, %v1863
        %v1865 = vpop.f32.mrf.mxu0
        %v1866 = vadd.f32 0.0, %v1865
        %1867 = vmatprep.mubr.bf16.mxu0 0
        %1868 = vmatmul.mubr.bf16.gmra.mxu0 %v1774
        %v1869 = vpop.f32.mrf.mxu0
        %v1870 = vadd.f32 0.0, %v1869
        %v1871 = vpop.f32.mrf.mxu0
        %v1872 = vadd.f32 0.0, %v1871
        %v1873 = vpop.f32.mrf.mxu0
        %v1874 = vadd.f32 0.0, %v1873
        %v1875 = vpop.f32.mrf.mxu0
        %v1876 = vadd.f32 0.0, %v1875
        %1877 = vmatprep.mubr.bf16.mxu0 0
        %1878 = vmatmul.mubr.bf16.gmra.mxu0 %v1777
        %v1879 = vpop.f32.mrf.mxu0
        %v1880 = vadd.f32 0.0, %v1879
        %v1881 = vpop.f32.mrf.mxu0
        %v1882 = vadd.f32 0.0, %v1881
        %v1883 = vpop.f32.mrf.mxu0
        %v1884 = vadd.f32 0.0, %v1883
        %v1885 = vpop.f32.mrf.mxu0
        %v1886 = vadd.f32 0.0, %v1885
        %1887 = vmatprep.mubr.bf16.mxu0 0
        %1888 = vmatmul.mubr.bf16.gmra.mxu0 %v1780
        %v1889 = vpop.f32.mrf.mxu0
        %v1890 = vadd.f32 0.0, %v1889
        %v1891 = vpop.f32.mrf.mxu0
        %v1892 = vadd.f32 0.0, %v1891
        %v1893 = vpop.f32.mrf.mxu0
        %v1894 = vadd.f32 0.0, %v1893
        %v1895 = vpop.f32.mrf.mxu0
        %v1896 = vadd.f32 0.0, %v1895
        %1897 = vmatprep.mubr.bf16.mxu0 0
        %1898 = vmatmul.mubr.bf16.gmra.mxu0 %v1783
        %v1899 = vpop.f32.mrf.mxu0
        %v1900 = vadd.f32 0.0, %v1899
        %v1901 = vpop.f32.mrf.mxu0
        %v1902 = vadd.f32 0.0, %v1901
        %v1903 = vpop.f32.mrf.mxu0
        %v1904 = vadd.f32 0.0, %v1903
        %v1905 = vpop.f32.mrf.mxu0
        %v1906 = vadd.f32 0.0, %v1905
        %1907 = vmatprep.mubr.bf16.mxu0 0
        %1908 = vmatmul.mubr.bf16.gmra.mxu0 %v1786
        %v1909 = vpop.f32.mrf.mxu0
        %v1910 = vadd.f32 0.0, %v1909
        %v1911 = vpop.f32.mrf.mxu0
        %v1912 = vadd.f32 0.0, %v1911
        %v1913 = vpop.f32.mrf.mxu0
        %v1914 = vadd.f32 0.0, %v1913
        %v1915 = vpop.f32.mrf.mxu0
        %v1916 = vadd.f32 0.0, %v1915
        %1917 = vmatprep.mubr.bf16.mxu0 0
        %1918 = vmatmul.mubr.bf16.gmra.mxu0 %v1789
        %v1919 = vpop.f32.mrf.mxu0
        %v1920 = vadd.f32 0.0, %v1919
        %v1921 = vpop.f32.mrf.mxu0
        %v1922 = vadd.f32 0.0, %v1921
        %v1923 = vpop.f32.mrf.mxu0
        %v1924 = vadd.f32 0.0, %v1923
        %v1925 = vpop.f32.mrf.mxu0
        %v1926 = vadd.f32 0.0, %v1925
        %1927 = vmatprep.mubr.bf16.mxu0 0
        %1928 = vmatmul.mubr.bf16.gmra.mxu0 %v1792
        %v1929 = vpop.f32.mrf.mxu0
        %v1930 = vadd.f32 0.0, %v1929
        %v1931 = vpop.f32.mrf.mxu0
        %v1932 = vadd.f32 0.0, %v1931
        %v1933 = vpop.f32.mrf.mxu0
        %v1934 = vadd.f32 0.0, %v1933
        %v1935 = vpop.f32.mrf.mxu0
        %v1936 = vadd.f32 0.0, %v1935
        %1937 = vmatprep.mubr.bf16.mxu0 0
        %1938 = vmatmul.mubr.bf16.gmra.mxu0 %v1795
        %v1939 = vpop.f32.mrf.mxu0
        %v1940 = vadd.f32 0.0, %v1939
        %v1941 = vpop.f32.mrf.mxu0
        %v1942 = vadd.f32 0.0, %v1941
        %v1943 = vpop.f32.mrf.mxu0
        %v1944 = vadd.f32 0.0, %v1943
        %v1945 = vpop.f32.mrf.mxu0
        %v1946 = vadd.f32 0.0, %v1945
        %1947 = vmatprep.mubr.bf16.mxu0 0
        %1948 = vmatmul.mubr.bf16.gmra.mxu0 %v1798
        %v1949 = vpop.f32.mrf.mxu0
        %v1950 = vadd.f32 0.0, %v1949
        %v1951 = vpop.f32.mrf.mxu0
        %v1952 = vadd.f32 0.0, %v1951
        %v1953 = vpop.f32.mrf.mxu0
        %v1954 = vadd.f32 0.0, %v1953
        %v1955 = vpop.f32.mrf.mxu0
        %v1956 = vadd.f32 0.0, %v1955
        %1957 = vmatprep.mubr.bf16.mxu0 0
        %1958 = vmatmul.mubr.bf16.gmra.mxu0 %v1801
        %v1959 = vpop.f32.mrf.mxu0
        %v1960 = vadd.f32 0.0, %v1959
        %v1961 = vpop.f32.mrf.mxu0
        %v1962 = vadd.f32 0.0, %v1961
        %v1963 = vpop.f32.mrf.mxu0
        %v1964 = vadd.f32 0.0, %v1963
        %v1965 = vpop.f32.mrf.mxu0
        %v1966 = vadd.f32 0.0, %v1965
        %1967 = vmatprep.mubr.bf16.mxu0 0
        %1968 = vmatmul.mubr.bf16.gmra.mxu0 %v1804
        %v1969 = vpop.f32.mrf.mxu0
        %v1970 = vadd.f32 0.0, %v1969
        %v1971 = vpop.f32.mrf.mxu0
        %v1972 = vadd.f32 0.0, %v1971
        %v1973 = vpop.f32.mrf.mxu0
        %v1974 = vadd.f32 0.0, %v1973
        %v1975 = vpop.f32.mrf.mxu0
        %v1976 = vadd.f32 0.0, %v1975
        %1977 = vmatprep.mubr.bf16.mxu0 0
        %1978 = vmatmul.mubr.bf16.gmra.mxu0 %v1807
        %v1979 = vpop.f32.mrf.mxu0
        %v1980 = vadd.f32 0.0, %v1979
        %v1981 = vpop.f32.mrf.mxu0
        %v1982 = vadd.f32 0.0, %v1981
        %v1983 = vpop.f32.mrf.mxu0
        %v1984 = vadd.f32 0.0, %v1983
        %v1985 = vpop.f32.mrf.mxu0
        %v1986 = vadd.f32 0.0, %v1985
        %1987 = vmatprep.mubr.bf16.mxu0 0
        %1988 = vmatmul.mubr.bf16.gmra.mxu0 %v1810
        %v1989 = vpop.f32.mrf.mxu0
        %v1990 = vadd.f32 0.0, %v1989
        %v1991 = vpop.f32.mrf.mxu0
        %v1992 = vadd.f32 0.0, %v1991
        %v1993 = vpop.f32.mrf.mxu0
        %v1994 = vadd.f32 0.0, %v1993
        %v1995 = vpop.f32.mrf.mxu0
        %v1996 = vadd.f32 0.0, %v1995
        %1997 = vmatprep.mubr.bf16.mxu0 0
        %1998 = vmatmul.mubr.bf16.gmra.mxu0 %v1813
        %v1999 = vpop.f32.mrf.mxu0
        %v2000 = vadd.f32 0.0, %v1999
        %v2001 = vpop.f32.mrf.mxu0
        %v2002 = vadd.f32 0.0, %v2001
        %v2003 = vpop.f32.mrf.mxu0
        %v2004 = vadd.f32 0.0, %v2003
        %v2005 = vpop.f32.mrf.mxu0
        %v2006 = vadd.f32 0.0, %v2005
        %2007 = vdwg.mxu0
        %v2008 = vadd.f32 %v1582, %v1850
        %v2009 = vadd.f32 %v1583, %v1852
        %v2010 = vadd.f32 %v1584, %v1854
        %v2011 = vadd.f32 %v1585, %v1856
        %v2012 = vadd.f32 %v1586, %v1860
        %v2013 = vadd.f32 %v1587, %v1862
        %v2014 = vadd.f32 %v1588, %v1864
        %v2015 = vadd.f32 %v1589, %v1866
        %v2016 = vadd.f32 %v1590, %v1870
        %v2017 = vadd.f32 %v1591, %v1872
        %v2018 = vadd.f32 %v1592, %v1874
        %v2019 = vadd.f32 %v1593, %v1876
        %v2020 = vadd.f32 %v1594, %v1880
        %v2021 = vadd.f32 %v1595, %v1882
        %v2022 = vadd.f32 %v1596, %v1884
        %v2023 = vadd.f32 %v1597, %v1886
        %v2024 = vadd.f32 %v1598, %v1890
        %v2025 = vadd.f32 %v1599, %v1892
        %v2026 = vadd.f32 %v1600, %v1894
        %v2027 = vadd.f32 %v1601, %v1896
        %v2028 = vadd.f32 %v1602, %v1900
        %v2029 = vadd.f32 %v1603, %v1902
        %v2030 = vadd.f32 %v1604, %v1904
        %v2031 = vadd.f32 %v1605, %v1906
        %v2032 = vadd.f32 %v1606, %v1910
        %v2033 = vadd.f32 %v1607, %v1912
        %v2034 = vadd.f32 %v1608, %v1914
        %v2035 = vadd.f32 %v1609, %v1916
        %v2036 = vadd.f32 %v1610, %v1920
        %v2037 = vadd.f32 %v1611, %v1922
        %v2038 = vadd.f32 %v1612, %v1924
        %v2039 = vadd.f32 %v1613, %v1926
        %v2040 = vadd.f32 %v1614, %v1930
        %v2041 = vadd.f32 %v1615, %v1932
        %v2042 = vadd.f32 %v1616, %v1934
        %v2043 = vadd.f32 %v1617, %v1936
        %v2044 = vadd.f32 %v1618, %v1940
        %v2045 = vadd.f32 %v1619, %v1942
        %v2046 = vadd.f32 %v1620, %v1944
        %v2047 = vadd.f32 %v1621, %v1946
        %v2048 = vadd.f32 %v1622, %v1950
        %v2049 = vadd.f32 %v1623, %v1952
        %v2050 = vadd.f32 %v1624, %v1954
        %v2051 = vadd.f32 %v1625, %v1956
        %v2052 = vadd.f32 %v1626, %v1960
        %v2053 = vadd.f32 %v1627, %v1962
        %v2054 = vadd.f32 %v1628, %v1964
        %v2055 = vadd.f32 %v1629, %v1966
        %v2056 = vadd.f32 %v1630, %v1970
        %v2057 = vadd.f32 %v1631, %v1972
        %v2058 = vadd.f32 %v1632, %v1974
        %v2059 = vadd.f32 %v1633, %v1976
        %v2060 = vadd.f32 %v1634, %v1980
        %v2061 = vadd.f32 %v1635, %v1982
        %v2062 = vadd.f32 %v1636, %v1984
        %v2063 = vadd.f32 %v1637, %v1986
        %v2064 = vadd.f32 %v1638, %v1990
        %v2065 = vadd.f32 %v1639, %v1992
        %v2066 = vadd.f32 %v1640, %v1994
        %v2067 = vadd.f32 %v1641, %v1996
        %v2068 = vadd.f32 %v1642, %v2000
        %v2069 = vadd.f32 %v1643, %v2002
        %v2070 = vadd.f32 %v1644, %v2004
        %v2071 = vadd.f32 %v1645, %v2006
        %v2072 = vld [vmem:[%s493 + $0x4] sm:$0xff]
        %v2073 = vld [vmem:[%s493 + $0xc] sm:$0xff]
        %v2074 = vld [vmem:[%s493 + $0x14] sm:$0xff]
        %v2075 = vld [vmem:[%s493 + $0x1c] sm:$0xff]
        %v2076 = vld [vmem:[%s493 + $0x24] sm:$0xff]
        %v2077 = vld [vmem:[%s493 + $0x2c] sm:$0xff]
        %v2078 = vld [vmem:[%s493 + $0x34] sm:$0xff]
        %v2079 = vld [vmem:[%s493 + $0x3c] sm:$0xff]
        %v2080 = vld [vmem:[%s493 + $0x44] sm:$0xff]
        %v2081 = vld [vmem:[%s493 + $0x4c] sm:$0xff]
        %v2082 = vld [vmem:[%s493 + $0x54] sm:$0xff]
        %v2083 = vld [vmem:[%s493 + $0x5c] sm:$0xff]
        %v2084 = vld [vmem:[%s493 + $0x64] sm:$0xff]
        %v2085 = vld [vmem:[%s493 + $0x6c] sm:$0xff]
        %v2086 = vld [vmem:[%s493 + $0x74] sm:$0xff]
        %v2087 = vld [vmem:[%s493 + $0x7c] sm:$0xff]
        %v2088 = vld [vmem:[%s493 + $0x84] sm:$0xff]
        %v2089 = vld [vmem:[%s493 + $0x8c] sm:$0xff]
        %v2090 = vld [vmem:[%s493 + $0x94] sm:$0xff]
        %v2091 = vld [vmem:[%s493 + $0x9c] sm:$0xff]
        %v2092 = vld [vmem:[%s493 + $0xa4] sm:$0xff]
        %v2093 = vld [vmem:[%s493 + $0xac] sm:$0xff]
        %v2094 = vld [vmem:[%s493 + $0xb4] sm:$0xff]
        %v2095 = vld [vmem:[%s493 + $0xbc] sm:$0xff]
        %v2096 = vld [vmem:[%s493 + $0xc4] sm:$0xff]
        %v2097 = vld [vmem:[%s493 + $0xcc] sm:$0xff]
        %v2098 = vld [vmem:[%s493 + $0xd4] sm:$0xff]
        %v2099 = vld [vmem:[%s493 + $0xdc] sm:$0xff]
        %v2100 = vld [vmem:[%s493 + $0xe4] sm:$0xff]
        %v2101 = vld [vmem:[%s493 + $0xec] sm:$0xff]
        %v2102 = vld [vmem:[%s493 + $0xf4] sm:$0xff]
        %v2103 = vld [vmem:[%s493 + $0xfc] sm:$0xf]
        %v2104 = vpack.c.bf16 %v2073, %v2072
        %v2105 = vpack.c.bf16 %v2075, %v2074
        %v2106 = vpack.c.bf16 %v2077, %v2076
        %v2107 = vpack.c.bf16 %v2079, %v2078
        %v2108 = vpack.c.bf16 %v2081, %v2080
        %v2109 = vpack.c.bf16 %v2083, %v2082
        %v2110 = vpack.c.bf16 %v2085, %v2084
        %v2111 = vpack.c.bf16 %v2087, %v2086
        %v2112 = vpack.c.bf16 %v2089, %v2088
        %v2113 = vpack.c.bf16 %v2091, %v2090
        %v2114 = vpack.c.bf16 %v2093, %v2092
        %v2115 = vpack.c.bf16 %v2095, %v2094
        %v2116 = vpack.c.bf16 %v2097, %v2096
        %v2117 = vpack.c.bf16 %v2099, %v2098
        %v2118 = vpack.c.bf16 %v2101, %v2100
        %v2119 = vpack.c.bf16 %v2103, %v2102
        %s2120 = scalar_lea.vmem %s1, 384
        %v2121 = vld [vmem:[%s2120] sm:$0xff]
        %v2122 = vld [vmem:[%s2120 + $0x8] sm:$0xff]
        %v2123 = vld [vmem:[%s2120 + $0x10] sm:$0xff]
        %v2124 = vld [vmem:[%s2120 + $0x18] sm:$0xff]
        %v2125 = vld [vmem:[%s2120 + $0x20] sm:$0xff]
        %v2126 = vld [vmem:[%s2120 + $0x28] sm:$0xff]
        %v2127 = vld [vmem:[%s2120 + $0x30] sm:$0xff]
        %v2128 = vld [vmem:[%s2120 + $0x38] sm:$0xff]
        %v2129 = vld [vmem:[%s2120 + $0x40] sm:$0xff]
        %v2130 = vld [vmem:[%s2120 + $0x48] sm:$0xff]
        %v2131 = vld [vmem:[%s2120 + $0x50] sm:$0xff]
        %v2132 = vld [vmem:[%s2120 + $0x58] sm:$0xff]
        %v2145 = vunpack.c.l.b16 %v2121
        %v2146 = vunpack.c.h.b16 %v2121
        %v2147 = vunpack.c.l.b16 %v2122
        %v2148 = vunpack.c.h.b16 %v2122
        %v2149 = vunpack.c.l.b16 %v2123
        %v2150 = vunpack.c.h.b16 %v2123
        %v2151 = vunpack.c.l.b16 %v2124
        %v2152 = vunpack.c.h.b16 %v2124
        %v2153 = vunpack.c.l.b16 %v2125
        %v2154 = vunpack.c.h.b16 %v2125
        %v2155 = vunpack.c.l.b16 %v2126
        %v2156 = vunpack.c.h.b16 %v2126
        %v2157 = vunpack.c.l.b16 %v2127
        %v2158 = vunpack.c.h.b16 %v2127
        %v2159 = vunpack.c.l.b16 %v2128
        %v2160 = vunpack.c.h.b16 %v2128
        %v2161 = vunpack.c.l.b16 %v2129
        %v2162 = vunpack.c.h.b16 %v2129
        %v2163 = vunpack.c.l.b16 %v2130
        %v2164 = vunpack.c.h.b16 %v2130
        %v2165 = vunpack.c.l.b16 %v2131
        %v2166 = vunpack.c.h.b16 %v2131
        %v2167 = vunpack.c.l.b16 %v2132
        %v2168 = vunpack.c.h.b16 %v2132
        %v2169 = vpack.c.b16 %v2147, %v2145
        %v2170 = vpack.c.b16 %v2148, %v2146
        %v2171 = vpack.c.b16 %v2151, %v2149
        %v2172 = vpack.c.b16 %v2152, %v2150
        %v2173 = vpack.c.b16 %v2155, %v2153
        %v2174 = vpack.c.b16 %v2156, %v2154
        %v2175 = vpack.c.b16 %v2159, %v2157
        %v2176 = vpack.c.b16 %v2160, %v2158
        %v2177 = vpack.c.b16 %v2163, %v2161
        %v2178 = vpack.c.b16 %v2164, %v2162
        %v2179 = vpack.c.b16 %v2167, %v2165
        %v2180 = vpack.c.b16 %v2168, %v2166
        %v2194 = vsel %vm677, %v2104, 0
        %v2197 = vsel %vm677, %v2105, 0
        %v2200 = vsel %vm677, %v2106, 0
        %v2203 = vsel %vm677, %v2107, 0
        %v2206 = vsel %vm677, %v2108, 0
        %v2209 = vsel %vm677, %v2109, 0
        %v2212 = vsel %vm677, %v2110, 0
        %v2215 = vsel %vm677, %v2111, 0
        %v2218 = vsel %vm677, %v2112, 0
        %v2221 = vsel %vm677, %v2113, 0
        %v2224 = vsel %vm677, %v2114, 0
        %v2227 = vsel %vm677, %v2115, 0
        %v2230 = vsel %vm677, %v2116, 0
        %v2233 = vsel %vm677, %v2117, 0
        %v2236 = vsel %vm677, %v2118, 0
        %v2239 = vsel %vm677, %v2119, 0
        %2241 = vmatprep.subr.bf16.mxu0 0
        %2242 = vmatpush1.bf16.msra.mxu0 0
        %2243 = vmatprep.subr.bf16.mxu0 0
        %2244 = vmatpush1.bf16.msra.mxu0 0
        %2245 = vmatprep.subr.bf16.mxu0 %v2180
        %2246 = vmatpush1.bf16.msra.mxu0 %v2179
        %2247 = vmatprep.subr.bf16.mxu0 %v2178
        %2248 = vmatpush1.bf16.msra.mxu0 %v2177
        %2249 = vmatprep.subr.bf16.mxu0 %v2176
        %2250 = vmatpush1.bf16.msra.mxu0 %v2175
        %2251 = vmatprep.subr.bf16.mxu0 %v2174
        %2252 = vmatpush1.bf16.msra.mxu0 %v2173
        %2253 = vmatprep.subr.bf16.mxu0 %v2172
        %2254 = vmatpush1.bf16.msra.mxu0 %v2171
        %2255 = vmatprep.subr.bf16.mxu0 %v2170
        %2256 = vmatpush1.bf16.msra.mxu0 %v2169
        %2257 = vmatprep.subr.bf16.mxu0 0
        %2258 = vmatpush2.bf16.msra.mxu0 0
        %2259 = vmatprep.subr.bf16.mxu0 0
        %2260 = vmatpush2.bf16.msra.mxu0 0
        %2261 = vmatprep.subr.bf16.mxu0 0
        %2262 = vmatpush2.bf16.msra.mxu0 0
        %2263 = vmatprep.subr.bf16.mxu0 0
        %2264 = vmatpush2.bf16.msra.mxu0 0
        %2265 = vmatprep.subr.bf16.mxu0 0
        %2266 = vmatpush2.bf16.msra.mxu0 0
        %2267 = vmatprep.subr.bf16.mxu0 0
        %2268 = vmatpush2.bf16.msra.mxu0 0
        %2269 = vmatprep.subr.bf16.mxu0 0
        %2270 = vmatpush2.bf16.msra.mxu0 0
        %2271 = vmatprep.subr.bf16.mxu0 0
        %2272 = vmatpush2.bf16.msra.mxu0 0
        %2273 = vmatprep.mubr.bf16.mxu0 0
        %2274 = vmatmul.mubr.bf16.gmra.mxu0 %v2194
        %v2275 = vpop.f32.mrf.mxu0
        %v2276 = vadd.f32 0.0, %v2275
        %v2277 = vpop.f32.mrf.mxu0
        %v2278 = vadd.f32 0.0, %v2277
        %v2279 = vpop.f32.mrf.mxu0
        %v2280 = vadd.f32 0.0, %v2279
        %v2281 = vpop.f32.mrf.mxu0
        %v2282 = vadd.f32 0.0, %v2281
        %2283 = vmatprep.mubr.bf16.mxu0 0
        %2284 = vmatmul.mubr.bf16.gmra.mxu0 %v2197
        %v2285 = vpop.f32.mrf.mxu0
        %v2286 = vadd.f32 0.0, %v2285
        %v2287 = vpop.f32.mrf.mxu0
        %v2288 = vadd.f32 0.0, %v2287
        %v2289 = vpop.f32.mrf.mxu0
        %v2290 = vadd.f32 0.0, %v2289
        %v2291 = vpop.f32.mrf.mxu0
        %v2292 = vadd.f32 0.0, %v2291
        %2293 = vmatprep.mubr.bf16.mxu0 0
        %2294 = vmatmul.mubr.bf16.gmra.mxu0 %v2200
        %v2295 = vpop.f32.mrf.mxu0
        %v2296 = vadd.f32 0.0, %v2295
        %v2297 = vpop.f32.mrf.mxu0
        %v2298 = vadd.f32 0.0, %v2297
        %v2299 = vpop.f32.mrf.mxu0
        %v2300 = vadd.f32 0.0, %v2299
        %v2301 = vpop.f32.mrf.mxu0
        %v2302 = vadd.f32 0.0, %v2301
        %2303 = vmatprep.mubr.bf16.mxu0 0
        %2304 = vmatmul.mubr.bf16.gmra.mxu0 %v2203
        %v2305 = vpop.f32.mrf.mxu0
        %v2306 = vadd.f32 0.0, %v2305
        %v2307 = vpop.f32.mrf.mxu0
        %v2308 = vadd.f32 0.0, %v2307
        %v2309 = vpop.f32.mrf.mxu0
        %v2310 = vadd.f32 0.0, %v2309
        %v2311 = vpop.f32.mrf.mxu0
        %v2312 = vadd.f32 0.0, %v2311
        %2313 = vmatprep.mubr.bf16.mxu0 0
        %2314 = vmatmul.mubr.bf16.gmra.mxu0 %v2206
        %v2315 = vpop.f32.mrf.mxu0
        %v2316 = vadd.f32 0.0, %v2315
        %v2317 = vpop.f32.mrf.mxu0
        %v2318 = vadd.f32 0.0, %v2317
        %v2319 = vpop.f32.mrf.mxu0
        %v2320 = vadd.f32 0.0, %v2319
        %v2321 = vpop.f32.mrf.mxu0
        %v2322 = vadd.f32 0.0, %v2321
        %2323 = vmatprep.mubr.bf16.mxu0 0
        %2324 = vmatmul.mubr.bf16.gmra.mxu0 %v2209
        %v2325 = vpop.f32.mrf.mxu0
        %v2326 = vadd.f32 0.0, %v2325
        %v2327 = vpop.f32.mrf.mxu0
        %v2328 = vadd.f32 0.0, %v2327
        %v2329 = vpop.f32.mrf.mxu0
        %v2330 = vadd.f32 0.0, %v2329
        %v2331 = vpop.f32.mrf.mxu0
        %v2332 = vadd.f32 0.0, %v2331
        %2333 = vmatprep.mubr.bf16.mxu0 0
        %2334 = vmatmul.mubr.bf16.gmra.mxu0 %v2212
        %v2335 = vpop.f32.mrf.mxu0
        %v2336 = vadd.f32 0.0, %v2335
        %v2337 = vpop.f32.mrf.mxu0
        %v2338 = vadd.f32 0.0, %v2337
        %v2339 = vpop.f32.mrf.mxu0
        %v2340 = vadd.f32 0.0, %v2339
        %v2341 = vpop.f32.mrf.mxu0
        %v2342 = vadd.f32 0.0, %v2341
        %2343 = vmatprep.mubr.bf16.mxu0 0
        %2344 = vmatmul.mubr.bf16.gmra.mxu0 %v2215
        %v2345 = vpop.f32.mrf.mxu0
        %v2346 = vadd.f32 0.0, %v2345
        %v2347 = vpop.f32.mrf.mxu0
        %v2348 = vadd.f32 0.0, %v2347
        %v2349 = vpop.f32.mrf.mxu0
        %v2350 = vadd.f32 0.0, %v2349
        %v2351 = vpop.f32.mrf.mxu0
        %v2352 = vadd.f32 0.0, %v2351
        %2353 = vmatprep.mubr.bf16.mxu0 0
        %2354 = vmatmul.mubr.bf16.gmra.mxu0 %v2218
        %v2355 = vpop.f32.mrf.mxu0
        %v2356 = vadd.f32 0.0, %v2355
        %v2357 = vpop.f32.mrf.mxu0
        %v2358 = vadd.f32 0.0, %v2357
        %v2359 = vpop.f32.mrf.mxu0
        %v2360 = vadd.f32 0.0, %v2359
        %v2361 = vpop.f32.mrf.mxu0
        %v2362 = vadd.f32 0.0, %v2361
        %2363 = vmatprep.mubr.bf16.mxu0 0
        %2364 = vmatmul.mubr.bf16.gmra.mxu0 %v2221
        %v2365 = vpop.f32.mrf.mxu0
        %v2366 = vadd.f32 0.0, %v2365
        %v2367 = vpop.f32.mrf.mxu0
        %v2368 = vadd.f32 0.0, %v2367
        %v2369 = vpop.f32.mrf.mxu0
        %v2370 = vadd.f32 0.0, %v2369
        %v2371 = vpop.f32.mrf.mxu0
        %v2372 = vadd.f32 0.0, %v2371
        %2373 = vmatprep.mubr.bf16.mxu0 0
        %2374 = vmatmul.mubr.bf16.gmra.mxu0 %v2224
        %v2375 = vpop.f32.mrf.mxu0
        %v2376 = vadd.f32 0.0, %v2375
        %v2377 = vpop.f32.mrf.mxu0
        %v2378 = vadd.f32 0.0, %v2377
        %v2379 = vpop.f32.mrf.mxu0
        %v2380 = vadd.f32 0.0, %v2379
        %v2381 = vpop.f32.mrf.mxu0
        %v2382 = vadd.f32 0.0, %v2381
        %2383 = vmatprep.mubr.bf16.mxu0 0
        %2384 = vmatmul.mubr.bf16.gmra.mxu0 %v2227
        %v2385 = vpop.f32.mrf.mxu0
        %v2386 = vadd.f32 0.0, %v2385
        %v2387 = vpop.f32.mrf.mxu0
        %v2388 = vadd.f32 0.0, %v2387
        %v2389 = vpop.f32.mrf.mxu0
        %v2390 = vadd.f32 0.0, %v2389
        %v2391 = vpop.f32.mrf.mxu0
        %v2392 = vadd.f32 0.0, %v2391
        %2393 = vmatprep.mubr.bf16.mxu0 0
        %2394 = vmatmul.mubr.bf16.gmra.mxu0 %v2230
        %v2395 = vpop.f32.mrf.mxu0
        %v2396 = vadd.f32 0.0, %v2395
        %v2397 = vpop.f32.mrf.mxu0
        %v2398 = vadd.f32 0.0, %v2397
        %v2399 = vpop.f32.mrf.mxu0
        %v2400 = vadd.f32 0.0, %v2399
        %v2401 = vpop.f32.mrf.mxu0
        %v2402 = vadd.f32 0.0, %v2401
        %2403 = vmatprep.mubr.bf16.mxu0 0
        %2404 = vmatmul.mubr.bf16.gmra.mxu0 %v2233
        %v2405 = vpop.f32.mrf.mxu0
        %v2406 = vadd.f32 0.0, %v2405
        %v2407 = vpop.f32.mrf.mxu0
        %v2408 = vadd.f32 0.0, %v2407
        %v2409 = vpop.f32.mrf.mxu0
        %v2410 = vadd.f32 0.0, %v2409
        %v2411 = vpop.f32.mrf.mxu0
        %v2412 = vadd.f32 0.0, %v2411
        %2413 = vmatprep.mubr.bf16.mxu0 0
        %2414 = vmatmul.mubr.bf16.gmra.mxu0 %v2236
        %v2415 = vpop.f32.mrf.mxu0
        %v2416 = vadd.f32 0.0, %v2415
        %v2417 = vpop.f32.mrf.mxu0
        %v2418 = vadd.f32 0.0, %v2417
        %v2419 = vpop.f32.mrf.mxu0
        %v2420 = vadd.f32 0.0, %v2419
        %v2421 = vpop.f32.mrf.mxu0
        %v2422 = vadd.f32 0.0, %v2421
        %2423 = vmatprep.mubr.bf16.mxu0 0
        %2424 = vmatmul.mubr.bf16.gmra.mxu0 %v2239
        %v2425 = vpop.f32.mrf.mxu0
        %v2426 = vadd.f32 0.0, %v2425
        %v2427 = vpop.f32.mrf.mxu0
        %v2428 = vadd.f32 0.0, %v2427
        %v2429 = vpop.f32.mrf.mxu0
        %v2430 = vadd.f32 0.0, %v2429
        %v2431 = vpop.f32.mrf.mxu0
        %v2432 = vadd.f32 0.0, %v2431
        %2433 = vdwg.mxu0
        %v2434 = vadd.f32 %v2008, %v2276
        %v2435 = vadd.f32 %v2009, %v2278
        %v2436 = vadd.f32 %v2010, %v2280
        %v2437 = vadd.f32 %v2011, %v2282
        %v2438 = vadd.f32 %v2012, %v2286
        %v2439 = vadd.f32 %v2013, %v2288
        %v2440 = vadd.f32 %v2014, %v2290
        %v2441 = vadd.f32 %v2015, %v2292
        %v2442 = vadd.f32 %v2016, %v2296
        %v2443 = vadd.f32 %v2017, %v2298
        %v2444 = vadd.f32 %v2018, %v2300
        %v2445 = vadd.f32 %v2019, %v2302
        %v2446 = vadd.f32 %v2020, %v2306
        %v2447 = vadd.f32 %v2021, %v2308
        %v2448 = vadd.f32 %v2022, %v2310
        %v2449 = vadd.f32 %v2023, %v2312
        %v2450 = vadd.f32 %v2024, %v2316
        %v2451 = vadd.f32 %v2025, %v2318
        %v2452 = vadd.f32 %v2026, %v2320
        %v2453 = vadd.f32 %v2027, %v2322
        %v2454 = vadd.f32 %v2028, %v2326
        %v2455 = vadd.f32 %v2029, %v2328
        %v2456 = vadd.f32 %v2030, %v2330
        %v2457 = vadd.f32 %v2031, %v2332
        %v2458 = vadd.f32 %v2032, %v2336
        %v2459 = vadd.f32 %v2033, %v2338
        %v2460 = vadd.f32 %v2034, %v2340
        %v2461 = vadd.f32 %v2035, %v2342
        %v2462 = vadd.f32 %v2036, %v2346
        %v2463 = vadd.f32 %v2037, %v2348
        %v2464 = vadd.f32 %v2038, %v2350
        %v2465 = vadd.f32 %v2039, %v2352
        %v2466 = vadd.f32 %v2040, %v2356
        %v2467 = vadd.f32 %v2041, %v2358
        %v2468 = vadd.f32 %v2042, %v2360
        %v2469 = vadd.f32 %v2043, %v2362
        %v2470 = vadd.f32 %v2044, %v2366
        %v2471 = vadd.f32 %v2045, %v2368
        %v2472 = vadd.f32 %v2046, %v2370
        %v2473 = vadd.f32 %v2047, %v2372
        %v2474 = vadd.f32 %v2048, %v2376
        %v2475 = vadd.f32 %v2049, %v2378
        %v2476 = vadd.f32 %v2050, %v2380
        %v2477 = vadd.f32 %v2051, %v2382
        %v2478 = vadd.f32 %v2052, %v2386
        %v2479 = vadd.f32 %v2053, %v2388
        %v2480 = vadd.f32 %v2054, %v2390
        %v2481 = vadd.f32 %v2055, %v2392
        %v2482 = vadd.f32 %v2056, %v2396
        %v2483 = vadd.f32 %v2057, %v2398
        %v2484 = vadd.f32 %v2058, %v2400
        %v2485 = vadd.f32 %v2059, %v2402
        %v2486 = vadd.f32 %v2060, %v2406
        %v2487 = vadd.f32 %v2061, %v2408
        %v2488 = vadd.f32 %v2062, %v2410
        %v2489 = vadd.f32 %v2063, %v2412
        %v2490 = vadd.f32 %v2064, %v2416
        %v2491 = vadd.f32 %v2065, %v2418
        %v2492 = vadd.f32 %v2066, %v2420
        %v2493 = vadd.f32 %v2067, %v2422
        %v2494 = vadd.f32 %v2068, %v2426
        %v2495 = vadd.f32 %v2069, %v2428
        %v2496 = vadd.f32 %v2070, %v2430
        %v2497 = vadd.f32 %v2071, %v2432
        %v2498 = vld [vmem:[%s2] sm:$0x3]
        %v2500 = vlaneseq
        %v2501 = vshrl.u32 %v2500, 7
        %v2502 = vsub.s32 0, %v2501
        %v2503 = vrot.slane %v2498, %v2502
        %v2504 = vlaneseq
        %v2505 = vshrl.u32 %v2504, 7
        %v2506 = vsub.s32 1, %v2505
        %v2507 = vrot.slane %v2498, %v2506
        %v2510 = vadd.f32 %v2434, %v2503
        %v2511 = vadd.f32 %v2435, %v2507
        %v2512 = vadd.f32 %v2436, %v2503
        %v2513 = vadd.f32 %v2437, %v2507
        %v2514 = vadd.f32 %v2438, %v2503
        %v2515 = vadd.f32 %v2439, %v2507
        %v2516 = vadd.f32 %v2440, %v2503
        %v2517 = vadd.f32 %v2441, %v2507
        %v2518 = vadd.f32 %v2442, %v2503
        %v2519 = vadd.f32 %v2443, %v2507
        %v2520 = vadd.f32 %v2444, %v2503
        %v2521 = vadd.f32 %v2445, %v2507
        %v2522 = vadd.f32 %v2446, %v2503
        %v2523 = vadd.f32 %v2447, %v2507
        %v2524 = vadd.f32 %v2448, %v2503
        %v2525 = vadd.f32 %v2449, %v2507
        %v2526 = vadd.f32 %v2450, %v2503
        %v2527 = vadd.f32 %v2451, %v2507
        %v2528 = vadd.f32 %v2452, %v2503
        %v2529 = vadd.f32 %v2453, %v2507
        %v2530 = vadd.f32 %v2454, %v2503
        %v2531 = vadd.f32 %v2455, %v2507
        %v2532 = vadd.f32 %v2456, %v2503
        %v2533 = vadd.f32 %v2457, %v2507
        %v2534 = vadd.f32 %v2458, %v2503
        %v2535 = vadd.f32 %v2459, %v2507
        %v2536 = vadd.f32 %v2460, %v2503
        %v2537 = vadd.f32 %v2461, %v2507
        %v2538 = vadd.f32 %v2462, %v2503
        %v2539 = vadd.f32 %v2463, %v2507
        %v2540 = vadd.f32 %v2464, %v2503
        %v2541 = vadd.f32 %v2465, %v2507
        %v2542 = vadd.f32 %v2466, %v2503
        %v2543 = vadd.f32 %v2467, %v2507
        %v2544 = vadd.f32 %v2468, %v2503
        %v2545 = vadd.f32 %v2469, %v2507
        %v2546 = vadd.f32 %v2470, %v2503
        %v2547 = vadd.f32 %v2471, %v2507
        %v2548 = vadd.f32 %v2472, %v2503
        %v2549 = vadd.f32 %v2473, %v2507
        %v2550 = vadd.f32 %v2474, %v2503
        %v2551 = vadd.f32 %v2475, %v2507
        %v2552 = vadd.f32 %v2476, %v2503
        %v2553 = vadd.f32 %v2477, %v2507
        %v2554 = vadd.f32 %v2478, %v2503
        %v2555 = vadd.f32 %v2479, %v2507
        %v2556 = vadd.f32 %v2480, %v2503
        %v2557 = vadd.f32 %v2481, %v2507
        %v2558 = vadd.f32 %v2482, %v2503
        %v2559 = vadd.f32 %v2483, %v2507
        %v2560 = vadd.f32 %v2484, %v2503
        %v2561 = vadd.f32 %v2485, %v2507
        %v2562 = vadd.f32 %v2486, %v2503
        %v2563 = vadd.f32 %v2487, %v2507
        %v2564 = vadd.f32 %v2488, %v2503
        %v2565 = vadd.f32 %v2489, %v2507
        %v2566 = vadd.f32 %v2490, %v2503
        %v2567 = vadd.f32 %v2491, %v2507
        %v2568 = vadd.f32 %v2492, %v2503
        %v2569 = vadd.f32 %v2493, %v2507
        %v2570 = vadd.f32 %v2494, %v2503
        %v2571 = vadd.f32 %v2495, %v2507
        %v2572 = vadd.f32 %v2496, %v2503
        %v2573 = vadd.f32 %v2497, %v2507
        %v2574 = vmax.f32 %v2510, 0.0
        %v2575 = vmax.f32 %v2511, 0.0
        %v2576 = vmax.f32 %v2512, 0.0
        %v2577 = vmax.f32 %v2513, 0.0
        %v2578 = vmax.f32 %v2514, 0.0
        %v2579 = vmax.f32 %v2515, 0.0
        %v2580 = vmax.f32 %v2516, 0.0
        %v2581 = vmax.f32 %v2517, 0.0
        %v2582 = vmax.f32 %v2518, 0.0
        %v2583 = vmax.f32 %v2519, 0.0
        %v2584 = vmax.f32 %v2520, 0.0
        %v2585 = vmax.f32 %v2521, 0.0
        %v2586 = vmax.f32 %v2522, 0.0
        %v2587 = vmax.f32 %v2523, 0.0
        %v2588 = vmax.f32 %v2524, 0.0
        %v2589 = vmax.f32 %v2525, 0.0
        %v2590 = vmax.f32 %v2526, 0.0
        %v2591 = vmax.f32 %v2527, 0.0
        %v2592 = vmax.f32 %v2528, 0.0
        %v2593 = vmax.f32 %v2529, 0.0
        %v2594 = vmax.f32 %v2530, 0.0
        %v2595 = vmax.f32 %v2531, 0.0
        %v2596 = vmax.f32 %v2532, 0.0
        %v2597 = vmax.f32 %v2533, 0.0
        %v2598 = vmax.f32 %v2534, 0.0
        %v2599 = vmax.f32 %v2535, 0.0
        %v2600 = vmax.f32 %v2536, 0.0
        %v2601 = vmax.f32 %v2537, 0.0
        %v2602 = vmax.f32 %v2538, 0.0
        %v2603 = vmax.f32 %v2539, 0.0
        %v2604 = vmax.f32 %v2540, 0.0
        %v2605 = vmax.f32 %v2541, 0.0
        %v2606 = vmax.f32 %v2542, 0.0
        %v2607 = vmax.f32 %v2543, 0.0
        %v2608 = vmax.f32 %v2544, 0.0
        %v2609 = vmax.f32 %v2545, 0.0
        %v2610 = vmax.f32 %v2546, 0.0
        %v2611 = vmax.f32 %v2547, 0.0
        %v2612 = vmax.f32 %v2548, 0.0
        %v2613 = vmax.f32 %v2549, 0.0
        %v2614 = vmax.f32 %v2550, 0.0
        %v2615 = vmax.f32 %v2551, 0.0
        %v2616 = vmax.f32 %v2552, 0.0
        %v2617 = vmax.f32 %v2553, 0.0
        %v2618 = vmax.f32 %v2554, 0.0
        %v2619 = vmax.f32 %v2555, 0.0
        %v2620 = vmax.f32 %v2556, 0.0
        %v2621 = vmax.f32 %v2557, 0.0
        %v2622 = vmax.f32 %v2558, 0.0
        %v2623 = vmax.f32 %v2559, 0.0
        %v2624 = vmax.f32 %v2560, 0.0
        %v2625 = vmax.f32 %v2561, 0.0
        %v2626 = vmax.f32 %v2562, 0.0
        %v2627 = vmax.f32 %v2563, 0.0
        %v2628 = vmax.f32 %v2564, 0.0
        %v2629 = vmax.f32 %v2565, 0.0
        %v2630 = vmax.f32 %v2566, 0.0
        %v2631 = vmax.f32 %v2567, 0.0
        %v2632 = vmax.f32 %v2568, 0.0
        %v2633 = vmax.f32 %v2569, 0.0
        %v2634 = vmax.f32 %v2570, 0.0
        %v2635 = vmax.f32 %v2571, 0.0
        %v2636 = vmax.f32 %v2572, 0.0
        %v2637 = vmax.f32 %v2573, 0.0
        %v2638 = vpack.c.bf16 %v2576, %v2574
        %v2639 = vpack.c.bf16 %v2577, %v2575
        %v2640 = vpack.c.bf16 %v2580, %v2578
        %v2641 = vpack.c.bf16 %v2581, %v2579
        %v2642 = vpack.c.bf16 %v2584, %v2582
        %v2643 = vpack.c.bf16 %v2585, %v2583
        %v2644 = vpack.c.bf16 %v2588, %v2586
        %v2645 = vpack.c.bf16 %v2589, %v2587
        %v2646 = vpack.c.bf16 %v2592, %v2590
        %v2647 = vpack.c.bf16 %v2593, %v2591
        %v2648 = vpack.c.bf16 %v2596, %v2594
        %v2649 = vpack.c.bf16 %v2597, %v2595
        %v2650 = vpack.c.bf16 %v2600, %v2598
        %v2651 = vpack.c.bf16 %v2601, %v2599
        %v2652 = vpack.c.bf16 %v2604, %v2602
        %v2653 = vpack.c.bf16 %v2605, %v2603
        %v2654 = vpack.c.bf16 %v2608, %v2606
        %v2655 = vpack.c.bf16 %v2609, %v2607
        %v2656 = vpack.c.bf16 %v2612, %v2610
        %v2657 = vpack.c.bf16 %v2613, %v2611
        %v2658 = vpack.c.bf16 %v2616, %v2614
        %v2659 = vpack.c.bf16 %v2617, %v2615
        %v2660 = vpack.c.bf16 %v2620, %v2618
        %v2661 = vpack.c.bf16 %v2621, %v2619
        %v2662 = vpack.c.bf16 %v2624, %v2622
        %v2663 = vpack.c.bf16 %v2625, %v2623
        %v2664 = vpack.c.bf16 %v2628, %v2626
        %v2665 = vpack.c.bf16 %v2629, %v2627
        %v2666 = vpack.c.bf16 %v2632, %v2630
        %v2667 = vpack.c.bf16 %v2633, %v2631
        %v2668 = vpack.c.bf16 %v2636, %v2634
        %v2669 = vpack.c.bf16 %v2637, %v2635
        %v2670 = vld [vmem:[%s3] sm:$0xff]
        %v2671 = vld [vmem:[%s3 + $0x8] sm:$0xff]
        %v2672 = vld [vmem:[%s3 + $0x10] sm:$0xff]
        %v2673 = vld [vmem:[%s3 + $0x18] sm:$0xff]
        %v2674 = vld [vmem:[%s3 + $0x20] sm:$0xff]
        %v2675 = vld [vmem:[%s3 + $0x28] sm:$0xff]
        %v2676 = vld [vmem:[%s3 + $0x30] sm:$0xff]
        %v2677 = vld [vmem:[%s3 + $0x38] sm:$0xff]
        %v2678 = vld [vmem:[%s3 + $0x40] sm:$0xff]
        %v2679 = vld [vmem:[%s3 + $0x48] sm:$0xff]
        %v2680 = vld [vmem:[%s3 + $0x50] sm:$0xff]
        %v2681 = vld [vmem:[%s3 + $0x58] sm:$0xff]
        %v2682 = vld [vmem:[%s3 + $0x60] sm:$0xff]
        %v2683 = vld [vmem:[%s3 + $0x68] sm:$0xff]
        %v2684 = vld [vmem:[%s3 + $0x70] sm:$0xff]
        %v2685 = vld [vmem:[%s3 + $0x78] sm:$0xff]
        %v2686 = vld [vmem:[%s3 + $0x80] sm:$0xff]
        %v2687 = vld [vmem:[%s3 + $0x88] sm:$0xff]
        %v2688 = vld [vmem:[%s3 + $0x90] sm:$0xff]
        %v2689 = vld [vmem:[%s3 + $0x98] sm:$0xff]
        %v2690 = vld [vmem:[%s3 + $0xa0] sm:$0xff]
        %v2691 = vld [vmem:[%s3 + $0xa8] sm:$0xff]
        %v2692 = vld [vmem:[%s3 + $0xb0] sm:$0xff]
        %v2693 = vld [vmem:[%s3 + $0xb8] sm:$0xff]
        %v2694 = vld [vmem:[%s3 + $0xc0] sm:$0xff]
        %v2695 = vld [vmem:[%s3 + $0xc8] sm:$0xff]
        %v2696 = vld [vmem:[%s3 + $0xd0] sm:$0xff]
        %v2697 = vld [vmem:[%s3 + $0xd8] sm:$0xff]
        %v2726 = vunpack.c.l.b16 %v2670
        %v2727 = vunpack.c.h.b16 %v2670
        %v2728 = vunpack.c.l.b16 %v2671
        %v2729 = vunpack.c.h.b16 %v2671
        %v2730 = vunpack.c.l.b16 %v2672
        %v2731 = vunpack.c.h.b16 %v2672
        %v2732 = vunpack.c.l.b16 %v2673
        %v2733 = vunpack.c.h.b16 %v2673
        %v2734 = vunpack.c.l.b16 %v2674
        %v2735 = vunpack.c.h.b16 %v2674
        %v2736 = vunpack.c.l.b16 %v2675
        %v2737 = vunpack.c.h.b16 %v2675
        %v2738 = vunpack.c.l.b16 %v2676
        %v2739 = vunpack.c.h.b16 %v2676
        %v2740 = vunpack.c.l.b16 %v2677
        %v2741 = vunpack.c.h.b16 %v2677
        %v2742 = vunpack.c.l.b16 %v2678
        %v2743 = vunpack.c.h.b16 %v2678
        %v2744 = vunpack.c.l.b16 %v2679
        %v2745 = vunpack.c.h.b16 %v2679
        %v2746 = vunpack.c.l.b16 %v2680
        %v2747 = vunpack.c.h.b16 %v2680
        %v2748 = vunpack.c.l.b16 %v2681
        %v2749 = vunpack.c.h.b16 %v2681
        %v2750 = vunpack.c.l.b16 %v2682
        %v2751 = vunpack.c.h.b16 %v2682
        %v2752 = vunpack.c.l.b16 %v2683
        %v2753 = vunpack.c.h.b16 %v2683
        %v2754 = vunpack.c.l.b16 %v2684
        %v2755 = vunpack.c.h.b16 %v2684
        %v2756 = vunpack.c.l.b16 %v2685
        %v2757 = vunpack.c.h.b16 %v2685
        %v2758 = vunpack.c.l.b16 %v2686
        %v2759 = vunpack.c.h.b16 %v2686
        %v2760 = vunpack.c.l.b16 %v2687
        %v2761 = vunpack.c.h.b16 %v2687
        %v2762 = vunpack.c.l.b16 %v2688
        %v2763 = vunpack.c.h.b16 %v2688
        %v2764 = vunpack.c.l.b16 %v2689
        %v2765 = vunpack.c.h.b16 %v2689
        %v2766 = vunpack.c.l.b16 %v2690
        %v2767 = vunpack.c.h.b16 %v2690
        %v2768 = vunpack.c.l.b16 %v2691
        %v2769 = vunpack.c.h.b16 %v2691
        %v2770 = vunpack.c.l.b16 %v2692
        %v2771 = vunpack.c.h.b16 %v2692
        %v2772 = vunpack.c.l.b16 %v2693
        %v2773 = vunpack.c.h.b16 %v2693
        %v2774 = vunpack.c.l.b16 %v2694
        %v2775 = vunpack.c.h.b16 %v2694
        %v2776 = vunpack.c.l.b16 %v2695
        %v2777 = vunpack.c.h.b16 %v2695
        %v2778 = vunpack.c.l.b16 %v2696
        %v2779 = vunpack.c.h.b16 %v2696
        %v2780 = vunpack.c.l.b16 %v2697
        %v2781 = vunpack.c.h.b16 %v2697
        %v2782 = vpack.c.b16 %v2728, %v2726
        %v2783 = vpack.c.b16 %v2729, %v2727
        %v2784 = vpack.c.b16 %v2732, %v2730
        %v2785 = vpack.c.b16 %v2733, %v2731
        %v2786 = vpack.c.b16 %v2736, %v2734
        %v2787 = vpack.c.b16 %v2737, %v2735
        %v2788 = vpack.c.b16 %v2740, %v2738
        %v2789 = vpack.c.b16 %v2741, %v2739
        %v2790 = vpack.c.b16 %v2744, %v2742
        %v2791 = vpack.c.b16 %v2745, %v2743
        %v2792 = vpack.c.b16 %v2748, %v2746
        %v2793 = vpack.c.b16 %v2749, %v2747
        %v2794 = vpack.c.b16 %v2752, %v2750
        %v2795 = vpack.c.b16 %v2753, %v2751
        %v2796 = vpack.c.b16 %v2756, %v2754
        %v2797 = vpack.c.b16 %v2757, %v2755
        %v2798 = vpack.c.b16 %v2760, %v2758
        %v2799 = vpack.c.b16 %v2761, %v2759
        %v2800 = vpack.c.b16 %v2764, %v2762
        %v2801 = vpack.c.b16 %v2765, %v2763
        %v2802 = vpack.c.b16 %v2768, %v2766
        %v2803 = vpack.c.b16 %v2769, %v2767
        %v2804 = vpack.c.b16 %v2772, %v2770
        %v2805 = vpack.c.b16 %v2773, %v2771
        %v2806 = vpack.c.b16 %v2776, %v2774
        %v2807 = vpack.c.b16 %v2777, %v2775
        %v2808 = vpack.c.b16 %v2780, %v2778
        %v2809 = vpack.c.b16 %v2781, %v2779
        %vm2824 = vcmask 1014784
        %v2826 = vsel %vm2824, %v2783, 0
        %v2829 = vsel %vm2824, %v2785, 0
        %v2832 = vsel %vm2824, %v2787, 0
        %v2835 = vsel %vm2824, %v2789, 0
        %v2838 = vsel %vm2824, %v2791, 0
        %v2841 = vsel %vm2824, %v2793, 0
        %v2844 = vsel %vm2824, %v2795, 0
        %v2847 = vsel %vm2824, %v2797, 0
        %v2850 = vsel %vm2824, %v2799, 0
        %v2853 = vsel %vm2824, %v2801, 0
        %v2856 = vsel %vm2824, %v2803, 0
        %v2859 = vsel %vm2824, %v2805, 0
        %v2862 = vsel %vm2824, %v2807, 0
        %v2865 = vsel %vm2824, %v2809, 0
        %vm2867 = vcmask 1045504
        %v2869 = vsel %vm2867, %v2668, 0
        %v2872 = vsel %vm2867, %v2669, 0
        %2874 = vmatprep.subr.bf16.mxu0 %v2653
        %2875 = vmatpush1.bf16.msra.mxu0 %v2652
        %2876 = vmatprep.subr.bf16.mxu0 %v2651
        %2877 = vmatpush1.bf16.msra.mxu0 %v2650
        %2878 = vmatprep.subr.bf16.mxu0 %v2649
        %2879 = vmatpush1.bf16.msra.mxu0 %v2648
        %2880 = vmatprep.subr.bf16.mxu0 %v2647
        %2881 = vmatpush1.bf16.msra.mxu0 %v2646
        %2882 = vmatprep.subr.bf16.mxu0 %v2645
        %2883 = vmatpush1.bf16.msra.mxu0 %v2644
        %2884 = vmatprep.subr.bf16.mxu0 %v2643
        %2885 = vmatpush1.bf16.msra.mxu0 %v2642
        %2886 = vmatprep.subr.bf16.mxu0 %v2641
        %2887 = vmatpush1.bf16.msra.mxu0 %v2640
        %2888 = vmatprep.subr.bf16.mxu0 %v2639
        %2889 = vmatpush1.bf16.msra.mxu0 %v2638
        %2890 = vmatprep.subr.bf16.mxu0 %v2872
        %2891 = vmatpush2.bf16.msra.mxu0 %v2869
        %2892 = vmatprep.subr.bf16.mxu0 %v2667
        %2893 = vmatpush2.bf16.msra.mxu0 %v2666
        %2894 = vmatprep.subr.bf16.mxu0 %v2665
        %2895 = vmatpush2.bf16.msra.mxu0 %v2664
        %2896 = vmatprep.subr.bf16.mxu0 %v2663
        %2897 = vmatpush2.bf16.msra.mxu0 %v2662
        %2898 = vmatprep.subr.bf16.mxu0 %v2661
        %2899 = vmatpush2.bf16.msra.mxu0 %v2660
        %2900 = vmatprep.subr.bf16.mxu0 %v2659
        %2901 = vmatpush2.bf16.msra.mxu0 %v2658
        %2902 = vmatprep.subr.bf16.mxu0 %v2657
        %2903 = vmatpush2.bf16.msra.mxu0 %v2656
        %2904 = vmatprep.subr.bf16.mxu0 %v2655
        %2905 = vmatpush2.bf16.msra.mxu0 %v2654
        %2906 = vmatprep.mubr.bf16.mxu0 %v2826
        %2907 = vmatmul.mubr.bf16.gmra.mxu0 %v2782
        %v2908 = vpop.f32.mrf.mxu0
        %v2909 = vadd.f32 0.0, %v2908
        %v2910 = vpop.f32.mrf.mxu0
        %v2911 = vadd.f32 0.0, %v2910
        %v2912 = vpop.f32.mrf.mxu0
        %v2913 = vadd.f32 0.0, %v2912
        %v2914 = vpop.f32.mrf.mxu0
        %v2915 = vadd.f32 0.0, %v2914
        %2916 = vmatprep.mubr.bf16.mxu0 %v2829
        %2917 = vmatmul.mubr.bf16.gmra.mxu0 %v2784
        %v2918 = vpop.f32.mrf.mxu0
        %v2919 = vadd.f32 0.0, %v2918
        %v2920 = vpop.f32.mrf.mxu0
        %v2921 = vadd.f32 0.0, %v2920
        %v2922 = vpop.f32.mrf.mxu0
        %v2923 = vadd.f32 0.0, %v2922
        %v2924 = vpop.f32.mrf.mxu0
        %v2925 = vadd.f32 0.0, %v2924
        %2926 = vmatprep.mubr.bf16.mxu0 %v2832
        %2927 = vmatmul.mubr.bf16.gmra.mxu0 %v2786
        %v2928 = vpop.f32.mrf.mxu0
        %v2929 = vadd.f32 0.0, %v2928
        %v2930 = vpop.f32.mrf.mxu0
        %v2931 = vadd.f32 0.0, %v2930
        %v2932 = vpop.f32.mrf.mxu0
        %v2933 = vadd.f32 0.0, %v2932
        %v2934 = vpop.f32.mrf.mxu0
        %v2935 = vadd.f32 0.0, %v2934
        %2936 = vmatprep.mubr.bf16.mxu0 %v2835
        %2937 = vmatmul.mubr.bf16.gmra.mxu0 %v2788
        %v2938 = vpop.f32.mrf.mxu0
        %v2939 = vadd.f32 0.0, %v2938
        %v2940 = vpop.f32.mrf.mxu0
        %v2941 = vadd.f32 0.0, %v2940
        %v2942 = vpop.f32.mrf.mxu0
        %v2943 = vadd.f32 0.0, %v2942
        %v2944 = vpop.f32.mrf.mxu0
        %v2945 = vadd.f32 0.0, %v2944
        %2946 = vmatprep.mubr.bf16.mxu0 %v2838
        %2947 = vmatmul.mubr.bf16.gmra.mxu0 %v2790
        %v2948 = vpop.f32.mrf.mxu0
        %v2949 = vadd.f32 0.0, %v2948
        %v2950 = vpop.f32.mrf.mxu0
        %v2951 = vadd.f32 0.0, %v2950
        %v2952 = vpop.f32.mrf.mxu0
        %v2953 = vadd.f32 0.0, %v2952
        %v2954 = vpop.f32.mrf.mxu0
        %v2955 = vadd.f32 0.0, %v2954
        %2956 = vmatprep.mubr.bf16.mxu0 %v2841
        %2957 = vmatmul.mubr.bf16.gmra.mxu0 %v2792
        %v2958 = vpop.f32.mrf.mxu0
        %v2959 = vadd.f32 0.0, %v2958
        %v2960 = vpop.f32.mrf.mxu0
        %v2961 = vadd.f32 0.0, %v2960
        %v2962 = vpop.f32.mrf.mxu0
        %v2963 = vadd.f32 0.0, %v2962
        %v2964 = vpop.f32.mrf.mxu0
        %v2965 = vadd.f32 0.0, %v2964
        %2966 = vmatprep.mubr.bf16.mxu0 %v2844
        %2967 = vmatmul.mubr.bf16.gmra.mxu0 %v2794
        %v2968 = vpop.f32.mrf.mxu0
        %v2969 = vadd.f32 0.0, %v2968
        %v2970 = vpop.f32.mrf.mxu0
        %v2971 = vadd.f32 0.0, %v2970
        %v2972 = vpop.f32.mrf.mxu0
        %v2973 = vadd.f32 0.0, %v2972
        %v2974 = vpop.f32.mrf.mxu0
        %v2975 = vadd.f32 0.0, %v2974
        %2976 = vmatprep.mubr.bf16.mxu0 %v2847
        %2977 = vmatmul.mubr.bf16.gmra.mxu0 %v2796
        %v2978 = vpop.f32.mrf.mxu0
        %v2979 = vadd.f32 0.0, %v2978
        %v2980 = vpop.f32.mrf.mxu0
        %v2981 = vadd.f32 0.0, %v2980
        %v2982 = vpop.f32.mrf.mxu0
        %v2983 = vadd.f32 0.0, %v2982
        %v2984 = vpop.f32.mrf.mxu0
        %v2985 = vadd.f32 0.0, %v2984
        %2986 = vmatprep.mubr.bf16.mxu0 %v2850
        %2987 = vmatmul.mubr.bf16.gmra.mxu0 %v2798
        %v2988 = vpop.f32.mrf.mxu0
        %v2989 = vadd.f32 0.0, %v2988
        %v2990 = vpop.f32.mrf.mxu0
        %v2991 = vadd.f32 0.0, %v2990
        %v2992 = vpop.f32.mrf.mxu0
        %v2993 = vadd.f32 0.0, %v2992
        %v2994 = vpop.f32.mrf.mxu0
        %v2995 = vadd.f32 0.0, %v2994
        %2996 = vmatprep.mubr.bf16.mxu0 %v2853
        %2997 = vmatmul.mubr.bf16.gmra.mxu0 %v2800
        %v2998 = vpop.f32.mrf.mxu0
        %v2999 = vadd.f32 0.0, %v2998
        %v3000 = vpop.f32.mrf.mxu0
        %v3001 = vadd.f32 0.0, %v3000
        %v3002 = vpop.f32.mrf.mxu0
        %v3003 = vadd.f32 0.0, %v3002
        %v3004 = vpop.f32.mrf.mxu0
        %v3005 = vadd.f32 0.0, %v3004
        %3006 = vmatprep.mubr.bf16.mxu0 %v2856
        %3007 = vmatmul.mubr.bf16.gmra.mxu0 %v2802
        %v3008 = vpop.f32.mrf.mxu0
        %v3009 = vadd.f32 0.0, %v3008
        %v3010 = vpop.f32.mrf.mxu0
        %v3011 = vadd.f32 0.0, %v3010
        %v3012 = vpop.f32.mrf.mxu0
        %v3013 = vadd.f32 0.0, %v3012
        %v3014 = vpop.f32.mrf.mxu0
        %v3015 = vadd.f32 0.0, %v3014
        %3016 = vmatprep.mubr.bf16.mxu0 %v2859
        %3017 = vmatmul.mubr.bf16.gmra.mxu0 %v2804
        %v3018 = vpop.f32.mrf.mxu0
        %v3019 = vadd.f32 0.0, %v3018
        %v3020 = vpop.f32.mrf.mxu0
        %v3021 = vadd.f32 0.0, %v3020
        %v3022 = vpop.f32.mrf.mxu0
        %v3023 = vadd.f32 0.0, %v3022
        %v3024 = vpop.f32.mrf.mxu0
        %v3025 = vadd.f32 0.0, %v3024
        %3026 = vmatprep.mubr.bf16.mxu0 %v2862
        %3027 = vmatmul.mubr.bf16.gmra.mxu0 %v2806
        %v3028 = vpop.f32.mrf.mxu0
        %v3029 = vadd.f32 0.0, %v3028
        %v3030 = vpop.f32.mrf.mxu0
        %v3031 = vadd.f32 0.0, %v3030
        %v3032 = vpop.f32.mrf.mxu0
        %v3033 = vadd.f32 0.0, %v3032
        %v3034 = vpop.f32.mrf.mxu0
        %v3035 = vadd.f32 0.0, %v3034
        %3036 = vmatprep.mubr.bf16.mxu0 %v2865
        %3037 = vmatmul.mubr.bf16.gmra.mxu0 %v2808
        %v3038 = vpop.f32.mrf.mxu0
        %v3039 = vadd.f32 0.0, %v3038
        %v3040 = vpop.f32.mrf.mxu0
        %v3041 = vadd.f32 0.0, %v3040
        %v3042 = vpop.f32.mrf.mxu0
        %v3043 = vadd.f32 0.0, %v3042
        %v3044 = vpop.f32.mrf.mxu0
        %v3045 = vadd.f32 0.0, %v3044
        %3046 = vdwg.mxu0
        %v3047 = vmax.f32 %v2909, %v2979
        %v3048 = vmax.f32 %v2911, %v2981
        %v3049 = vmax.f32 %v2913, %v2983
        %v3050 = vmax.f32 %v2915, %v2985
        %v3051 = vmax.f32 %v2919, %v2989
        %v3052 = vmax.f32 %v2921, %v2991
        %v3053 = vmax.f32 %v2923, %v2993
        %v3054 = vmax.f32 %v2925, %v2995
        %v3055 = vmax.f32 %v2929, %v2999
        %v3056 = vmax.f32 %v2931, %v3001
        %v3057 = vmax.f32 %v2933, %v3003
        %v3058 = vmax.f32 %v2935, %v3005
        %v3059 = vmax.f32 %v2939, %v3009
        %v3060 = vmax.f32 %v2941, %v3011
        %v3061 = vmax.f32 %v2943, %v3013
        %v3062 = vmax.f32 %v2945, %v3015
        %v3063 = vmax.f32 %v2949, %v3019
        %v3064 = vmax.f32 %v2951, %v3021
        %v3065 = vmax.f32 %v2953, %v3023
        %v3066 = vmax.f32 %v2955, %v3025
        %v3067 = vmax.f32 %v2959, %v3029
        %v3068 = vmax.f32 %v2961, %v3031
        %v3069 = vmax.f32 %v2963, %v3033
        %v3070 = vmax.f32 %v2965, %v3035
        %v3071 = vmax.f32 %v2969, %v3039
        %v3072 = vmax.f32 %v2971, %v3041
        %v3073 = vmax.f32 %v2973, %v3043
        %v3074 = vmax.f32 %v2975, %v3045
        %v3075 = vpack.c.bf16 %v3049, %v3047
        %v3076 = vpack.c.bf16 %v3050, %v3048
        %v3077 = vpack.c.bf16 %v3053, %v3051
        %v3078 = vpack.c.bf16 %v3054, %v3052
        %v3079 = vpack.c.bf16 %v3057, %v3055
        %v3080 = vpack.c.bf16 %v3058, %v3056
        %v3081 = vpack.c.bf16 %v3061, %v3059
        %v3082 = vpack.c.bf16 %v3062, %v3060
        %v3083 = vpack.c.bf16 %v3065, %v3063
        %v3084 = vpack.c.bf16 %v3066, %v3064
        %v3085 = vpack.c.bf16 %v3069, %v3067
        %v3086 = vpack.c.bf16 %v3070, %v3068
        %v3087 = vpack.c.bf16 %v3073, %v3071
        %v3088 = vpack.c.bf16 %v3074, %v3072
        %v3089 = vld [vmem:[%s4] sm:$0xff]
        %v3090 = vld [vmem:[%s4 + $0x8] sm:$0xff]
        %v3091 = vld [vmem:[%s4 + $0x10] sm:$0xff]
        %v3092 = vld [vmem:[%s4 + $0x18] sm:$0xff]
        %v3093 = vld [vmem:[%s4 + $0x20] sm:$0xff]
        %v3094 = vld [vmem:[%s4 + $0x28] sm:$0xff]
        %v3095 = vld [vmem:[%s4 + $0x30] sm:$0xff]
        %v3096 = vld [vmem:[%s4 + $0x38] sm:$0xff]
        %v3097 = vld [vmem:[%s4 + $0x40] sm:$0xff]
        %v3098 = vld [vmem:[%s4 + $0x48] sm:$0xff]
        %v3099 = vld [vmem:[%s4 + $0x50] sm:$0xff]
        %v3100 = vld [vmem:[%s4 + $0x58] sm:$0xff]
        %v3101 = vld [vmem:[%s4 + $0x60] sm:$0xff]
        %v3102 = vld [vmem:[%s4 + $0x68] sm:$0xff]
        %v3103 = vld [vmem:[%s4 + $0x70] sm:$0xff]
        %v3104 = vld [vmem:[%s4 + $0x78] sm:$0xff]
        %v3105 = vld [vmem:[%s4 + $0x80] sm:$0xff]
        %v3106 = vld [vmem:[%s4 + $0x88] sm:$0xff]
        %v3107 = vld [vmem:[%s4 + $0x90] sm:$0xff]
        %v3108 = vld [vmem:[%s4 + $0x98] sm:$0xff]
        %v3109 = vld [vmem:[%s4 + $0xa0] sm:$0xff]
        %v3131 = vunpack.c.l.b16 %v3089
        %v3132 = vunpack.c.h.b16 %v3089
        %v3133 = vunpack.c.l.b16 %v3090
        %v3134 = vunpack.c.h.b16 %v3090
        %v3135 = vunpack.c.l.b16 %v3091
        %v3136 = vunpack.c.h.b16 %v3091
        %v3137 = vunpack.c.l.b16 %v3092
        %v3138 = vunpack.c.h.b16 %v3092
        %v3139 = vunpack.c.l.b16 %v3093
        %v3140 = vunpack.c.h.b16 %v3093
        %v3141 = vunpack.c.l.b16 %v3094
        %v3142 = vunpack.c.h.b16 %v3094
        %v3143 = vunpack.c.l.b16 %v3095
        %v3144 = vunpack.c.h.b16 %v3095
        %v3145 = vunpack.c.l.b16 %v3096
        %v3146 = vunpack.c.h.b16 %v3096
        %v3147 = vunpack.c.l.b16 %v3097
        %v3148 = vunpack.c.h.b16 %v3097
        %v3149 = vunpack.c.l.b16 %v3098
        %v3150 = vunpack.c.h.b16 %v3098
        %v3151 = vunpack.c.l.b16 %v3099
        %v3152 = vunpack.c.h.b16 %v3099
        %v3153 = vunpack.c.l.b16 %v3100
        %v3154 = vunpack.c.h.b16 %v3100
        %v3155 = vunpack.c.l.b16 %v3101
        %v3156 = vunpack.c.h.b16 %v3101
        %v3157 = vunpack.c.l.b16 %v3102
        %v3158 = vunpack.c.h.b16 %v3102
        %v3159 = vunpack.c.l.b16 %v3103
        %v3160 = vunpack.c.h.b16 %v3103
        %v3161 = vunpack.c.l.b16 %v3104
        %v3162 = vunpack.c.h.b16 %v3104
        %v3163 = vunpack.c.l.b16 %v3105
        %v3164 = vunpack.c.h.b16 %v3105
        %v3165 = vunpack.c.l.b16 %v3106
        %v3166 = vunpack.c.h.b16 %v3106
        %v3167 = vunpack.c.l.b16 %v3107
        %v3168 = vunpack.c.h.b16 %v3107
        %v3169 = vunpack.c.l.b16 %v3108
        %v3170 = vunpack.c.h.b16 %v3108
        %v3171 = vunpack.c.l.b16 %v3109
        %v3172 = vunpack.c.h.b16 %v3109
        %v3173 = vpack.c.b16 %v3133, %v3131
        %v3174 = vpack.c.b16 %v3134, %v3132
        %v3175 = vpack.c.b16 %v3137, %v3135
        %v3176 = vpack.c.b16 %v3138, %v3136
        %v3177 = vpack.c.b16 %v3141, %v3139
        %v3178 = vpack.c.b16 %v3142, %v3140
        %v3179 = vpack.c.b16 %v3145, %v3143
        %v3180 = vpack.c.b16 %v3146, %v3144
        %v3181 = vpack.c.b16 %v3149, %v3147
        %v3182 = vpack.c.b16 %v3150, %v3148
        %v3183 = vpack.c.b16 %v3153, %v3151
        %v3184 = vpack.c.b16 %v3154, %v3152
        %v3185 = vpack.c.b16 %v3157, %v3155
        %v3186 = vpack.c.b16 %v3158, %v3156
        %v3187 = vpack.c.b16 %v3161, %v3159
        %v3188 = vpack.c.b16 %v3162, %v3160
        %v3189 = vpack.c.b16 %v3165, %v3163
        %v3190 = vpack.c.b16 %v3166, %v3164
        %v3191 = vpack.c.b16 %v3169, %v3167
        %v3192 = vpack.c.b16 %v3170, %v3168
        %v3193 = vpack.c.b16 %v3171, %v3171
        %v3194 = vpack.c.b16 %v3172, %v3172
        %vm3215 = vcmask 326656
        %v3217 = vsel %vm3215, %v3076, 0
        %v3220 = vsel %vm3215, %v3078, 0
        %v3223 = vsel %vm3215, %v3080, 0
        %v3226 = vsel %vm3215, %v3082, 0
        %v3229 = vsel %vm3215, %v3084, 0
        %v3232 = vsel %vm3215, %v3086, 0
        %v3235 = vsel %vm3215, %v3088, 0
        %vm3237 = vcmask 1043456
        %v3239 = vsel %vm3237, %v3193, 0
        %v3242 = vsel %vm3237, %v3194, 0
        %3244 = vmatprep.subr.bf16.mxu0 %v3188
        %3245 = vmatpush1.bf16.msra.mxu0 %v3187
        %3246 = vmatprep.subr.bf16.mxu0 %v3186
        %3247 = vmatpush1.bf16.msra.mxu0 %v3185
        %3248 = vmatprep.subr.bf16.mxu0 %v3184
        %3249 = vmatpush1.bf16.msra.mxu0 %v3183
        %3250 = vmatprep.subr.bf16.mxu0 %v3182
        %3251 = vmatpush1.bf16.msra.mxu0 %v3181
        %3252 = vmatprep.subr.bf16.mxu0 %v3180
        %3253 = vmatpush1.bf16.msra.mxu0 %v3179
        %3254 = vmatprep.subr.bf16.mxu0 %v3178
        %3255 = vmatpush1.bf16.msra.mxu0 %v3177
        %3256 = vmatprep.subr.bf16.mxu0 %v3176
        %3257 = vmatpush1.bf16.msra.mxu0 %v3175
        %3258 = vmatprep.subr.bf16.mxu0 %v3174
        %3259 = vmatpush1.bf16.msra.mxu0 %v3173
        %3260 = vmatprep.subr.bf16.mxu0 0
        %3261 = vmatpush2.bf16.msra.mxu0 0
        %3262 = vmatprep.subr.bf16.mxu0 0
        %3263 = vmatpush2.bf16.msra.mxu0 0
        %3264 = vmatprep.subr.bf16.mxu0 0
        %3265 = vmatpush2.bf16.msra.mxu0 0
        %3266 = vmatprep.subr.bf16.mxu0 0
        %3267 = vmatpush2.bf16.msra.mxu0 0
        %3268 = vmatprep.subr.bf16.mxu0 0
        %3269 = vmatpush2.bf16.msra.mxu0 0
        %3270 = vmatprep.subr.bf16.mxu0 %v3242
        %3271 = vmatpush2.bf16.msra.mxu0 %v3239
        %3272 = vmatprep.subr.bf16.mxu0 %v3192
        %3273 = vmatpush2.bf16.msra.mxu0 %v3191
        %3274 = vmatprep.subr.bf16.mxu0 %v3190
        %3275 = vmatpush2.bf16.msra.mxu0 %v3189
        %3276 = vmatprep.mubr.bf16.mxu0 %v3217
        %3277 = vmatmul.mubr.bf16.gmra.mxu0 %v3075
        %v3278 = vpop.f32.mrf.mxu0
        %v3279 = vadd.f32 0.0, %v3278
        %v3280 = vpop.f32.mrf.mxu0
        %v3281 = vadd.f32 0.0, %v3280
        %v3282 = vpop.f32.mrf.mxu0
        %v3283 = vadd.f32 0.0, %v3282
        %v3284 = vpop.f32.mrf.mxu0
        %v3285 = vadd.f32 0.0, %v3284
        %3286 = vmatprep.mubr.bf16.mxu0 %v3220
        %3287 = vmatmul.mubr.bf16.gmra.mxu0 %v3077
        %v3288 = vpop.f32.mrf.mxu0
        %v3289 = vadd.f32 0.0, %v3288
        %v3290 = vpop.f32.mrf.mxu0
        %v3291 = vadd.f32 0.0, %v3290
        %v3292 = vpop.f32.mrf.mxu0
        %v3293 = vadd.f32 0.0, %v3292
        %v3294 = vpop.f32.mrf.mxu0
        %v3295 = vadd.f32 0.0, %v3294
        %3296 = vmatprep.mubr.bf16.mxu0 %v3223
        %3297 = vmatmul.mubr.bf16.gmra.mxu0 %v3079
        %v3298 = vpop.f32.mrf.mxu0
        %v3299 = vadd.f32 0.0, %v3298
        %v3300 = vpop.f32.mrf.mxu0
        %v3301 = vadd.f32 0.0, %v3300
        %v3302 = vpop.f32.mrf.mxu0
        %v3303 = vadd.f32 0.0, %v3302
        %v3304 = vpop.f32.mrf.mxu0
        %v3305 = vadd.f32 0.0, %v3304
        %3306 = vmatprep.mubr.bf16.mxu0 %v3226
        %3307 = vmatmul.mubr.bf16.gmra.mxu0 %v3081
        %v3308 = vpop.f32.mrf.mxu0
        %v3309 = vadd.f32 0.0, %v3308
        %v3310 = vpop.f32.mrf.mxu0
        %v3311 = vadd.f32 0.0, %v3310
        %v3312 = vpop.f32.mrf.mxu0
        %v3313 = vadd.f32 0.0, %v3312
        %v3314 = vpop.f32.mrf.mxu0
        %v3315 = vadd.f32 0.0, %v3314
        %3316 = vmatprep.mubr.bf16.mxu0 %v3229
        %3317 = vmatmul.mubr.bf16.gmra.mxu0 %v3083
        %v3318 = vpop.f32.mrf.mxu0
        %v3319 = vadd.f32 0.0, %v3318
        %v3320 = vpop.f32.mrf.mxu0
        %v3321 = vadd.f32 0.0, %v3320
        %v3322 = vpop.f32.mrf.mxu0
        %v3323 = vadd.f32 0.0, %v3322
        %v3324 = vpop.f32.mrf.mxu0
        %v3325 = vadd.f32 0.0, %v3324
        %3326 = vmatprep.mubr.bf16.mxu0 %v3232
        %3327 = vmatmul.mubr.bf16.gmra.mxu0 %v3085
        %v3328 = vpop.f32.mrf.mxu0
        %v3329 = vadd.f32 0.0, %v3328
        %v3330 = vpop.f32.mrf.mxu0
        %v3331 = vadd.f32 0.0, %v3330
        %v3332 = vpop.f32.mrf.mxu0
        %v3333 = vadd.f32 0.0, %v3332
        %v3334 = vpop.f32.mrf.mxu0
        %v3335 = vadd.f32 0.0, %v3334
        %3336 = vmatprep.mubr.bf16.mxu0 %v3235
        %3337 = vmatmul.mubr.bf16.gmra.mxu0 %v3087
        %v3338 = vpop.f32.mrf.mxu0
        %v3339 = vadd.f32 0.0, %v3338
        %v3340 = vpop.f32.mrf.mxu0
        %v3341 = vadd.f32 0.0, %v3340
        %v3342 = vpop.f32.mrf.mxu0
        %v3343 = vadd.f32 0.0, %v3342
        %v3344 = vpop.f32.mrf.mxu0
        %v3345 = vadd.f32 0.0, %v3344
        %3346 = vdwg.mxu0
        %v3347 = vmax.f32 %v3279, %v3281
        %v3348 = vmax.f32 %v3283, %v3285
        %v3349 = vmax.f32 %v3289, %v3291
        %v3350 = vmax.f32 %v3293, %v3295
        %v3351 = vmax.f32 %v3299, %v3301
        %v3352 = vmax.f32 %v3303, %v3305
        %v3353 = vmax.f32 %v3309, %v3311
        %v3354 = vmax.f32 %v3313, %v3315
        %v3355 = vmax.f32 %v3319, %v3321
        %v3356 = vmax.f32 %v3323, %v3325
        %v3357 = vmax.f32 %v3329, %v3331
        %v3358 = vmax.f32 %v3333, %v3335
        %v3359 = vmax.f32 %v3339, %v3341
        %v3360 = vmax.f32 %v3343, %v3345
        %v3361 = vpack.c.bf16 %v3348, %v3347
        %v3362 = vpack.c.bf16 %v3350, %v3349
        %v3363 = vpack.c.bf16 %v3352, %v3351
        %v3364 = vpack.c.bf16 %v3354, %v3353
        %v3365 = vpack.c.bf16 %v3356, %v3355
        %v3366 = vpack.c.bf16 %v3358, %v3357
        %v3367 = vpack.c.bf16 %v3360, %v3359
        %v3368 = vld [vmem:[%s5] sm:$0xff]
        %v3369 = vld [vmem:[%s5 + $0x8] sm:$0xff]
        %v3370 = vld [vmem:[%s5 + $0x10] sm:$0xff]
        %v3371 = vld [vmem:[%s5 + $0x18] sm:$0xff]
        %v3372 = vld [vmem:[%s5 + $0x20] sm:$0xff]
        %v3373 = vld [vmem:[%s5 + $0x28] sm:$0xff]
        %v3374 = vld [vmem:[%s5 + $0x30] sm:$0xff]
        %v3375 = vld [vmem:[%s5 + $0x38] sm:$0xff]
        %v3376 = vld [vmem:[%s5 + $0x40] sm:$0xff]
        %v3377 = vld [vmem:[%s5 + $0x48] sm:$0xff]
        %v3378 = vld [vmem:[%s5 + $0x50] sm:$0x33]
        %s3379 = scalar_lea.vmem %s5, 88
        %v3380 = vld [vmem:[%s3379] sm:$0xff]
        %v3381 = vld [vmem:[%s3379 + $0x8] sm:$0xff]
        %v3382 = vld [vmem:[%s3379 + $0x10] sm:$0xff]
        %v3383 = vld [vmem:[%s3379 + $0x18] sm:$0xff]
        %v3384 = vld [vmem:[%s3379 + $0x20] sm:$0xff]
        %v3385 = vld [vmem:[%s3379 + $0x28] sm:$0xff]
        %v3386 = vld [vmem:[%s3379 + $0x30] sm:$0xff]
        %v3387 = vld [vmem:[%s3379 + $0x38] sm:$0xff]
        %v3388 = vld [vmem:[%s3379 + $0x40] sm:$0xff]
        %v3389 = vld [vmem:[%s3379 + $0x48] sm:$0xff]
        %v3390 = vld [vmem:[%s3379 + $0x50] sm:$0x33]
        %vm3391 = vsmask.f32 7424
        %v3393 = vshrl.u32 %v3361, 16
        %v3395 = vshll.u32 %v3361, 16
        %v3397 = vrot.slane %v3395, 1
        %v3398 = vor.u32 %v3393, %v3397
        %v3400 = vshll.u32 %v3362, 16
        %v3402 = vrot.slane %v3400, 1
        %v3403 = vsel %vm3391, %v3398, %v3402
        %v3404 = vshrl.u32 %v3362, 16
        %v3406 = vor.u32 %v3404, %v3402
        %v3408 = vshll.u32 %v3363, 16
        %v3410 = vrot.slane %v3408, 1
        %v3411 = vsel %vm3391, %v3406, %v3410
        %v3412 = vshrl.u32 %v3363, 16
        %v3414 = vor.u32 %v3412, %v3410
        %v3416 = vshll.u32 %v3364, 16
        %v3418 = vrot.slane %v3416, 1
        %v3419 = vsel %vm3391, %v3414, %v3418
        %v3420 = vshrl.u32 %v3364, 16
        %v3422 = vor.u32 %v3420, %v3418
        %v3424 = vshll.u32 %v3365, 16
        %v3426 = vrot.slane %v3424, 1
        %v3427 = vsel %vm3391, %v3422, %v3426
        %v3428 = vshrl.u32 %v3365, 16
        %v3430 = vor.u32 %v3428, %v3426
        %v3432 = vshll.u32 %v3366, 16
        %v3434 = vrot.slane %v3432, 1
        %v3435 = vsel %vm3391, %v3430, %v3434
        %v3436 = vshrl.u32 %v3366, 16
        %v3438 = vor.u32 %v3436, %v3434
        %v3440 = vshll.u32 %v3367, 16
        %v3442 = vrot.slane %v3440, 1
        %v3443 = vsel %vm3391, %v3438, %v3442
        %v3444 = vshrl.u32 %v3367, 16
        %v3446 = vor.u32 %v3444, %v3442
        %v3458 = vunpack.c.l.b16 %v3380
        %v3459 = vunpack.c.h.b16 %v3380
        %v3460 = vunpack.c.l.b16 %v3381
        %v3461 = vunpack.c.h.b16 %v3381
        %v3462 = vunpack.c.l.b16 %v3382
        %v3463 = vunpack.c.h.b16 %v3382
        %v3464 = vunpack.c.l.b16 %v3383
        %v3465 = vunpack.c.h.b16 %v3383
        %v3466 = vunpack.c.l.b16 %v3384
        %v3467 = vunpack.c.h.b16 %v3384
        %v3468 = vunpack.c.l.b16 %v3385
        %v3469 = vunpack.c.h.b16 %v3385
        %v3470 = vunpack.c.l.b16 %v3386
        %v3471 = vunpack.c.h.b16 %v3386
        %v3472 = vunpack.c.l.b16 %v3387
        %v3473 = vunpack.c.h.b16 %v3387
        %v3474 = vunpack.c.l.b16 %v3388
        %v3475 = vunpack.c.h.b16 %v3388
        %v3476 = vunpack.c.l.b16 %v3389
        %v3477 = vunpack.c.h.b16 %v3389
        %v3478 = vunpack.c.l.b16 %v3390
        %v3479 = vunpack.c.h.b16 %v3390
        %v3480 = vpack.c.b16 %v3460, %v3458
        %v3481 = vpack.c.b16 %v3461, %v3459
        %v3482 = vpack.c.b16 %v3464, %v3462
        %v3483 = vpack.c.b16 %v3465, %v3463
        %v3484 = vpack.c.b16 %v3468, %v3466
        %v3485 = vpack.c.b16 %v3469, %v3467
        %v3486 = vpack.c.b16 %v3472, %v3470
        %v3487 = vpack.c.b16 %v3473, %v3471
        %v3488 = vpack.c.b16 %v3476, %v3474
        %v3489 = vpack.c.b16 %v3477, %v3475
        %v3490 = vpack.c.b16 %v3478, %v3478
        %v3491 = vpack.c.b16 %v3479, %v3479
        %vm3502 = vcmask 687104
        %v3504 = vsel %vm3502, %v3403, 0
        %v3507 = vsel %vm3502, %v3411, 0
        %v3510 = vsel %vm3502, %v3419, 0
        %v3513 = vsel %vm3502, %v3427, 0
        %v3516 = vsel %vm3502, %v3435, 0
        %v3519 = vsel %vm3502, %v3443, 0
        %v3522 = vsel %vm3502, %v3446, 0
        %vm3524 = vcmask 1041408
        %v3526 = vsel %vm3524, %v3490, 0
        %v3529 = vsel %vm3524, %v3491, 0
        %3531 = vmatprep.subr.bf16.mxu0 0
        %3532 = vmatpush1.bf16.msra.mxu0 0
        %3533 = vmatprep.subr.bf16.mxu0 0
        %3534 = vmatpush1.bf16.msra.mxu0 0
        %3535 = vmatprep.subr.bf16.mxu0 %v3529
        %3536 = vmatpush1.bf16.msra.mxu0 %v3526
        %3537 = vmatprep.subr.bf16.mxu0 %v3489
        %3538 = vmatpush1.bf16.msra.mxu0 %v3488
        %3539 = vmatprep.subr.bf16.mxu0 %v3487
        %3540 = vmatpush1.bf16.msra.mxu0 %v3486
        %3541 = vmatprep.subr.bf16.mxu0 %v3485
        %3542 = vmatpush1.bf16.msra.mxu0 %v3484
        %3543 = vmatprep.subr.bf16.mxu0 %v3483
        %3544 = vmatpush1.bf16.msra.mxu0 %v3482
        %3545 = vmatprep.subr.bf16.mxu0 %v3481
        %3546 = vmatpush1.bf16.msra.mxu0 %v3480
        %3547 = vmatprep.subr.bf16.mxu0 0
        %3548 = vmatpush2.bf16.msra.mxu0 0
        %3549 = vmatprep.subr.bf16.mxu0 0
        %3550 = vmatpush2.bf16.msra.mxu0 0
        %3551 = vmatprep.subr.bf16.mxu0 0
        %3552 = vmatpush2.bf16.msra.mxu0 0
        %3553 = vmatprep.subr.bf16.mxu0 0
        %3554 = vmatpush2.bf16.msra.mxu0 0
        %3555 = vmatprep.subr.bf16.mxu0 0
        %3556 = vmatpush2.bf16.msra.mxu0 0
        %3557 = vmatprep.subr.bf16.mxu0 0
        %3558 = vmatpush2.bf16.msra.mxu0 0
        %3559 = vmatprep.subr.bf16.mxu0 0
        %3560 = vmatpush2.bf16.msra.mxu0 0
        %3561 = vmatprep.subr.bf16.mxu0 0
        %3562 = vmatpush2.bf16.msra.mxu0 0
        %3563 = vmatprep.mubr.bf16.mxu0 0
        %3564 = vmatmul.mubr.bf16.gmra.mxu0 %v3504
        %v3565 = vpop.f32.mrf.mxu0
        %v3566 = vadd.f32 0.0, %v3565
        %v3567 = vpop.f32.mrf.mxu0
        %v3568 = vadd.f32 0.0, %v3567
        %v3569 = vpop.f32.mrf.mxu0
        %v3570 = vadd.f32 0.0, %v3569
        %v3571 = vpop.f32.mrf.mxu0
        %v3572 = vadd.f32 0.0, %v3571
        %3573 = vmatprep.mubr.bf16.mxu0 0
        %3574 = vmatmul.mubr.bf16.gmra.mxu0 %v3507
        %v3575 = vpop.f32.mrf.mxu0
        %v3576 = vadd.f32 0.0, %v3575
        %v3577 = vpop.f32.mrf.mxu0
        %v3578 = vadd.f32 0.0, %v3577
        %v3579 = vpop.f32.mrf.mxu0
        %v3580 = vadd.f32 0.0, %v3579
        %v3581 = vpop.f32.mrf.mxu0
        %v3582 = vadd.f32 0.0, %v3581
        %3583 = vmatprep.mubr.bf16.mxu0 0
        %3584 = vmatmul.mubr.bf16.gmra.mxu0 %v3510
        %v3585 = vpop.f32.mrf.mxu0
        %v3586 = vadd.f32 0.0, %v3585
        %v3587 = vpop.f32.mrf.mxu0
        %v3588 = vadd.f32 0.0, %v3587
        %v3589 = vpop.f32.mrf.mxu0
        %v3590 = vadd.f32 0.0, %v3589
        %v3591 = vpop.f32.mrf.mxu0
        %v3592 = vadd.f32 0.0, %v3591
        %3593 = vmatprep.mubr.bf16.mxu0 0
        %3594 = vmatmul.mubr.bf16.gmra.mxu0 %v3513
        %v3595 = vpop.f32.mrf.mxu0
        %v3596 = vadd.f32 0.0, %v3595
        %v3597 = vpop.f32.mrf.mxu0
        %v3598 = vadd.f32 0.0, %v3597
        %v3599 = vpop.f32.mrf.mxu0
        %v3600 = vadd.f32 0.0, %v3599
        %v3601 = vpop.f32.mrf.mxu0
        %v3602 = vadd.f32 0.0, %v3601
        %3603 = vmatprep.mubr.bf16.mxu0 0
        %3604 = vmatmul.mubr.bf16.gmra.mxu0 %v3516
        %v3605 = vpop.f32.mrf.mxu0
        %v3606 = vadd.f32 0.0, %v3605
        %v3607 = vpop.f32.mrf.mxu0
        %v3608 = vadd.f32 0.0, %v3607
        %v3609 = vpop.f32.mrf.mxu0
        %v3610 = vadd.f32 0.0, %v3609
        %v3611 = vpop.f32.mrf.mxu0
        %v3612 = vadd.f32 0.0, %v3611
        %3613 = vmatprep.mubr.bf16.mxu0 0
        %3614 = vmatmul.mubr.bf16.gmra.mxu0 %v3519
        %v3615 = vpop.f32.mrf.mxu0
        %v3616 = vadd.f32 0.0, %v3615
        %v3617 = vpop.f32.mrf.mxu0
        %v3618 = vadd.f32 0.0, %v3617
        %v3619 = vpop.f32.mrf.mxu0
        %v3620 = vadd.f32 0.0, %v3619
        %v3621 = vpop.f32.mrf.mxu0
        %v3622 = vadd.f32 0.0, %v3621
        %3623 = vmatprep.mubr.bf16.mxu0 0
        %3624 = vmatmul.mubr.bf16.gmra.mxu0 %v3522
        %v3625 = vpop.f32.mrf.mxu0
        %v3626 = vadd.f32 0.0, %v3625
        %v3627 = vpop.f32.mrf.mxu0
        %v3628 = vadd.f32 0.0, %v3627
        %v3629 = vpop.f32.mrf.mxu0
        %v3630 = vadd.f32 0.0, %v3629
        %v3631 = vpop.f32.mrf.mxu0
        %v3632 = vadd.f32 0.0, %v3631
        %3633 = vdwg.mxu0
        %v3645 = vunpack.c.l.b16 %v3368
        %v3646 = vunpack.c.h.b16 %v3368
        %v3647 = vunpack.c.l.b16 %v3369
        %v3648 = vunpack.c.h.b16 %v3369
        %v3649 = vunpack.c.l.b16 %v3370
        %v3650 = vunpack.c.h.b16 %v3370
        %v3651 = vunpack.c.l.b16 %v3371
        %v3652 = vunpack.c.h.b16 %v3371
        %v3653 = vunpack.c.l.b16 %v3372
        %v3654 = vunpack.c.h.b16 %v3372
        %v3655 = vunpack.c.l.b16 %v3373
        %v3656 = vunpack.c.h.b16 %v3373
        %v3657 = vunpack.c.l.b16 %v3374
        %v3658 = vunpack.c.h.b16 %v3374
        %v3659 = vunpack.c.l.b16 %v3375
        %v3660 = vunpack.c.h.b16 %v3375
        %v3661 = vunpack.c.l.b16 %v3376
        %v3662 = vunpack.c.h.b16 %v3376
        %v3663 = vunpack.c.l.b16 %v3377
        %v3664 = vunpack.c.h.b16 %v3377
        %v3665 = vunpack.c.l.b16 %v3378
        %v3666 = vunpack.c.h.b16 %v3378
        %v3667 = vpack.c.b16 %v3647, %v3645
        %v3668 = vpack.c.b16 %v3648, %v3646
        %v3669 = vpack.c.b16 %v3651, %v3649
        %v3670 = vpack.c.b16 %v3652, %v3650
        %v3671 = vpack.c.b16 %v3655, %v3653
        %v3672 = vpack.c.b16 %v3656, %v3654
        %v3673 = vpack.c.b16 %v3659, %v3657
        %v3674 = vpack.c.b16 %v3660, %v3658
        %v3675 = vpack.c.b16 %v3663, %v3661
        %v3676 = vpack.c.b16 %v3664, %v3662
        %v3677 = vpack.c.b16 %v3665, %v3665
        %v3678 = vpack.c.b16 %v3666, %v3666
        %v3689 = vsel %vm3502, %v3361, 0
        %v3691 = vsel %vm3502, %v3362, 0
        %v3693 = vsel %vm3502, %v3363, 0
        %v3695 = vsel %vm3502, %v3364, 0
        %v3697 = vsel %vm3502, %v3365, 0
        %v3699 = vsel %vm3502, %v3366, 0
        %v3701 = vsel %vm3502, %v3367, 0
        %v3704 = vsel %vm3524, %v3677, 0
        %v3707 = vsel %vm3524, %v3678, 0
        %3709 = vmatprep.subr.bf16.mxu0 0
        %3710 = vmatpush1.bf16.msra.mxu0 0
        %3711 = vmatprep.subr.bf16.mxu0 0
        %3712 = vmatpush1.bf16.msra.mxu0 0
        %3713 = vmatprep.subr.bf16.mxu0 %v3707
        %3714 = vmatpush1.bf16.msra.mxu0 %v3704
        %3715 = vmatprep.subr.bf16.mxu0 %v3676
        %3716 = vmatpush1.bf16.msra.mxu0 %v3675
        %3717 = vmatprep.subr.bf16.mxu0 %v3674
        %3718 = vmatpush1.bf16.msra.mxu0 %v3673
        %3719 = vmatprep.subr.bf16.mxu0 %v3672
        %3720 = vmatpush1.bf16.msra.mxu0 %v3671
        %3721 = vmatprep.subr.bf16.mxu0 %v3670
        %3722 = vmatpush1.bf16.msra.mxu0 %v3669
        %3723 = vmatprep.subr.bf16.mxu0 %v3668
        %3724 = vmatpush1.bf16.msra.mxu0 %v3667
        %3725 = vmatprep.subr.bf16.mxu0 0
        %3726 = vmatpush2.bf16.msra.mxu0 0
        %3727 = vmatprep.subr.bf16.mxu0 0
        %3728 = vmatpush2.bf16.msra.mxu0 0
        %3729 = vmatprep.subr.bf16.mxu0 0
        %3730 = vmatpush2.bf16.msra.mxu0 0
        %3731 = vmatprep.subr.bf16.mxu0 0
        %3732 = vmatpush2.bf16.msra.mxu0 0
        %3733 = vmatprep.subr.bf16.mxu0 0
        %3734 = vmatpush2.bf16.msra.mxu0 0
        %3735 = vmatprep.subr.bf16.mxu0 0
        %3736 = vmatpush2.bf16.msra.mxu0 0
        %3737 = vmatprep.subr.bf16.mxu0 0
        %3738 = vmatpush2.bf16.msra.mxu0 0
        %3739 = vmatprep.subr.bf16.mxu0 0
        %3740 = vmatpush2.bf16.msra.mxu0 0
        %3741 = vmatprep.mubr.bf16.mxu0 0
        %3742 = vmatmul.mubr.bf16.gmra.mxu0 %v3689
        %v3743 = vpop.f32.mrf.mxu0
        %v3744 = vadd.f32 %v3566, %v3743
        %v3745 = vpop.f32.mrf.mxu0
        %v3746 = vadd.f32 %v3568, %v3745
        %v3747 = vpop.f32.mrf.mxu0
        %v3748 = vadd.f32 %v3570, %v3747
        %v3749 = vpop.f32.mrf.mxu0
        %v3750 = vadd.f32 %v3572, %v3749
        %3751 = vmatprep.mubr.bf16.mxu0 0
        %3752 = vmatmul.mubr.bf16.gmra.mxu0 %v3691
        %v3753 = vpop.f32.mrf.mxu0
        %v3754 = vadd.f32 %v3576, %v3753
        %v3755 = vpop.f32.mrf.mxu0
        %v3756 = vadd.f32 %v3578, %v3755
        %v3757 = vpop.f32.mrf.mxu0
        %v3758 = vadd.f32 %v3580, %v3757
        %v3759 = vpop.f32.mrf.mxu0
        %v3760 = vadd.f32 %v3582, %v3759
        %3761 = vmatprep.mubr.bf16.mxu0 0
        %3762 = vmatmul.mubr.bf16.gmra.mxu0 %v3693
        %v3763 = vpop.f32.mrf.mxu0
        %v3764 = vadd.f32 %v3586, %v3763
        %v3765 = vpop.f32.mrf.mxu0
        %v3766 = vadd.f32 %v3588, %v3765
        %v3767 = vpop.f32.mrf.mxu0
        %v3768 = vadd.f32 %v3590, %v3767
        %v3769 = vpop.f32.mrf.mxu0
        %v3770 = vadd.f32 %v3592, %v3769
        %3771 = vmatprep.mubr.bf16.mxu0 0
        %3772 = vmatmul.mubr.bf16.gmra.mxu0 %v3695
        %v3773 = vpop.f32.mrf.mxu0
        %v3774 = vadd.f32 %v3596, %v3773
        %v3775 = vpop.f32.mrf.mxu0
        %v3776 = vadd.f32 %v3598, %v3775
        %v3777 = vpop.f32.mrf.mxu0
        %v3778 = vadd.f32 %v3600, %v3777
        %v3779 = vpop.f32.mrf.mxu0
        %v3780 = vadd.f32 %v3602, %v3779
        %3781 = vmatprep.mubr.bf16.mxu0 0
        %3782 = vmatmul.mubr.bf16.gmra.mxu0 %v3697
        %v3783 = vpop.f32.mrf.mxu0
        %v3784 = vadd.f32 %v3606, %v3783
        %v3785 = vpop.f32.mrf.mxu0
        %v3786 = vadd.f32 %v3608, %v3785
        %v3787 = vpop.f32.mrf.mxu0
        %v3788 = vadd.f32 %v3610, %v3787
        %v3789 = vpop.f32.mrf.mxu0
        %v3790 = vadd.f32 %v3612, %v3789
        %3791 = vmatprep.mubr.bf16.mxu0 0
        %3792 = vmatmul.mubr.bf16.gmra.mxu0 %v3699
        %v3793 = vpop.f32.mrf.mxu0
        %v3794 = vadd.f32 %v3616, %v3793
        %v3795 = vpop.f32.mrf.mxu0
        %v3796 = vadd.f32 %v3618, %v3795
        %v3797 = vpop.f32.mrf.mxu0
        %v3798 = vadd.f32 %v3620, %v3797
        %v3799 = vpop.f32.mrf.mxu0
        %v3800 = vadd.f32 %v3622, %v3799
        %3801 = vmatprep.mubr.bf16.mxu0 0
        %3802 = vmatmul.mubr.bf16.gmra.mxu0 %v3701
        %v3803 = vpop.f32.mrf.mxu0
        %v3804 = vadd.f32 %v3626, %v3803
        %v3805 = vpop.f32.mrf.mxu0
        %v3806 = vadd.f32 %v3628, %v3805
        %v3807 = vpop.f32.mrf.mxu0
        %v3808 = vadd.f32 %v3630, %v3807
        %v3809 = vpop.f32.mrf.mxu0
        %v3810 = vadd.f32 %v3632, %v3809
        %3811 = vdwg.mxu0
        %s3812 = scalar_lea.vmem %s5, 176
        %v3813 = vld [vmem:[%s3812] sm:$0xff]
        %v3814 = vld [vmem:[%s3812 + $0x8] sm:$0xff]
        %v3815 = vld [vmem:[%s3812 + $0x10] sm:$0xff]
        %v3816 = vld [vmem:[%s3812 + $0x18] sm:$0xff]
        %v3817 = vld [vmem:[%s3812 + $0x20] sm:$0xff]
        %v3818 = vld [vmem:[%s3812 + $0x28] sm:$0xff]
        %v3819 = vld [vmem:[%s3812 + $0x30] sm:$0xff]
        %v3820 = vld [vmem:[%s3812 + $0x38] sm:$0xff]
        %v3821 = vld [vmem:[%s3812 + $0x40] sm:$0xff]
        %v3822 = vld [vmem:[%s3812 + $0x48] sm:$0xff]
        %v3823 = vld [vmem:[%s3812 + $0x50] sm:$0x33]
        %vm3831 = vcmask 1046528
        %v3832 = vrot.slane %v3361, 1
        %v3833 = vrot.slane %v3362, 1
        %v3834 = vsel %vm3831, %v3832, %v3833
        %v3835 = vrot.slane %v3363, 1
        %v3836 = vsel %vm3831, %v3833, %v3835
        %v3837 = vrot.slane %v3364, 1
        %v3838 = vsel %vm3831, %v3835, %v3837
        %v3839 = vrot.slane %v3365, 1
        %v3840 = vsel %vm3831, %v3837, %v3839
        %v3841 = vrot.slane %v3366, 1
        %v3842 = vsel %vm3831, %v3839, %v3841
        %v3843 = vrot.slane %v3367, 1
        %v3844 = vsel %vm3831, %v3841, %v3843
        %v3856 = vunpack.c.l.b16 %v3813
        %v3857 = vunpack.c.h.b16 %v3813
        %v3858 = vunpack.c.l.b16 %v3814
        %v3859 = vunpack.c.h.b16 %v3814
        %v3860 = vunpack.c.l.b16 %v3815
        %v3861 = vunpack.c.h.b16 %v3815
        %v3862 = vunpack.c.l.b16 %v3816
        %v3863 = vunpack.c.h.b16 %v3816
        %v3864 = vunpack.c.l.b16 %v3817
        %v3865 = vunpack.c.h.b16 %v3817
        %v3866 = vunpack.c.l.b16 %v3818
        %v3867 = vunpack.c.h.b16 %v3818
        %v3868 = vunpack.c.l.b16 %v3819
        %v3869 = vunpack.c.h.b16 %v3819
        %v3870 = vunpack.c.l.b16 %v3820
        %v3871 = vunpack.c.h.b16 %v3820
        %v3872 = vunpack.c.l.b16 %v3821
        %v3873 = vunpack.c.h.b16 %v3821
        %v3874 = vunpack.c.l.b16 %v3822
        %v3875 = vunpack.c.h.b16 %v3822
        %v3876 = vunpack.c.l.b16 %v3823
        %v3877 = vunpack.c.h.b16 %v3823
        %v3878 = vpack.c.b16 %v3858, %v3856
        %v3879 = vpack.c.b16 %v3859, %v3857
        %v3880 = vpack.c.b16 %v3862, %v3860
        %v3881 = vpack.c.b16 %v3863, %v3861
        %v3882 = vpack.c.b16 %v3866, %v3864
        %v3883 = vpack.c.b16 %v3867, %v3865
        %v3884 = vpack.c.b16 %v3870, %v3868
        %v3885 = vpack.c.b16 %v3871, %v3869
        %v3886 = vpack.c.b16 %v3874, %v3872
        %v3887 = vpack.c.b16 %v3875, %v3873
        %v3888 = vpack.c.b16 %v3876, %v3876
        %v3889 = vpack.c.b16 %v3877, %v3877
        %v3901 = vsel %vm3502, %v3834, 0
        %v3904 = vsel %vm3502, %v3836, 0
        %v3907 = vsel %vm3502, %v3838, 0
        %v3910 = vsel %vm3502, %v3840, 0
        %v3913 = vsel %vm3502, %v3842, 0
        %v3916 = vsel %vm3502, %v3844, 0
        %v3919 = vsel %vm3502, %v3843, 0
        %v3922 = vsel %vm3524, %v3888, 0
        %v3925 = vsel %vm3524, %v3889, 0
        %3927 = vmatprep.subr.bf16.mxu0 0
        %3928 = vmatpush1.bf16.msra.mxu0 0
        %3929 = vmatprep.subr.bf16.mxu0 0
        %3930 = vmatpush1.bf16.msra.mxu0 0
        %3931 = vmatprep.subr.bf16.mxu0 %v3925
        %3932 = vmatpush1.bf16.msra.mxu0 %v3922
        %3933 = vmatprep.subr.bf16.mxu0 %v3887
        %3934 = vmatpush1.bf16.msra.mxu0 %v3886
        %3935 = vmatprep.subr.bf16.mxu0 %v3885
        %3936 = vmatpush1.bf16.msra.mxu0 %v3884
        %3937 = vmatprep.subr.bf16.mxu0 %v3883
        %3938 = vmatpush1.bf16.msra.mxu0 %v3882
        %3939 = vmatprep.subr.bf16.mxu0 %v3881
        %3940 = vmatpush1.bf16.msra.mxu0 %v3880
        %3941 = vmatprep.subr.bf16.mxu0 %v3879
        %3942 = vmatpush1.bf16.msra.mxu0 %v3878
        %3943 = vmatprep.subr.bf16.mxu0 0
        %3944 = vmatpush2.bf16.msra.mxu0 0
        %3945 = vmatprep.subr.bf16.mxu0 0
        %3946 = vmatpush2.bf16.msra.mxu0 0
        %3947 = vmatprep.subr.bf16.mxu0 0
        %3948 = vmatpush2.bf16.msra.mxu0 0
        %3949 = vmatprep.subr.bf16.mxu0 0
        %3950 = vmatpush2.bf16.msra.mxu0 0
        %3951 = vmatprep.subr.bf16.mxu0 0
        %3952 = vmatpush2.bf16.msra.mxu0 0
        %3953 = vmatprep.subr.bf16.mxu0 0
        %3954 = vmatpush2.bf16.msra.mxu0 0
        %3955 = vmatprep.subr.bf16.mxu0 0
        %3956 = vmatpush2.bf16.msra.mxu0 0
        %3957 = vmatprep.subr.bf16.mxu0 0
        %3958 = vmatpush2.bf16.msra.mxu0 0
        %3959 = vmatprep.mubr.bf16.mxu0 0
        %3960 = vmatmul.mubr.bf16.gmra.mxu0 %v3901
        %v3961 = vpop.f32.mrf.mxu0
        %v3962 = vadd.f32 0.0, %v3961
        %v3963 = vpop.f32.mrf.mxu0
        %v3964 = vadd.f32 0.0, %v3963
        %v3965 = vpop.f32.mrf.mxu0
        %v3966 = vadd.f32 0.0, %v3965
        %v3967 = vpop.f32.mrf.mxu0
        %v3968 = vadd.f32 0.0, %v3967
        %3969 = vmatprep.mubr.bf16.mxu0 0
        %3970 = vmatmul.mubr.bf16.gmra.mxu0 %v3904
        %v3971 = vpop.f32.mrf.mxu0
        %v3972 = vadd.f32 0.0, %v3971
        %v3973 = vpop.f32.mrf.mxu0
        %v3974 = vadd.f32 0.0, %v3973
        %v3975 = vpop.f32.mrf.mxu0
        %v3976 = vadd.f32 0.0, %v3975
        %v3977 = vpop.f32.mrf.mxu0
        %v3978 = vadd.f32 0.0, %v3977
        %3979 = vmatprep.mubr.bf16.mxu0 0
        %3980 = vmatmul.mubr.bf16.gmra.mxu0 %v3907
        %v3981 = vpop.f32.mrf.mxu0
        %v3982 = vadd.f32 0.0, %v3981
        %v3983 = vpop.f32.mrf.mxu0
        %v3984 = vadd.f32 0.0, %v3983
        %v3985 = vpop.f32.mrf.mxu0
        %v3986 = vadd.f32 0.0, %v3985
        %v3987 = vpop.f32.mrf.mxu0
        %v3988 = vadd.f32 0.0, %v3987
        %3989 = vmatprep.mubr.bf16.mxu0 0
        %3990 = vmatmul.mubr.bf16.gmra.mxu0 %v3910
        %v3991 = vpop.f32.mrf.mxu0
        %v3992 = vadd.f32 0.0, %v3991
        %v3993 = vpop.f32.mrf.mxu0
        %v3994 = vadd.f32 0.0, %v3993
        %v3995 = vpop.f32.mrf.mxu0
        %v3996 = vadd.f32 0.0, %v3995
        %v3997 = vpop.f32.mrf.mxu0
        %v3998 = vadd.f32 0.0, %v3997
        %3999 = vmatprep.mubr.bf16.mxu0 0
        %4000 = vmatmul.mubr.bf16.gmra.mxu0 %v3913
        %v4001 = vpop.f32.mrf.mxu0
        %v4002 = vadd.f32 0.0, %v4001
        %v4003 = vpop.f32.mrf.mxu0
        %v4004 = vadd.f32 0.0, %v4003
        %v4005 = vpop.f32.mrf.mxu0
        %v4006 = vadd.f32 0.0, %v4005
        %v4007 = vpop.f32.mrf.mxu0
        %v4008 = vadd.f32 0.0, %v4007
        %4009 = vmatprep.mubr.bf16.mxu0 0
        %4010 = vmatmul.mubr.bf16.gmra.mxu0 %v3916
        %v4011 = vpop.f32.mrf.mxu0
        %v4012 = vadd.f32 0.0, %v4011
        %v4013 = vpop.f32.mrf.mxu0
        %v4014 = vadd.f32 0.0, %v4013
        %v4015 = vpop.f32.mrf.mxu0
        %v4016 = vadd.f32 0.0, %v4015
        %v4017 = vpop.f32.mrf.mxu0
        %v4018 = vadd.f32 0.0, %v4017
        %4019 = vmatprep.mubr.bf16.mxu0 0
        %4020 = vmatmul.mubr.bf16.gmra.mxu0 %v3919
        %v4021 = vpop.f32.mrf.mxu0
        %v4022 = vadd.f32 0.0, %v4021
        %v4023 = vpop.f32.mrf.mxu0
        %v4024 = vadd.f32 0.0, %v4023
        %v4025 = vpop.f32.mrf.mxu0
        %v4026 = vadd.f32 0.0, %v4025
        %v4027 = vpop.f32.mrf.mxu0
        %v4028 = vadd.f32 0.0, %v4027
        %4029 = vdwg.mxu0
        %v4030 = vadd.f32 %v3744, %v3962
        %v4031 = vadd.f32 %v3746, %v3964
        %v4032 = vadd.f32 %v3748, %v3966
        %v4033 = vadd.f32 %v3750, %v3968
        %v4034 = vadd.f32 %v3754, %v3972
        %v4035 = vadd.f32 %v3756, %v3974
        %v4036 = vadd.f32 %v3758, %v3976
        %v4037 = vadd.f32 %v3760, %v3978
        %v4038 = vadd.f32 %v3764, %v3982
        %v4039 = vadd.f32 %v3766, %v3984
        %v4040 = vadd.f32 %v3768, %v3986
        %v4041 = vadd.f32 %v3770, %v3988
        %v4042 = vadd.f32 %v3774, %v3992
        %v4043 = vadd.f32 %v3776, %v3994
        %v4044 = vadd.f32 %v3778, %v3996
        %v4045 = vadd.f32 %v3780, %v3998
        %v4046 = vadd.f32 %v3784, %v4002
        %v4047 = vadd.f32 %v3786, %v4004
        %v4048 = vadd.f32 %v3788, %v4006
        %v4049 = vadd.f32 %v3790, %v4008
        %v4050 = vadd.f32 %v3794, %v4012
        %v4051 = vadd.f32 %v3796, %v4014
        %v4052 = vadd.f32 %v3798, %v4016
        %v4053 = vadd.f32 %v3800, %v4018
        %v4054 = vadd.f32 %v3804, %v4022
        %v4055 = vadd.f32 %v3806, %v4024
        %v4056 = vadd.f32 %v3808, %v4026
        %v4057 = vadd.f32 %v3810, %v4028
        %s4058 = scalar_lea.vmem %s5, 264
        %v4059 = vld [vmem:[%s4058] sm:$0xff]
        %v4060 = vld [vmem:[%s4058 + $0x8] sm:$0xff]
        %v4061 = vld [vmem:[%s4058 + $0x10] sm:$0xff]
        %v4062 = vld [vmem:[%s4058 + $0x18] sm:$0xff]
        %v4063 = vld [vmem:[%s4058 + $0x20] sm:$0xff]
        %v4064 = vld [vmem:[%s4058 + $0x28] sm:$0xff]
        %v4065 = vld [vmem:[%s4058 + $0x30] sm:$0xff]
        %v4066 = vld [vmem:[%s4058 + $0x38] sm:$0xff]
        %v4067 = vld [vmem:[%s4058 + $0x40] sm:$0xff]
        %v4068 = vld [vmem:[%s4058 + $0x48] sm:$0xff]
        %v4069 = vld [vmem:[%s4058 + $0x50] sm:$0x33]
        %vm4070 = vsmask.f32 6400
        %v4071 = vrot.slane %v3393, 1
        %v4072 = vrot.slane %v3395, 2
        %v4073 = vor.u32 %v4071, %v4072
        %v4074 = vrot.slane %v3404, 1
        %v4075 = vrot.slane %v3400, 2
        %v4076 = vor.u32 %v4074, %v4075
        %v4077 = vsel %vm4070, %v4073, %v4076
        %v4078 = vrot.slane %v3412, 1
        %v4079 = vrot.slane %v3408, 2
        %v4080 = vor.u32 %v4078, %v4079
        %v4081 = vsel %vm4070, %v4076, %v4080
        %v4082 = vrot.slane %v3420, 1
        %v4083 = vrot.slane %v3416, 2
        %v4084 = vor.u32 %v4082, %v4083
        %v4085 = vsel %vm4070, %v4080, %v4084
        %v4086 = vrot.slane %v3428, 1
        %v4087 = vrot.slane %v3424, 2
        %v4088 = vor.u32 %v4086, %v4087
        %v4089 = vsel %vm4070, %v4084, %v4088
        %v4090 = vrot.slane %v3436, 1
        %v4091 = vrot.slane %v3432, 2
        %v4092 = vor.u32 %v4090, %v4091
        %v4093 = vsel %vm4070, %v4088, %v4092
        %v4094 = vrot.slane %v3444, 1
        %v4095 = vrot.slane %v3440, 2
        %v4096 = vor.u32 %v4094, %v4095
        %v4097 = vsel %vm4070, %v4092, %v4096
        %v4109 = vunpack.c.l.b16 %v4059
        %v4110 = vunpack.c.h.b16 %v4059
        %v4111 = vunpack.c.l.b16 %v4060
        %v4112 = vunpack.c.h.b16 %v4060
        %v4113 = vunpack.c.l.b16 %v4061
        %v4114 = vunpack.c.h.b16 %v4061
        %v4115 = vunpack.c.l.b16 %v4062
        %v4116 = vunpack.c.h.b16 %v4062
        %v4117 = vunpack.c.l.b16 %v4063
        %v4118 = vunpack.c.h.b16 %v4063
        %v4119 = vunpack.c.l.b16 %v4064
        %v4120 = vunpack.c.h.b16 %v4064
        %v4121 = vunpack.c.l.b16 %v4065
        %v4122 = vunpack.c.h.b16 %v4065
        %v4123 = vunpack.c.l.b16 %v4066
        %v4124 = vunpack.c.h.b16 %v4066
        %v4125 = vunpack.c.l.b16 %v4067
        %v4126 = vunpack.c.h.b16 %v4067
        %v4127 = vunpack.c.l.b16 %v4068
        %v4128 = vunpack.c.h.b16 %v4068
        %v4129 = vunpack.c.l.b16 %v4069
        %v4130 = vunpack.c.h.b16 %v4069
        %v4131 = vpack.c.b16 %v4111, %v4109
        %v4132 = vpack.c.b16 %v4112, %v4110
        %v4133 = vpack.c.b16 %v4115, %v4113
        %v4134 = vpack.c.b16 %v4116, %v4114
        %v4135 = vpack.c.b16 %v4119, %v4117
        %v4136 = vpack.c.b16 %v4120, %v4118
        %v4137 = vpack.c.b16 %v4123, %v4121
        %v4138 = vpack.c.b16 %v4124, %v4122
        %v4139 = vpack.c.b16 %v4127, %v4125
        %v4140 = vpack.c.b16 %v4128, %v4126
        %v4141 = vpack.c.b16 %v4129, %v4129
        %v4142 = vpack.c.b16 %v4130, %v4130
        %v4154 = vsel %vm3502, %v4077, 0
        %v4157 = vsel %vm3502, %v4081, 0
        %v4160 = vsel %vm3502, %v4085, 0
        %v4163 = vsel %vm3502, %v4089, 0
        %v4166 = vsel %vm3502, %v4093, 0
        %v4169 = vsel %vm3502, %v4097, 0
        %v4172 = vsel %vm3502, %v4096, 0
        %v4175 = vsel %vm3524, %v4141, 0
        %v4178 = vsel %vm3524, %v4142, 0
        %4180 = vmatprep.subr.bf16.mxu0 0
        %4181 = vmatpush1.bf16.msra.mxu0 0
        %4182 = vmatprep.subr.bf16.mxu0 0
        %4183 = vmatpush1.bf16.msra.mxu0 0
        %4184 = vmatprep.subr.bf16.mxu0 %v4178
        %4185 = vmatpush1.bf16.msra.mxu0 %v4175
        %4186 = vmatprep.subr.bf16.mxu0 %v4140
        %4187 = vmatpush1.bf16.msra.mxu0 %v4139
        %4188 = vmatprep.subr.bf16.mxu0 %v4138
        %4189 = vmatpush1.bf16.msra.mxu0 %v4137
        %4190 = vmatprep.subr.bf16.mxu0 %v4136
        %4191 = vmatpush1.bf16.msra.mxu0 %v4135
        %4192 = vmatprep.subr.bf16.mxu0 %v4134
        %4193 = vmatpush1.bf16.msra.mxu0 %v4133
        %4194 = vmatprep.subr.bf16.mxu0 %v4132
        %4195 = vmatpush1.bf16.msra.mxu0 %v4131
        %4196 = vmatprep.subr.bf16.mxu0 0
        %4197 = vmatpush2.bf16.msra.mxu0 0
        %4198 = vmatprep.subr.bf16.mxu0 0
        %4199 = vmatpush2.bf16.msra.mxu0 0
        %4200 = vmatprep.subr.bf16.mxu0 0
        %4201 = vmatpush2.bf16.msra.mxu0 0
        %4202 = vmatprep.subr.bf16.mxu0 0
        %4203 = vmatpush2.bf16.msra.mxu0 0
        %4204 = vmatprep.subr.bf16.mxu0 0
        %4205 = vmatpush2.bf16.msra.mxu0 0
        %4206 = vmatprep.subr.bf16.mxu0 0
        %4207 = vmatpush2.bf16.msra.mxu0 0
        %4208 = vmatprep.subr.bf16.mxu0 0
        %4209 = vmatpush2.bf16.msra.mxu0 0
        %4210 = vmatprep.subr.bf16.mxu0 0
        %4211 = vmatpush2.bf16.msra.mxu0 0
        %4212 = vmatprep.mubr.bf16.mxu0 0
        %4213 = vmatmul.mubr.bf16.gmra.mxu0 %v4154
        %v4214 = vpop.f32.mrf.mxu0
        %v4215 = vadd.f32 0.0, %v4214
        %v4216 = vpop.f32.mrf.mxu0
        %v4217 = vadd.f32 0.0, %v4216
        %v4218 = vpop.f32.mrf.mxu0
        %v4219 = vadd.f32 0.0, %v4218
        %v4220 = vpop.f32.mrf.mxu0
        %v4221 = vadd.f32 0.0, %v4220
        %4222 = vmatprep.mubr.bf16.mxu0 0
        %4223 = vmatmul.mubr.bf16.gmra.mxu0 %v4157
        %v4224 = vpop.f32.mrf.mxu0
        %v4225 = vadd.f32 0.0, %v4224
        %v4226 = vpop.f32.mrf.mxu0
        %v4227 = vadd.f32 0.0, %v4226
        %v4228 = vpop.f32.mrf.mxu0
        %v4229 = vadd.f32 0.0, %v4228
        %v4230 = vpop.f32.mrf.mxu0
        %v4231 = vadd.f32 0.0, %v4230
        %4232 = vmatprep.mubr.bf16.mxu0 0
        %4233 = vmatmul.mubr.bf16.gmra.mxu0 %v4160
        %v4234 = vpop.f32.mrf.mxu0
        %v4235 = vadd.f32 0.0, %v4234
        %v4236 = vpop.f32.mrf.mxu0
        %v4237 = vadd.f32 0.0, %v4236
        %v4238 = vpop.f32.mrf.mxu0
        %v4239 = vadd.f32 0.0, %v4238
        %v4240 = vpop.f32.mrf.mxu0
        %v4241 = vadd.f32 0.0, %v4240
        %4242 = vmatprep.mubr.bf16.mxu0 0
        %4243 = vmatmul.mubr.bf16.gmra.mxu0 %v4163
        %v4244 = vpop.f32.mrf.mxu0
        %v4245 = vadd.f32 0.0, %v4244
        %v4246 = vpop.f32.mrf.mxu0
        %v4247 = vadd.f32 0.0, %v4246
        %v4248 = vpop.f32.mrf.mxu0
        %v4249 = vadd.f32 0.0, %v4248
        %v4250 = vpop.f32.mrf.mxu0
        %v4251 = vadd.f32 0.0, %v4250
        %4252 = vmatprep.mubr.bf16.mxu0 0
        %4253 = vmatmul.mubr.bf16.gmra.mxu0 %v4166
        %v4254 = vpop.f32.mrf.mxu0
        %v4255 = vadd.f32 0.0, %v4254
        %v4256 = vpop.f32.mrf.mxu0
        %v4257 = vadd.f32 0.0, %v4256
        %v4258 = vpop.f32.mrf.mxu0
        %v4259 = vadd.f32 0.0, %v4258
        %v4260 = vpop.f32.mrf.mxu0
        %v4261 = vadd.f32 0.0, %v4260
        %4262 = vmatprep.mubr.bf16.mxu0 0
        %4263 = vmatmul.mubr.bf16.gmra.mxu0 %v4169
        %v4264 = vpop.f32.mrf.mxu0
        %v4265 = vadd.f32 0.0, %v4264
        %v4266 = vpop.f32.mrf.mxu0
        %v4267 = vadd.f32 0.0, %v4266
        %v4268 = vpop.f32.mrf.mxu0
        %v4269 = vadd.f32 0.0, %v4268
        %v4270 = vpop.f32.mrf.mxu0
        %v4271 = vadd.f32 0.0, %v4270
        %4272 = vmatprep.mubr.bf16.mxu0 0
        %4273 = vmatmul.mubr.bf16.gmra.mxu0 %v4172
        %v4274 = vpop.f32.mrf.mxu0
        %v4275 = vadd.f32 0.0, %v4274
        %v4276 = vpop.f32.mrf.mxu0
        %v4277 = vadd.f32 0.0, %v4276
        %v4278 = vpop.f32.mrf.mxu0
        %v4279 = vadd.f32 0.0, %v4278
        %v4280 = vpop.f32.mrf.mxu0
        %v4281 = vadd.f32 0.0, %v4280
        %4282 = vdwg.mxu0
        %v4283 = vadd.f32 %v4030, %v4215
        %v4284 = vadd.f32 %v4031, %v4217
        %v4285 = vadd.f32 %v4032, %v4219
        %v4286 = vadd.f32 %v4033, %v4221
        %v4287 = vadd.f32 %v4034, %v4225
        %v4288 = vadd.f32 %v4035, %v4227
        %v4289 = vadd.f32 %v4036, %v4229
        %v4290 = vadd.f32 %v4037, %v4231
        %v4291 = vadd.f32 %v4038, %v4235
        %v4292 = vadd.f32 %v4039, %v4237
        %v4293 = vadd.f32 %v4040, %v4239
        %v4294 = vadd.f32 %v4041, %v4241
        %v4295 = vadd.f32 %v4042, %v4245
        %v4296 = vadd.f32 %v4043, %v4247
        %v4297 = vadd.f32 %v4044, %v4249
        %v4298 = vadd.f32 %v4045, %v4251
        %v4299 = vadd.f32 %v4046, %v4255
        %v4300 = vadd.f32 %v4047, %v4257
        %v4301 = vadd.f32 %v4048, %v4259
        %v4302 = vadd.f32 %v4049, %v4261
        %v4303 = vadd.f32 %v4050, %v4265
        %v4304 = vadd.f32 %v4051, %v4267
        %v4305 = vadd.f32 %v4052, %v4269
        %v4306 = vadd.f32 %v4053, %v4271
        %v4307 = vadd.f32 %v4054, %v4275
        %v4308 = vadd.f32 %v4055, %v4277
        %v4309 = vadd.f32 %v4056, %v4279
        %v4310 = vadd.f32 %v4057, %v4281
        %s4311 = scalar_lea.vmem %s5, 352
        %v4312 = vld [vmem:[%s4311] sm:$0xff]
        %v4313 = vld [vmem:[%s4311 + $0x8] sm:$0xff]
        %v4314 = vld [vmem:[%s4311 + $0x10] sm:$0xff]
        %v4315 = vld [vmem:[%s4311 + $0x18] sm:$0xff]
        %v4316 = vld [vmem:[%s4311 + $0x20] sm:$0xff]
        %v4317 = vld [vmem:[%s4311 + $0x28] sm:$0xff]
        %v4318 = vld [vmem:[%s4311 + $0x30] sm:$0xff]
        %v4319 = vld [vmem:[%s4311 + $0x38] sm:$0xff]
        %v4320 = vld [vmem:[%s4311 + $0x40] sm:$0xff]
        %v4321 = vld [vmem:[%s4311 + $0x48] sm:$0xff]
        %v4322 = vld [vmem:[%s4311 + $0x50] sm:$0x33]
        %vm4323 = vcmask 1045504
        %v4324 = vrot.slane %v3361, 2
        %v4325 = vrot.slane %v3362, 2
        %v4326 = vsel %vm4323, %v4324, %v4325
        %v4327 = vrot.slane %v3363, 2
        %v4328 = vsel %vm4323, %v4325, %v4327
        %v4329 = vrot.slane %v3364, 2
        %v4330 = vsel %vm4323, %v4327, %v4329
        %v4331 = vrot.slane %v3365, 2
        %v4332 = vsel %vm4323, %v4329, %v4331
        %v4333 = vrot.slane %v3366, 2
        %v4334 = vsel %vm4323, %v4331, %v4333
        %v4335 = vrot.slane %v3367, 2
        %v4336 = vsel %vm4323, %v4333, %v4335
        %v4348 = vunpack.c.l.b16 %v4312
        %v4349 = vunpack.c.h.b16 %v4312
        %v4350 = vunpack.c.l.b16 %v4313
        %v4351 = vunpack.c.h.b16 %v4313
        %v4352 = vunpack.c.l.b16 %v4314
        %v4353 = vunpack.c.h.b16 %v4314
        %v4354 = vunpack.c.l.b16 %v4315
        %v4355 = vunpack.c.h.b16 %v4315
        %v4356 = vunpack.c.l.b16 %v4316
        %v4357 = vunpack.c.h.b16 %v4316
        %v4358 = vunpack.c.l.b16 %v4317
        %v4359 = vunpack.c.h.b16 %v4317
        %v4360 = vunpack.c.l.b16 %v4318
        %v4361 = vunpack.c.h.b16 %v4318
        %v4362 = vunpack.c.l.b16 %v4319
        %v4363 = vunpack.c.h.b16 %v4319
        %v4364 = vunpack.c.l.b16 %v4320
        %v4365 = vunpack.c.h.b16 %v4320
        %v4366 = vunpack.c.l.b16 %v4321
        %v4367 = vunpack.c.h.b16 %v4321
        %v4368 = vunpack.c.l.b16 %v4322
        %v4369 = vunpack.c.h.b16 %v4322
        %v4370 = vpack.c.b16 %v4350, %v4348
        %v4371 = vpack.c.b16 %v4351, %v4349
        %v4372 = vpack.c.b16 %v4354, %v4352
        %v4373 = vpack.c.b16 %v4355, %v4353
        %v4374 = vpack.c.b16 %v4358, %v4356
        %v4375 = vpack.c.b16 %v4359, %v4357
        %v4376 = vpack.c.b16 %v4362, %v4360
        %v4377 = vpack.c.b16 %v4363, %v4361
        %v4378 = vpack.c.b16 %v4366, %v4364
        %v4379 = vpack.c.b16 %v4367, %v4365
        %v4380 = vpack.c.b16 %v4368, %v4368
        %v4381 = vpack.c.b16 %v4369, %v4369
        %v4393 = vsel %vm3502, %v4326, 0
        %v4396 = vsel %vm3502, %v4328, 0
        %v4399 = vsel %vm3502, %v4330, 0
        %v4402 = vsel %vm3502, %v4332, 0
        %v4405 = vsel %vm3502, %v4334, 0
        %v4408 = vsel %vm3502, %v4336, 0
        %v4411 = vsel %vm3502, %v4335, 0
        %v4414 = vsel %vm3524, %v4380, 0
        %v4417 = vsel %vm3524, %v4381, 0
        %4419 = vmatprep.subr.bf16.mxu0 0
        %4420 = vmatpush1.bf16.msra.mxu0 0
        %4421 = vmatprep.subr.bf16.mxu0 0
        %4422 = vmatpush1.bf16.msra.mxu0 0
        %4423 = vmatprep.subr.bf16.mxu0 %v4417
        %4424 = vmatpush1.bf16.msra.mxu0 %v4414
        %4425 = vmatprep.subr.bf16.mxu0 %v4379
        %4426 = vmatpush1.bf16.msra.mxu0 %v4378
        %4427 = vmatprep.subr.bf16.mxu0 %v4377
        %4428 = vmatpush1.bf16.msra.mxu0 %v4376
        %4429 = vmatprep.subr.bf16.mxu0 %v4375
        %4430 = vmatpush1.bf16.msra.mxu0 %v4374
        %4431 = vmatprep.subr.bf16.mxu0 %v4373
        %4432 = vmatpush1.bf16.msra.mxu0 %v4372
        %4433 = vmatprep.subr.bf16.mxu0 %v4371
        %4434 = vmatpush1.bf16.msra.mxu0 %v4370
        %4435 = vmatprep.subr.bf16.mxu0 0
        %4436 = vmatpush2.bf16.msra.mxu0 0
        %4437 = vmatprep.subr.bf16.mxu0 0
        %4438 = vmatpush2.bf16.msra.mxu0 0
        %4439 = vmatprep.subr.bf16.mxu0 0
        %4440 = vmatpush2.bf16.msra.mxu0 0
        %4441 = vmatprep.subr.bf16.mxu0 0
        %4442 = vmatpush2.bf16.msra.mxu0 0
        %4443 = vmatprep.subr.bf16.mxu0 0
        %4444 = vmatpush2.bf16.msra.mxu0 0
        %4445 = vmatprep.subr.bf16.mxu0 0
        %4446 = vmatpush2.bf16.msra.mxu0 0
        %4447 = vmatprep.subr.bf16.mxu0 0
        %4448 = vmatpush2.bf16.msra.mxu0 0
        %4449 = vmatprep.subr.bf16.mxu0 0
        %4450 = vmatpush2.bf16.msra.mxu0 0
        %4451 = vmatprep.mubr.bf16.mxu0 0
        %4452 = vmatmul.mubr.bf16.gmra.mxu0 %v4393
        %v4453 = vpop.f32.mrf.mxu0
        %v4454 = vadd.f32 0.0, %v4453
        %v4455 = vpop.f32.mrf.mxu0
        %v4456 = vadd.f32 0.0, %v4455
        %v4457 = vpop.f32.mrf.mxu0
        %v4458 = vadd.f32 0.0, %v4457
        %v4459 = vpop.f32.mrf.mxu0
        %v4460 = vadd.f32 0.0, %v4459
        %4461 = vmatprep.mubr.bf16.mxu0 0
        %4462 = vmatmul.mubr.bf16.gmra.mxu0 %v4396
        %v4463 = vpop.f32.mrf.mxu0
        %v4464 = vadd.f32 0.0, %v4463
        %v4465 = vpop.f32.mrf.mxu0
        %v4466 = vadd.f32 0.0, %v4465
        %v4467 = vpop.f32.mrf.mxu0
        %v4468 = vadd.f32 0.0, %v4467
        %v4469 = vpop.f32.mrf.mxu0
        %v4470 = vadd.f32 0.0, %v4469
        %4471 = vmatprep.mubr.bf16.mxu0 0
        %4472 = vmatmul.mubr.bf16.gmra.mxu0 %v4399
        %v4473 = vpop.f32.mrf.mxu0
        %v4474 = vadd.f32 0.0, %v4473
        %v4475 = vpop.f32.mrf.mxu0
        %v4476 = vadd.f32 0.0, %v4475
        %v4477 = vpop.f32.mrf.mxu0
        %v4478 = vadd.f32 0.0, %v4477
        %v4479 = vpop.f32.mrf.mxu0
        %v4480 = vadd.f32 0.0, %v4479
        %4481 = vmatprep.mubr.bf16.mxu0 0
        %4482 = vmatmul.mubr.bf16.gmra.mxu0 %v4402
        %v4483 = vpop.f32.mrf.mxu0
        %v4484 = vadd.f32 0.0, %v4483
        %v4485 = vpop.f32.mrf.mxu0
        %v4486 = vadd.f32 0.0, %v4485
        %v4487 = vpop.f32.mrf.mxu0
        %v4488 = vadd.f32 0.0, %v4487
        %v4489 = vpop.f32.mrf.mxu0
        %v4490 = vadd.f32 0.0, %v4489
        %4491 = vmatprep.mubr.bf16.mxu0 0
        %4492 = vmatmul.mubr.bf16.gmra.mxu0 %v4405
        %v4493 = vpop.f32.mrf.mxu0
        %v4494 = vadd.f32 0.0, %v4493
        %v4495 = vpop.f32.mrf.mxu0
        %v4496 = vadd.f32 0.0, %v4495
        %v4497 = vpop.f32.mrf.mxu0
        %v4498 = vadd.f32 0.0, %v4497
        %v4499 = vpop.f32.mrf.mxu0
        %v4500 = vadd.f32 0.0, %v4499
        %4501 = vmatprep.mubr.bf16.mxu0 0
        %4502 = vmatmul.mubr.bf16.gmra.mxu0 %v4408
        %v4503 = vpop.f32.mrf.mxu0
        %v4504 = vadd.f32 0.0, %v4503
        %v4505 = vpop.f32.mrf.mxu0
        %v4506 = vadd.f32 0.0, %v4505
        %v4507 = vpop.f32.mrf.mxu0
        %v4508 = vadd.f32 0.0, %v4507
        %v4509 = vpop.f32.mrf.mxu0
        %v4510 = vadd.f32 0.0, %v4509
        %4511 = vmatprep.mubr.bf16.mxu0 0
        %4512 = vmatmul.mubr.bf16.gmra.mxu0 %v4411
        %v4513 = vpop.f32.mrf.mxu0
        %v4514 = vadd.f32 0.0, %v4513
        %v4515 = vpop.f32.mrf.mxu0
        %v4516 = vadd.f32 0.0, %v4515
        %v4517 = vpop.f32.mrf.mxu0
        %v4518 = vadd.f32 0.0, %v4517
        %v4519 = vpop.f32.mrf.mxu0
        %v4520 = vadd.f32 0.0, %v4519
        %4521 = vdwg.mxu0
        %v4522 = vadd.f32 %v4283, %v4454
        %v4523 = vadd.f32 %v4284, %v4456
        %v4524 = vadd.f32 %v4285, %v4458
        %v4525 = vadd.f32 %v4286, %v4460
        %v4526 = vadd.f32 %v4287, %v4464
        %v4527 = vadd.f32 %v4288, %v4466
        %v4528 = vadd.f32 %v4289, %v4468
        %v4529 = vadd.f32 %v4290, %v4470
        %v4530 = vadd.f32 %v4291, %v4474
        %v4531 = vadd.f32 %v4292, %v4476
        %v4532 = vadd.f32 %v4293, %v4478
        %v4533 = vadd.f32 %v4294, %v4480
        %v4534 = vadd.f32 %v4295, %v4484
        %v4535 = vadd.f32 %v4296, %v4486
        %v4536 = vadd.f32 %v4297, %v4488
        %v4537 = vadd.f32 %v4298, %v4490
        %v4538 = vadd.f32 %v4299, %v4494
        %v4539 = vadd.f32 %v4300, %v4496
        %v4540 = vadd.f32 %v4301, %v4498
        %v4541 = vadd.f32 %v4302, %v4500
        %v4542 = vadd.f32 %v4303, %v4504
        %v4543 = vadd.f32 %v4304, %v4506
        %v4544 = vadd.f32 %v4305, %v4508
        %v4545 = vadd.f32 %v4306, %v4510
        %v4546 = vadd.f32 %v4307, %v4514
        %v4547 = vadd.f32 %v4308, %v4516
        %v4548 = vadd.f32 %v4309, %v4518
        %v4549 = vadd.f32 %v4310, %v4520
        %v4550 = vld [vmem:[%s6] sm:$0x3]
        %v4552 = vlaneseq
        %v4553 = vshrl.u32 %v4552, 7
        %v4554 = vsub.s32 0, %v4553
        %v4555 = vrot.slane %v4550, %v4554
        %v4556 = vlaneseq
        %v4557 = vshrl.u32 %v4556, 7
        %v4558 = vsub.s32 1, %v4557
        %v4559 = vrot.slane %v4550, %v4558
        %v4562 = vadd.f32 %v4522, %v4555
        %v4563 = vadd.f32 %v4523, %v4559
        %v4564 = vadd.f32 %v4524, %v4555
        %v4565 = vadd.f32 %v4525, %v4559
        %v4566 = vadd.f32 %v4526, %v4555
        %v4567 = vadd.f32 %v4527, %v4559
        %v4568 = vadd.f32 %v4528, %v4555
        %v4569 = vadd.f32 %v4529, %v4559
        %v4570 = vadd.f32 %v4530, %v4555
        %v4571 = vadd.f32 %v4531, %v4559
        %v4572 = vadd.f32 %v4532, %v4555
        %v4573 = vadd.f32 %v4533, %v4559
        %v4574 = vadd.f32 %v4534, %v4555
        %v4575 = vadd.f32 %v4535, %v4559
        %v4576 = vadd.f32 %v4536, %v4555
        %v4577 = vadd.f32 %v4537, %v4559
        %v4578 = vadd.f32 %v4538, %v4555
        %v4579 = vadd.f32 %v4539, %v4559
        %v4580 = vadd.f32 %v4540, %v4555
        %v4581 = vadd.f32 %v4541, %v4559
        %v4582 = vadd.f32 %v4542, %v4555
        %v4583 = vadd.f32 %v4543, %v4559
        %v4584 = vadd.f32 %v4544, %v4555
        %v4585 = vadd.f32 %v4545, %v4559
        %v4586 = vadd.f32 %v4546, %v4555
        %v4587 = vadd.f32 %v4547, %v4559
        %v4588 = vadd.f32 %v4548, %v4555
        %v4589 = vadd.f32 %v4549, %v4559
        %v4590 = vmax.f32 %v4562, 0.0
        %v4591 = vmax.f32 %v4563, 0.0
        %v4592 = vmax.f32 %v4564, 0.0
        %v4593 = vmax.f32 %v4565, 0.0
        %v4594 = vmax.f32 %v4566, 0.0
        %v4595 = vmax.f32 %v4567, 0.0
        %v4596 = vmax.f32 %v4568, 0.0
        %v4597 = vmax.f32 %v4569, 0.0
        %v4598 = vmax.f32 %v4570, 0.0
        %v4599 = vmax.f32 %v4571, 0.0
        %v4600 = vmax.f32 %v4572, 0.0
        %v4601 = vmax.f32 %v4573, 0.0
        %v4602 = vmax.f32 %v4574, 0.0
        %v4603 = vmax.f32 %v4575, 0.0
        %v4604 = vmax.f32 %v4576, 0.0
        %v4605 = vmax.f32 %v4577, 0.0
        %v4606 = vmax.f32 %v4578, 0.0
        %v4607 = vmax.f32 %v4579, 0.0
        %v4608 = vmax.f32 %v4580, 0.0
        %v4609 = vmax.f32 %v4581, 0.0
        %v4610 = vmax.f32 %v4582, 0.0
        %v4611 = vmax.f32 %v4583, 0.0
        %v4612 = vmax.f32 %v4584, 0.0
        %v4613 = vmax.f32 %v4585, 0.0
        %v4614 = vmax.f32 %v4586, 0.0
        %v4615 = vmax.f32 %v4587, 0.0
        %v4616 = vmax.f32 %v4588, 0.0
        %v4617 = vmax.f32 %v4589, 0.0
        %v4618 = vpack.c.bf16 %v4592, %v4590
        %v4619 = vpack.c.bf16 %v4593, %v4591
        %v4620 = vpack.c.bf16 %v4596, %v4594
        %v4621 = vpack.c.bf16 %v4597, %v4595
        %v4622 = vpack.c.bf16 %v4600, %v4598
        %v4623 = vpack.c.bf16 %v4601, %v4599
        %v4624 = vpack.c.bf16 %v4604, %v4602
        %v4625 = vpack.c.bf16 %v4605, %v4603
        %v4626 = vpack.c.bf16 %v4608, %v4606
        %v4627 = vpack.c.bf16 %v4609, %v4607
        %v4628 = vpack.c.bf16 %v4612, %v4610
        %v4629 = vpack.c.bf16 %v4613, %v4611
        %v4630 = vpack.c.bf16 %v4616, %v4614
        %v4631 = vpack.c.bf16 %v4617, %v4615
        %v4632 = vld [vmem:[%s7] sm:$0xf]
        %v4633 = vld [vmem:[%s7 + $0x4] sm:$0xf]
        %v4634 = vld [vmem:[%s7 + $0x8] sm:$0xf]
        %v4635 = vld [vmem:[%s7 + $0xc] sm:$0xf]
        %v4636 = vld [vmem:[%s7 + $0x10] sm:$0xf]
        %v4637 = vld [vmem:[%s7 + $0x14] sm:$0xf]
        %v4638 = vld [vmem:[%s7 + $0x18] sm:$0xf]
        %v4639 = vld [vmem:[%s7 + $0x1c] sm:$0xf]
        %v4640 = vld [vmem:[%s7 + $0x20] sm:$0xf]
        %v4641 = vld [vmem:[%s7 + $0x24] sm:$0xf]
        %v4652 = vunpack.c.l.b16 %v4632
        %v4653 = vunpack.c.l.b16 %v4633
        %v4654 = vunpack.c.l.b16 %v4634
        %v4655 = vunpack.c.l.b16 %v4635
        %v4656 = vunpack.c.l.b16 %v4636
        %v4657 = vunpack.c.l.b16 %v4637
        %v4658 = vunpack.c.l.b16 %v4638
        %v4659 = vunpack.c.l.b16 %v4639
        %v4660 = vunpack.c.l.b16 %v4640
        %v4661 = vunpack.c.l.b16 %v4641
        %v4662 = vpack.c.b16 %v4653, %v4652
        %v4663 = vpack.c.b16 %v4655, %v4654
        %v4664 = vpack.c.b16 %v4657, %v4656
        %v4665 = vpack.c.b16 %v4659, %v4658
        %v4666 = vpack.c.b16 %v4661, %v4660
        %vm4667 = vcmask 883712
        %v4669 = vsel %vm4667, %v4662, 0
        %v4672 = vsel %vm4667, %v4663, 0
        %v4675 = vsel %vm4667, %v4664, 0
        %v4678 = vsel %vm4667, %v4665, 0
        %v4681 = vsel %vm4667, %v4666, 0
        %v4684 = vsel %vm2867, %v4630, 0
        %v4687 = vsel %vm2867, %v4631, 0
        %4689 = vmatprep.subr.bf16.mxu0 0
        %4690 = vmatpush1.bf16.msra.mxu0 0
        %4691 = vmatprep.subr.bf16.mxu0 %v4687
        %4692 = vmatpush1.bf16.msra.mxu0 %v4684
        %4693 = vmatprep.subr.bf16.mxu0 %v4629
        %4694 = vmatpush1.bf16.msra.mxu0 %v4628
        %4695 = vmatprep.subr.bf16.mxu0 %v4627
        %4696 = vmatpush1.bf16.msra.mxu0 %v4626
        %4697 = vmatprep.subr.bf16.mxu0 %v4625
        %4698 = vmatpush1.bf16.msra.mxu0 %v4624
        %4699 = vmatprep.subr.bf16.mxu0 %v4623
        %4700 = vmatpush1.bf16.msra.mxu0 %v4622
        %4701 = vmatprep.subr.bf16.mxu0 %v4621
        %4702 = vmatpush1.bf16.msra.mxu0 %v4620
        %4703 = vmatprep.subr.bf16.mxu0 %v4619
        %4704 = vmatpush1.bf16.msra.mxu0 %v4618
        %4705 = vmatprep.subr.bf16.mxu0 0
        %4706 = vmatpush2.bf16.msra.mxu0 0
        %4707 = vmatprep.subr.bf16.mxu0 0
        %4708 = vmatpush2.bf16.msra.mxu0 0
        %4709 = vmatprep.subr.bf16.mxu0 0
        %4710 = vmatpush2.bf16.msra.mxu0 0
        %4711 = vmatprep.subr.bf16.mxu0 0
        %4712 = vmatpush2.bf16.msra.mxu0 0
        %4713 = vmatprep.subr.bf16.mxu0 0
        %4714 = vmatpush2.bf16.msra.mxu0 0
        %4715 = vmatprep.subr.bf16.mxu0 0
        %4716 = vmatpush2.bf16.msra.mxu0 0
        %4717 = vmatprep.subr.bf16.mxu0 0
        %4718 = vmatpush2.bf16.msra.mxu0 0
        %4719 = vmatprep.subr.bf16.mxu0 0
        %4720 = vmatpush2.bf16.msra.mxu0 0
        %4721 = vmatprep.mubr.bf16.mxu0 0
        %4722 = vmatmul.mubr.bf16.gmra.mxu0 %v4669
        %v4723 = vpop.f32.mrf.mxu0
        %v4724 = vadd.f32 0.0, %v4723
        %v4725 = vpop.f32.mrf.mxu0
        %v4726 = vadd.f32 0.0, %v4725
        %v4727 = vpop.f32.mrf.mxu0
        %v4728 = vadd.f32 0.0, %v4727
        %v4729 = vpop.f32.mrf.mxu0
        %v4730 = vadd.f32 0.0, %v4729
        %4731 = vmatprep.mubr.bf16.mxu0 0
        %4732 = vmatmul.mubr.bf16.gmra.mxu0 %v4672
        %v4733 = vpop.f32.mrf.mxu0
        %v4734 = vadd.f32 0.0, %v4733
        %v4735 = vpop.f32.mrf.mxu0
        %v4736 = vadd.f32 0.0, %v4735
        %v4737 = vpop.f32.mrf.mxu0
        %v4738 = vadd.f32 0.0, %v4737
        %v4739 = vpop.f32.mrf.mxu0
        %v4740 = vadd.f32 0.0, %v4739
        %4741 = vmatprep.mubr.bf16.mxu0 0
        %4742 = vmatmul.mubr.bf16.gmra.mxu0 %v4675
        %v4743 = vpop.f32.mrf.mxu0
        %v4744 = vadd.f32 0.0, %v4743
        %v4745 = vpop.f32.mrf.mxu0
        %v4746 = vadd.f32 0.0, %v4745
        %v4747 = vpop.f32.mrf.mxu0
        %v4748 = vadd.f32 0.0, %v4747
        %v4749 = vpop.f32.mrf.mxu0
        %v4750 = vadd.f32 0.0, %v4749
        %4751 = vmatprep.mubr.bf16.mxu0 0
        %4752 = vmatmul.mubr.bf16.gmra.mxu0 %v4678
        %v4753 = vpop.f32.mrf.mxu0
        %v4754 = vadd.f32 0.0, %v4753
        %v4755 = vpop.f32.mrf.mxu0
        %v4756 = vadd.f32 0.0, %v4755
        %v4757 = vpop.f32.mrf.mxu0
        %v4758 = vadd.f32 0.0, %v4757
        %v4759 = vpop.f32.mrf.mxu0
        %v4760 = vadd.f32 0.0, %v4759
        %4761 = vmatprep.mubr.bf16.mxu0 0
        %4762 = vmatmul.mubr.bf16.gmra.mxu0 %v4681
        %v4763 = vpop.f32.mrf.mxu0
        %v4764 = vadd.f32 0.0, %v4763
        %v4765 = vpop.f32.mrf.mxu0
        %v4766 = vadd.f32 0.0, %v4765
        %v4767 = vpop.f32.mrf.mxu0
        %v4768 = vadd.f32 0.0, %v4767
        %v4769 = vpop.f32.mrf.mxu0
        %v4770 = vadd.f32 0.0, %v4769
        %4771 = vdwg.mxu0
        %v4772 = vmax.f32 %v4724, %v4748
        %v4773 = vmax.f32 %v4726, %v4750
        %v4774 = vmax.f32 %v4728, %v4754
        %v4775 = vmax.f32 %v4730, %v4756
        %v4776 = vmax.f32 %v4734, %v4758
        %v4777 = vmax.f32 %v4736, %v4760
        %v4778 = vmax.f32 %v4738, %v4764
        %v4779 = vmax.f32 %v4740, %v4766
        %v4780 = vmax.f32 %v4744, %v4768
        %v4781 = vmax.f32 %v4746, %v4770
        %v4782 = vpack.c.bf16 %v4774, %v4772
        %v4783 = vpack.c.bf16 %v4775, %v4773
        %v4784 = vpack.c.bf16 %v4778, %v4776
        %v4785 = vpack.c.bf16 %v4779, %v4777
        %v4786 = vpack.c.bf16 %v4780, %v4780
        %v4787 = vpack.c.bf16 %v4781, %v4781
        %v4788 = vld [vmem:[%s8] sm:$0xff]
        %v4789 = vld [vmem:[%s8 + $0x8] sm:$0xff]
        %v4790 = vld [vmem:[%s8 + $0x10] sm:$0xff]
        %v4791 = vld [vmem:[%s8 + $0x18] sm:$0xff]
        %v4792 = vld [vmem:[%s8 + $0x20] sm:$0xff]
        %v4793 = vld [vmem:[%s8 + $0x28] sm:$0xff]
        %v4794 = vld [vmem:[%s8 + $0x30] sm:$0xff]
        %v4795 = vld [vmem:[%s8 + $0x38] sm:$0xff]
        %v4796 = vld [vmem:[%s8 + $0x40] sm:$0xff]
        %v4797 = vld [vmem:[%s8 + $0x48] sm:$0xff]
        %v4798 = vld [vmem:[%s8 + $0x50] sm:$0xff]
        %v4799 = vld [vmem:[%s8 + $0x58] sm:$0xff]
        %v4800 = vld [vmem:[%s8 + $0x60] sm:$0xff]
        %v4801 = vld [vmem:[%s8 + $0x68] sm:$0xff]
        %v4802 = vld [vmem:[%s8 + $0x70] sm:$0xff]
        %v4803 = vld [vmem:[%s8 + $0x78] sm:$0xff]
        %v4804 = vld [vmem:[%s8 + $0x80] sm:$0xff]
        %v4805 = vld [vmem:[%s8 + $0x88] sm:$0xff]
        %v4806 = vld [vmem:[%s8 + $0x90] sm:$0xff]
        %v4807 = vld [vmem:[%s8 + $0x98] sm:$0xff]
        %v4828 = vunpack.c.l.b16 %v4788
        %v4829 = vunpack.c.h.b16 %v4788
        %v4830 = vunpack.c.l.b16 %v4789
        %v4831 = vunpack.c.h.b16 %v4789
        %v4832 = vunpack.c.l.b16 %v4790
        %v4833 = vunpack.c.h.b16 %v4790
        %v4834 = vunpack.c.l.b16 %v4791
        %v4835 = vunpack.c.h.b16 %v4791
        %v4836 = vunpack.c.l.b16 %v4792
        %v4837 = vunpack.c.h.b16 %v4792
        %v4838 = vunpack.c.l.b16 %v4793
        %v4839 = vunpack.c.h.b16 %v4793
        %v4840 = vunpack.c.l.b16 %v4794
        %v4841 = vunpack.c.h.b16 %v4794
        %v4842 = vunpack.c.l.b16 %v4795
        %v4843 = vunpack.c.h.b16 %v4795
        %v4844 = vunpack.c.l.b16 %v4796
        %v4845 = vunpack.c.h.b16 %v4796
        %v4846 = vunpack.c.l.b16 %v4797
        %v4847 = vunpack.c.h.b16 %v4797
        %v4848 = vunpack.c.l.b16 %v4798
        %v4849 = vunpack.c.h.b16 %v4798
        %v4850 = vunpack.c.l.b16 %v4799
        %v4851 = vunpack.c.h.b16 %v4799
        %v4852 = vunpack.c.l.b16 %v4800
        %v4853 = vunpack.c.h.b16 %v4800
        %v4854 = vunpack.c.l.b16 %v4801
        %v4855 = vunpack.c.h.b16 %v4801
        %v4856 = vunpack.c.l.b16 %v4802
        %v4857 = vunpack.c.h.b16 %v4802
        %v4858 = vunpack.c.l.b16 %v4803
        %v4859 = vunpack.c.h.b16 %v4803
        %v4860 = vunpack.c.l.b16 %v4804
        %v4861 = vunpack.c.h.b16 %v4804
        %v4862 = vunpack.c.l.b16 %v4805
        %v4863 = vunpack.c.h.b16 %v4805
        %v4864 = vunpack.c.l.b16 %v4806
        %v4865 = vunpack.c.h.b16 %v4806
        %v4866 = vunpack.c.l.b16 %v4807
        %v4867 = vunpack.c.h.b16 %v4807
        %v4868 = vpack.c.b16 %v4830, %v4828
        %v4869 = vpack.c.b16 %v4831, %v4829
        %v4870 = vpack.c.b16 %v4834, %v4832
        %v4871 = vpack.c.b16 %v4835, %v4833
        %v4872 = vpack.c.b16 %v4838, %v4836
        %v4873 = vpack.c.b16 %v4839, %v4837
        %v4874 = vpack.c.b16 %v4842, %v4840
        %v4875 = vpack.c.b16 %v4843, %v4841
        %v4876 = vpack.c.b16 %v4846, %v4844
        %v4877 = vpack.c.b16 %v4847, %v4845
        %v4878 = vpack.c.b16 %v4850, %v4848
        %v4879 = vpack.c.b16 %v4851, %v4849
        %v4880 = vpack.c.b16 %v4854, %v4852
        %v4881 = vpack.c.b16 %v4855, %v4853
        %v4882 = vpack.c.b16 %v4858, %v4856
        %v4883 = vpack.c.b16 %v4859, %v4857
        %v4884 = vpack.c.b16 %v4862, %v4860
        %v4885 = vpack.c.b16 %v4863, %v4861
        %v4886 = vpack.c.b16 %v4866, %v4864
        %v4887 = vpack.c.b16 %v4867, %v4865
        %vm4908 = vcmask 261120
        %v4910 = vsel %vm4908, %v4783, 0
        %v4913 = vsel %vm4908, %v4785, 0
        %v4916 = vsel %vm4908, %v4787, 0
        %4918 = vmatprep.subr.bf16.mxu0 %v4883
        %4919 = vmatpush1.bf16.msra.mxu0 %v4882
        %4920 = vmatprep.subr.bf16.mxu0 %v4881
        %4921 = vmatpush1.bf16.msra.mxu0 %v4880
        %4922 = vmatprep.subr.bf16.mxu0 %v4879
        %4923 = vmatpush1.bf16.msra.mxu0 %v4878
        %4924 = vmatprep.subr.bf16.mxu0 %v4877
        %4925 = vmatpush1.bf16.msra.mxu0 %v4876
        %4926 = vmatprep.subr.bf16.mxu0 %v4875
        %4927 = vmatpush1.bf16.msra.mxu0 %v4874
        %4928 = vmatprep.subr.bf16.mxu0 %v4873
        %4929 = vmatpush1.bf16.msra.mxu0 %v4872
        %4930 = vmatprep.subr.bf16.mxu0 %v4871
        %4931 = vmatpush1.bf16.msra.mxu0 %v4870
        %4932 = vmatprep.subr.bf16.mxu0 %v4869
        %4933 = vmatpush1.bf16.msra.mxu0 %v4868
        %4934 = vmatprep.subr.bf16.mxu0 0
        %4935 = vmatpush2.bf16.msra.mxu0 0
        %4936 = vmatprep.subr.bf16.mxu0 0
        %4937 = vmatpush2.bf16.msra.mxu0 0
        %4938 = vmatprep.subr.bf16.mxu0 0
        %4939 = vmatpush2.bf16.msra.mxu0 0
        %4940 = vmatprep.subr.bf16.mxu0 0
        %4941 = vmatpush2.bf16.msra.mxu0 0
        %4942 = vmatprep.subr.bf16.mxu0 0
        %4943 = vmatpush2.bf16.msra.mxu0 0
        %4944 = vmatprep.subr.bf16.mxu0 0
        %4945 = vmatpush2.bf16.msra.mxu0 0
        %4946 = vmatprep.subr.bf16.mxu0 %v4887
        %4947 = vmatpush2.bf16.msra.mxu0 %v4886
        %4948 = vmatprep.subr.bf16.mxu0 %v4885
        %4949 = vmatpush2.bf16.msra.mxu0 %v4884
        %4950 = vmatprep.mubr.bf16.mxu0 %v4910
        %4951 = vmatmul.mubr.bf16.gmra.mxu0 %v4782
        %v4952 = vpop.f32.mrf.mxu0
        %v4953 = vadd.f32 0.0, %v4952
        %v4954 = vpop.f32.mrf.mxu0
        %v4955 = vadd.f32 0.0, %v4954
        %v4956 = vpop.f32.mrf.mxu0
        %v4957 = vadd.f32 0.0, %v4956
        %v4958 = vpop.f32.mrf.mxu0
        %v4959 = vadd.f32 0.0, %v4958
        %4960 = vmatprep.mubr.bf16.mxu0 %v4913
        %4961 = vmatmul.mubr.bf16.gmra.mxu0 %v4784
        %v4962 = vpop.f32.mrf.mxu0
        %v4963 = vadd.f32 0.0, %v4962
        %v4964 = vpop.f32.mrf.mxu0
        %v4965 = vadd.f32 0.0, %v4964
        %v4966 = vpop.f32.mrf.mxu0
        %v4967 = vadd.f32 0.0, %v4966
        %v4968 = vpop.f32.mrf.mxu0
        %v4969 = vadd.f32 0.0, %v4968
        %4970 = vmatprep.mubr.bf16.mxu0 %v4916
        %4971 = vmatmul.mubr.bf16.gmra.mxu0 %v4786
        %v4972 = vpop.f32.mrf.mxu0
        %v4973 = vadd.f32 0.0, %v4972
        %v4974 = vpop.f32.mrf.mxu0
        %v4975 = vadd.f32 0.0, %v4974
        %v4976 = vpop.f32.mrf.mxu0
        %v4977 = vpop.f32.mrf.mxu0
        %4978 = vdwg.mxu0
        %v4979 = vmax.f32 %v4953, %v4955
        %v4980 = vmax.f32 %v4957, %v4959
        %v4981 = vmax.f32 %v4963, %v4965
        %v4982 = vmax.f32 %v4967, %v4969
        %v4983 = vmax.f32 %v4973, %v4975
        %v4984 = vpack.c.bf16 %v4979, %v4979
        %v4985 = vld [vmem:[%s9] sm:$0xf]
        %v4986 = vld [vmem:[%s9 + $0x4] sm:$0xf]
        %v4987 = vld [vmem:[%s9 + $0x8] sm:$0xf]
        %v4988 = vld [vmem:[%s9 + $0xc] sm:$0xf]
        %v4989 = vld [vmem:[%s9 + $0x10] sm:$0xf]
        %v4990 = vld [vmem:[%s9 + $0x14] sm:$0xf]
        %v4991 = vld [vmem:[%s9 + $0x18] sm:$0xf]
        %v4992 = vld [vmem:[%s9 + $0x1c] sm:$0xf]
        %v4993 = vld [vmem:[%s9 + $0x20] sm:$0xf]
        %v4994 = vld [vmem:[%s9 + $0x24] sm:$0xf]
        %v4995 = vpack.c.bf16 %v4980, %v4980
        %s4996 = scalar_lea.vmem %s9, 40
        %v4997 = vld [vmem:[%s4996] sm:$0xf]
        %v4998 = vld [vmem:[%s4996 + $0x4] sm:$0xf]
        %v4999 = vld [vmem:[%s4996 + $0x8] sm:$0xf]
        %v5000 = vld [vmem:[%s4996 + $0xc] sm:$0xf]
        %v5001 = vld [vmem:[%s4996 + $0x10] sm:$0xf]
        %v5002 = vld [vmem:[%s4996 + $0x14] sm:$0xf]
        %v5003 = vld [vmem:[%s4996 + $0x18] sm:$0xf]
        %v5004 = vld [vmem:[%s4996 + $0x1c] sm:$0xf]
        %v5005 = vld [vmem:[%s4996 + $0x20] sm:$0xf]
        %v5006 = vld [vmem:[%s4996 + $0x24] sm:$0xf]
        %v5017 = vunpack.c.l.b16 %v4997
        %v5018 = vunpack.c.l.b16 %v4998
        %v5019 = vunpack.c.l.b16 %v4999
        %v5020 = vunpack.c.l.b16 %v5000
        %v5021 = vunpack.c.l.b16 %v5001
        %v5022 = vunpack.c.l.b16 %v5002
        %v5023 = vunpack.c.l.b16 %v5003
        %v5024 = vunpack.c.l.b16 %v5004
        %v5025 = vunpack.c.l.b16 %v5005
        %v5026 = vunpack.c.l.b16 %v5006
        %v5027 = vpack.c.b16 %v5018, %v5017
        %v5028 = vpack.c.b16 %v5020, %v5019
        %v5029 = vpack.c.b16 %v5022, %v5021
        %v5030 = vpack.c.b16 %v5024, %v5023
        %v5031 = vpack.c.b16 %v5026, %v5025
        %vm5037 = vcmask 654336
        %v5039 = vsel %vm5037, %v4995, 0
        %5041 = vmatprep.subr.bf16.mxu0 0
        %5042 = vmatpush1.bf16.msra.mxu0 0
        %5043 = vmatprep.subr.bf16.mxu0 0
        %5044 = vmatpush1.bf16.msra.mxu0 0
        %5045 = vmatprep.subr.bf16.mxu0 0
        %5046 = vmatpush1.bf16.msra.mxu0 0
        %5047 = vmatprep.subr.bf16.mxu0 0
        %5048 = vmatpush1.bf16.msra.mxu0 %v5031
        %5049 = vmatprep.subr.bf16.mxu0 0
        %5050 = vmatpush1.bf16.msra.mxu0 %v5030
        %5051 = vmatprep.subr.bf16.mxu0 0
        %5052 = vmatpush1.bf16.msra.mxu0 %v5029
        %5053 = vmatprep.subr.bf16.mxu0 0
        %5054 = vmatpush1.bf16.msra.mxu0 %v5028
        %5055 = vmatprep.subr.bf16.mxu0 0
        %5056 = vmatpush1.bf16.msra.mxu0 %v5027
        %5057 = vmatprep.subr.bf16.mxu0 0
        %5058 = vmatpush2.bf16.msra.mxu0 0
        %5059 = vmatprep.subr.bf16.mxu0 0
        %5060 = vmatpush2.bf16.msra.mxu0 0
        %5061 = vmatprep.subr.bf16.mxu0 0
        %5062 = vmatpush2.bf16.msra.mxu0 0
        %5063 = vmatprep.subr.bf16.mxu0 0
        %5064 = vmatpush2.bf16.msra.mxu0 0
        %5065 = vmatprep.subr.bf16.mxu0 0
        %5066 = vmatpush2.bf16.msra.mxu0 0
        %5067 = vmatprep.subr.bf16.mxu0 0
        %5068 = vmatpush2.bf16.msra.mxu0 0
        %5069 = vmatprep.subr.bf16.mxu0 0
        %5070 = vmatpush2.bf16.msra.mxu0 0
        %5071 = vmatprep.subr.bf16.mxu0 0
        %5072 = vmatpush2.bf16.msra.mxu0 0
        %5073 = vmatprep.mubr.bf16.mxu0 0
        %5074 = vmatmul.mubr.bf16.gmra.mxu0 %v5039
        %v5075 = vpop.f32.mrf.mxu0
        %v5076 = vadd.f32 0.0, %v5075
        %v5077 = vpop.f32.mrf.mxu0
        %v5078 = vpop.f32.mrf.mxu0
        %v5079 = vpop.f32.mrf.mxu0
        %5080 = vdwg.mxu0
        %v5091 = vunpack.c.l.b16 %v4985
        %v5092 = vunpack.c.l.b16 %v4986
        %v5093 = vunpack.c.l.b16 %v4987
        %v5094 = vunpack.c.l.b16 %v4988
        %v5095 = vunpack.c.l.b16 %v4989
        %v5096 = vunpack.c.l.b16 %v4990
        %v5097 = vunpack.c.l.b16 %v4991
        %v5098 = vunpack.c.l.b16 %v4992
        %v5099 = vunpack.c.l.b16 %v4993
        %v5100 = vunpack.c.l.b16 %v4994
        %v5101 = vpack.c.b16 %v5092, %v5091
        %v5102 = vpack.c.b16 %v5094, %v5093
        %v5103 = vpack.c.b16 %v5096, %v5095
        %v5104 = vpack.c.b16 %v5098, %v5097
        %v5105 = vpack.c.b16 %v5100, %v5099
        %v5112 = vsel %vm5037, %v4984, 0
        %5114 = vmatprep.subr.bf16.mxu0 0
        %5115 = vmatpush1.bf16.msra.mxu0 0
        %5116 = vmatprep.subr.bf16.mxu0 0
        %5117 = vmatpush1.bf16.msra.mxu0 0
        %5118 = vmatprep.subr.bf16.mxu0 0
        %5119 = vmatpush1.bf16.msra.mxu0 0
        %5120 = vmatprep.subr.bf16.mxu0 0
        %5121 = vmatpush1.bf16.msra.mxu0 %v5105
        %5122 = vmatprep.subr.bf16.mxu0 0
        %5123 = vmatpush1.bf16.msra.mxu0 %v5104
        %5124 = vmatprep.subr.bf16.mxu0 0
        %5125 = vmatpush1.bf16.msra.mxu0 %v5103
        %5126 = vmatprep.subr.bf16.mxu0 0
        %5127 = vmatpush1.bf16.msra.mxu0 %v5102
        %5128 = vmatprep.subr.bf16.mxu0 0
        %5129 = vmatpush1.bf16.msra.mxu0 %v5101
        %5130 = vmatprep.subr.bf16.mxu0 0
        %5131 = vmatpush2.bf16.msra.mxu0 0
        %5132 = vmatprep.subr.bf16.mxu0 0
        %5133 = vmatpush2.bf16.msra.mxu0 0
        %5134 = vmatprep.subr.bf16.mxu0 0
        %5135 = vmatpush2.bf16.msra.mxu0 0
        %5136 = vmatprep.subr.bf16.mxu0 0
        %5137 = vmatpush2.bf16.msra.mxu0 0
        %5138 = vmatprep.subr.bf16.mxu0 0
        %5139 = vmatpush2.bf16.msra.mxu0 0
        %5140 = vmatprep.subr.bf16.mxu0 0
        %5141 = vmatpush2.bf16.msra.mxu0 0
        %5142 = vmatprep.subr.bf16.mxu0 0
        %5143 = vmatpush2.bf16.msra.mxu0 0
        %5144 = vmatprep.subr.bf16.mxu0 0
        %5145 = vmatpush2.bf16.msra.mxu0 0
        %5146 = vmatprep.mubr.bf16.mxu0 0
        %5147 = vmatmul.mubr.bf16.gmra.mxu0 %v5112
        %v5148 = vpop.f32.mrf.mxu0
        %v5149 = vadd.f32 %v5076, %v5148
        %v5150 = vpop.f32.mrf.mxu0
        %v5151 = vpop.f32.mrf.mxu0
        %v5152 = vpop.f32.mrf.mxu0
        %5153 = vdwg.mxu0
        %v5154 = vpack.c.bf16 %v4981, %v4981
        %s5155 = scalar_lea.vmem %s9, 80
        %v5156 = vld [vmem:[%s5155] sm:$0xf]
        %v5157 = vld [vmem:[%s5155 + $0x4] sm:$0xf]
        %v5158 = vld [vmem:[%s5155 + $0x8] sm:$0xf]
        %v5159 = vld [vmem:[%s5155 + $0xc] sm:$0xf]
        %v5160 = vld [vmem:[%s5155 + $0x10] sm:$0xf]
        %v5161 = vld [vmem:[%s5155 + $0x14] sm:$0xf]
        %v5162 = vld [vmem:[%s5155 + $0x18] sm:$0xf]
        %v5163 = vld [vmem:[%s5155 + $0x1c] sm:$0xf]
        %v5164 = vld [vmem:[%s5155 + $0x20] sm:$0xf]
        %v5165 = vld [vmem:[%s5155 + $0x24] sm:$0xf]
        %v5176 = vunpack.c.l.b16 %v5156
        %v5177 = vunpack.c.l.b16 %v5157
        %v5178 = vunpack.c.l.b16 %v5158
        %v5179 = vunpack.c.l.b16 %v5159
        %v5180 = vunpack.c.l.b16 %v5160
        %v5181 = vunpack.c.l.b16 %v5161
        %v5182 = vunpack.c.l.b16 %v5162
        %v5183 = vunpack.c.l.b16 %v5163
        %v5184 = vunpack.c.l.b16 %v5164
        %v5185 = vunpack.c.l.b16 %v5165
        %v5186 = vpack.c.b16 %v5177, %v5176
        %v5187 = vpack.c.b16 %v5179, %v5178
        %v5188 = vpack.c.b16 %v5181, %v5180
        %v5189 = vpack.c.b16 %v5183, %v5182
        %v5190 = vpack.c.b16 %v5185, %v5184
        %v5197 = vsel %vm5037, %v5154, 0
        %5199 = vmatprep.subr.bf16.mxu0 0
        %5200 = vmatpush1.bf16.msra.mxu0 0
        %5201 = vmatprep.subr.bf16.mxu0 0
        %5202 = vmatpush1.bf16.msra.mxu0 0
        %5203 = vmatprep.subr.bf16.mxu0 0
        %5204 = vmatpush1.bf16.msra.mxu0 0
        %5205 = vmatprep.subr.bf16.mxu0 0
        %5206 = vmatpush1.bf16.msra.mxu0 %v5190
        %5207 = vmatprep.subr.bf16.mxu0 0
        %5208 = vmatpush1.bf16.msra.mxu0 %v5189
        %5209 = vmatprep.subr.bf16.mxu0 0
        %5210 = vmatpush1.bf16.msra.mxu0 %v5188
        %5211 = vmatprep.subr.bf16.mxu0 0
        %5212 = vmatpush1.bf16.msra.mxu0 %v5187
        %5213 = vmatprep.subr.bf16.mxu0 0
        %5214 = vmatpush1.bf16.msra.mxu0 %v5186
        %5215 = vmatprep.subr.bf16.mxu0 0
        %5216 = vmatpush2.bf16.msra.mxu0 0
        %5217 = vmatprep.subr.bf16.mxu0 0
        %5218 = vmatpush2.bf16.msra.mxu0 0
        %5219 = vmatprep.subr.bf16.mxu0 0
        %5220 = vmatpush2.bf16.msra.mxu0 0
        %5221 = vmatprep.subr.bf16.mxu0 0
        %5222 = vmatpush2.bf16.msra.mxu0 0
        %5223 = vmatprep.subr.bf16.mxu0 0
        %5224 = vmatpush2.bf16.msra.mxu0 0
        %5225 = vmatprep.subr.bf16.mxu0 0
        %5226 = vmatpush2.bf16.msra.mxu0 0
        %5227 = vmatprep.subr.bf16.mxu0 0
        %5228 = vmatpush2.bf16.msra.mxu0 0
        %5229 = vmatprep.subr.bf16.mxu0 0
        %5230 = vmatpush2.bf16.msra.mxu0 0
        %5231 = vmatprep.mubr.bf16.mxu0 0
        %5232 = vmatmul.mubr.bf16.gmra.mxu0 %v5197
        %v5233 = vpop.f32.mrf.mxu0
        %v5234 = vadd.f32 0.0, %v5233
        %v5235 = vpop.f32.mrf.mxu0
        %v5236 = vpop.f32.mrf.mxu0
        %v5237 = vpop.f32.mrf.mxu0
        %5238 = vdwg.mxu0
        %v5239 = vadd.f32 %v5149, %v5234
        %v5240 = vpack.c.bf16 %v4982, %v4982
        %s5241 = scalar_lea.vmem %s9, 120
        %v5242 = vld [vmem:[%s5241] sm:$0xf]
        %v5243 = vld [vmem:[%s5241 + $0x4] sm:$0xf]
        %v5244 = vld [vmem:[%s5241 + $0x8] sm:$0xf]
        %v5245 = vld [vmem:[%s5241 + $0xc] sm:$0xf]
        %v5246 = vld [vmem:[%s5241 + $0x10] sm:$0xf]
        %v5247 = vld [vmem:[%s5241 + $0x14] sm:$0xf]
        %v5248 = vld [vmem:[%s5241 + $0x18] sm:$0xf]
        %v5249 = vld [vmem:[%s5241 + $0x1c] sm:$0xf]
        %v5250 = vld [vmem:[%s5241 + $0x20] sm:$0xf]
        %v5251 = vld [vmem:[%s5241 + $0x24] sm:$0xf]
        %v5262 = vunpack.c.l.b16 %v5242
        %v5263 = vunpack.c.l.b16 %v5243
        %v5264 = vunpack.c.l.b16 %v5244
        %v5265 = vunpack.c.l.b16 %v5245
        %v5266 = vunpack.c.l.b16 %v5246
        %v5267 = vunpack.c.l.b16 %v5247
        %v5268 = vunpack.c.l.b16 %v5248
        %v5269 = vunpack.c.l.b16 %v5249
        %v5270 = vunpack.c.l.b16 %v5250
        %v5271 = vunpack.c.l.b16 %v5251
        %v5272 = vpack.c.b16 %v5263, %v5262
        %v5273 = vpack.c.b16 %v5265, %v5264
        %v5274 = vpack.c.b16 %v5267, %v5266
        %v5275 = vpack.c.b16 %v5269, %v5268
        %v5276 = vpack.c.b16 %v5271, %v5270
        %v5283 = vsel %vm5037, %v5240, 0
        %5285 = vmatprep.subr.bf16.mxu0 0
        %5286 = vmatpush1.bf16.msra.mxu0 0
        %5287 = vmatprep.subr.bf16.mxu0 0
        %5288 = vmatpush1.bf16.msra.mxu0 0
        %5289 = vmatprep.subr.bf16.mxu0 0
        %5290 = vmatpush1.bf16.msra.mxu0 0
        %5291 = vmatprep.subr.bf16.mxu0 0
        %5292 = vmatpush1.bf16.msra.mxu0 %v5276
        %5293 = vmatprep.subr.bf16.mxu0 0
        %5294 = vmatpush1.bf16.msra.mxu0 %v5275
        %5295 = vmatprep.subr.bf16.mxu0 0
        %5296 = vmatpush1.bf16.msra.mxu0 %v5274
        %5297 = vmatprep.subr.bf16.mxu0 0
        %5298 = vmatpush1.bf16.msra.mxu0 %v5273
        %5299 = vmatprep.subr.bf16.mxu0 0
        %5300 = vmatpush1.bf16.msra.mxu0 %v5272
        %5301 = vmatprep.subr.bf16.mxu0 0
        %5302 = vmatpush2.bf16.msra.mxu0 0
        %5303 = vmatprep.subr.bf16.mxu0 0
        %5304 = vmatpush2.bf16.msra.mxu0 0
        %5305 = vmatprep.subr.bf16.mxu0 0
        %5306 = vmatpush2.bf16.msra.mxu0 0
        %5307 = vmatprep.subr.bf16.mxu0 0
        %5308 = vmatpush2.bf16.msra.mxu0 0
        %5309 = vmatprep.subr.bf16.mxu0 0
        %5310 = vmatpush2.bf16.msra.mxu0 0
        %5311 = vmatprep.subr.bf16.mxu0 0
        %5312 = vmatpush2.bf16.msra.mxu0 0
        %5313 = vmatprep.subr.bf16.mxu0 0
        %5314 = vmatpush2.bf16.msra.mxu0 0
        %5315 = vmatprep.subr.bf16.mxu0 0
        %5316 = vmatpush2.bf16.msra.mxu0 0
        %5317 = vmatprep.mubr.bf16.mxu0 0
        %5318 = vmatmul.mubr.bf16.gmra.mxu0 %v5283
        %v5319 = vpop.f32.mrf.mxu0
        %v5320 = vadd.f32 0.0, %v5319
        %v5321 = vpop.f32.mrf.mxu0
        %v5322 = vpop.f32.mrf.mxu0
        %v5323 = vpop.f32.mrf.mxu0
        %5324 = vdwg.mxu0
        %v5325 = vadd.f32 %v5239, %v5320
        %v5326 = vpack.c.bf16 %v4983, %v4983
        %s5327 = scalar_lea.vmem %s9, 160
        %v5328 = vld [vmem:[%s5327] sm:$0xf]
        %v5329 = vld [vmem:[%s5327 + $0x4] sm:$0xf]
        %v5330 = vld [vmem:[%s5327 + $0x8] sm:$0xf]
        %v5331 = vld [vmem:[%s5327 + $0xc] sm:$0xf]
        %v5332 = vld [vmem:[%s5327 + $0x10] sm:$0xf]
        %v5333 = vld [vmem:[%s5327 + $0x14] sm:$0xf]
        %v5334 = vld [vmem:[%s5327 + $0x18] sm:$0xf]
        %v5335 = vld [vmem:[%s5327 + $0x1c] sm:$0xf]
        %v5336 = vld [vmem:[%s5327 + $0x20] sm:$0xf]
        %v5337 = vld [vmem:[%s5327 + $0x24] sm:$0xf]
        %v5348 = vunpack.c.l.b16 %v5328
        %v5349 = vunpack.c.l.b16 %v5329
        %v5350 = vunpack.c.l.b16 %v5330
        %v5351 = vunpack.c.l.b16 %v5331
        %v5352 = vunpack.c.l.b16 %v5332
        %v5353 = vunpack.c.l.b16 %v5333
        %v5354 = vunpack.c.l.b16 %v5334
        %v5355 = vunpack.c.l.b16 %v5335
        %v5356 = vunpack.c.l.b16 %v5336
        %v5357 = vunpack.c.l.b16 %v5337
        %v5358 = vpack.c.b16 %v5349, %v5348
        %v5359 = vpack.c.b16 %v5351, %v5350
        %v5360 = vpack.c.b16 %v5353, %v5352
        %v5361 = vpack.c.b16 %v5355, %v5354
        %v5362 = vpack.c.b16 %v5357, %v5356
        %v5369 = vsel %vm5037, %v5326, 0
        %5371 = vmatprep.subr.bf16.mxu0 0
        %5372 = vmatpush1.bf16.msra.mxu0 0
        %5373 = vmatprep.subr.bf16.mxu0 0
        %5374 = vmatpush1.bf16.msra.mxu0 0
        %5375 = vmatprep.subr.bf16.mxu0 0
        %5376 = vmatpush1.bf16.msra.mxu0 0
        %5377 = vmatprep.subr.bf16.mxu0 0
        %5378 = vmatpush1.bf16.msra.mxu0 %v5362
        %5379 = vmatprep.subr.bf16.mxu0 0
        %5380 = vmatpush1.bf16.msra.mxu0 %v5361
        %5381 = vmatprep.subr.bf16.mxu0 0
        %5382 = vmatpush1.bf16.msra.mxu0 %v5360
        %5383 = vmatprep.subr.bf16.mxu0 0
        %5384 = vmatpush1.bf16.msra.mxu0 %v5359
        %5385 = vmatprep.subr.bf16.mxu0 0
        %5386 = vmatpush1.bf16.msra.mxu0 %v5358
        %5387 = vmatprep.subr.bf16.mxu0 0
        %5388 = vmatpush2.bf16.msra.mxu0 0
        %5389 = vmatprep.subr.bf16.mxu0 0
        %5390 = vmatpush2.bf16.msra.mxu0 0
        %5391 = vmatprep.subr.bf16.mxu0 0
        %5392 = vmatpush2.bf16.msra.mxu0 0
        %5393 = vmatprep.subr.bf16.mxu0 0
        %5394 = vmatpush2.bf16.msra.mxu0 0
        %5395 = vmatprep.subr.bf16.mxu0 0
        %5396 = vmatpush2.bf16.msra.mxu0 0
        %5397 = vmatprep.subr.bf16.mxu0 0
        %5398 = vmatpush2.bf16.msra.mxu0 0
        %5399 = vmatprep.subr.bf16.mxu0 0
        %5400 = vmatpush2.bf16.msra.mxu0 0
        %5401 = vmatprep.subr.bf16.mxu0 0
        %5402 = vmatpush2.bf16.msra.mxu0 0
        %5403 = vmatprep.mubr.bf16.mxu0 0
        %5404 = vmatmul.mubr.bf16.gmra.mxu0 %v5369
        %v5405 = vpop.f32.mrf.mxu0
        %v5406 = vadd.f32 0.0, %v5405
        %v5407 = vpop.f32.mrf.mxu0
        %v5408 = vpop.f32.mrf.mxu0
        %v5409 = vpop.f32.mrf.mxu0
        %5410 = vdwg.mxu0
        %v5411 = vadd.f32 %v5325, %v5406
        %v5412 = vld [vmem:[%s10] sm:$0x1]
        %v5414 = vlaneseq
        %v5415 = vshrl.u32 %v5414, 7
        %v5416 = vsub.s32 0, %v5415
        %v5417 = vrot.slane %v5412, %v5416
        %v5419 = vadd.f32 %v5411, %v5417
        %v5420 = vmax.f32 %v5419, 0.0
        %v5421 = vpack.c.bf16 %v5420, %v5420
        %v5422 = vld [vmem:[%s11] sm:$0xf]
        %v5423 = vld [vmem:[%s11 + $0x4] sm:$0xf]
        %v5424 = vld [vmem:[%s11 + $0x8] sm:$0xf]
        %v5425 = vld [vmem:[%s11 + $0xc] sm:$0xf]
        %v5426 = vld [vmem:[%s11 + $0x10] sm:$0xf]
        %v5427 = vld [vmem:[%s11 + $0x14] sm:$0xf]
        %v5428 = vld [vmem:[%s11 + $0x18] sm:$0xf]
        %v5429 = vld [vmem:[%s11 + $0x1c] sm:$0xf]
        %v5430 = vld [vmem:[%s11 + $0x20] sm:$0xf]
        %v5431 = vld [vmem:[%s11 + $0x24] sm:$0xf]
        %v5432 = vld [vmem:[%s11 + $0x28] sm:$0xf]
        %v5433 = vld [vmem:[%s11 + $0x2c] sm:$0xf]
        %v5434 = vld [vmem:[%s11 + $0x30] sm:$0xf]
        %v5435 = vld [vmem:[%s11 + $0x34] sm:$0xf]
        %v5436 = vld [vmem:[%s11 + $0x38] sm:$0xf]
        %v5437 = vld [vmem:[%s12] sm:$0x1]
        %v5439 = vlaneseq
        %v5440 = vshrl.u32 %v5439, 7
        %v5441 = vsub.s32 0, %v5440
        %v5442 = vrot.slane %v5437, %v5441
        %v5459 = vunpack.c.l.b16 %v5422
        %v5460 = vunpack.c.l.b16 %v5423
        %v5461 = vunpack.c.l.b16 %v5424
        %v5462 = vunpack.c.l.b16 %v5425
        %v5463 = vunpack.c.l.b16 %v5426
        %v5464 = vunpack.c.l.b16 %v5427
        %v5465 = vunpack.c.l.b16 %v5428
        %v5466 = vunpack.c.l.b16 %v5429
        %v5467 = vunpack.c.l.b16 %v5430
        %v5468 = vunpack.c.l.b16 %v5431
        %v5469 = vunpack.c.l.b16 %v5432
        %v5470 = vunpack.c.l.b16 %v5433
        %v5471 = vunpack.c.l.b16 %v5434
        %v5472 = vunpack.c.l.b16 %v5435
        %v5473 = vunpack.c.l.b16 %v5436
        %v5474 = vpack.c.b16 %v5460, %v5459
        %v5475 = vpack.c.b16 %v5462, %v5461
        %v5476 = vpack.c.b16 %v5464, %v5463
        %v5477 = vpack.c.b16 %v5466, %v5465
        %v5478 = vpack.c.b16 %v5468, %v5467
        %v5479 = vpack.c.b16 %v5470, %v5469
        %v5480 = vpack.c.b16 %v5472, %v5471
        %v5481 = vpack.c.b16 %v5473, %v5473
        %vm5489 = vcmask 982016
        %v5491 = vsel %vm5489, %v5421, 0
        %v5494 = vsel %vm3237, %v5481, 0
        %5496 = vmatprep.subr.bf16.mxu0 0
        %5497 = vmatpush1.bf16.msra.mxu0 %v5494
        %5498 = vmatprep.subr.bf16.mxu0 0
        %5499 = vmatpush1.bf16.msra.mxu0 %v5480
        %5500 = vmatprep.subr.bf16.mxu0 0
        %5501 = vmatpush1.bf16.msra.mxu0 %v5479
        %5502 = vmatprep.subr.bf16.mxu0 0
        %5503 = vmatpush1.bf16.msra.mxu0 %v5478
        %5504 = vmatprep.subr.bf16.mxu0 0
        %5505 = vmatpush1.bf16.msra.mxu0 %v5477
        %5506 = vmatprep.subr.bf16.mxu0 0
        %5507 = vmatpush1.bf16.msra.mxu0 %v5476
        %5508 = vmatprep.subr.bf16.mxu0 0
        %5509 = vmatpush1.bf16.msra.mxu0 %v5475
        %5510 = vmatprep.subr.bf16.mxu0 0
        %5511 = vmatpush1.bf16.msra.mxu0 %v5474
        %5512 = vmatprep.subr.bf16.mxu0 0
        %5513 = vmatpush2.bf16.msra.mxu0 0
        %5514 = vmatprep.subr.bf16.mxu0 0
        %5515 = vmatpush2.bf16.msra.mxu0 0
        %5516 = vmatprep.subr.bf16.mxu0 0
        %5517 = vmatpush2.bf16.msra.mxu0 0
        %5518 = vmatprep.subr.bf16.mxu0 0
        %5519 = vmatpush2.bf16.msra.mxu0 0
        %5520 = vmatprep.subr.bf16.mxu0 0
        %5521 = vmatpush2.bf16.msra.mxu0 0
        %5522 = vmatprep.subr.bf16.mxu0 0
        %5523 = vmatpush2.bf16.msra.mxu0 0
        %5524 = vmatprep.subr.bf16.mxu0 0
        %5525 = vmatpush2.bf16.msra.mxu0 0
        %5526 = vmatprep.subr.bf16.mxu0 0
        %5527 = vmatpush2.bf16.msra.mxu0 0
        %5528 = vmatprep.mubr.bf16.mxu0 0
        %5529 = vmatmul.mubr.bf16.gmra.mxu0 %v5491
        %v5530 = vpop.f32.mrf.mxu0
        %v5531 = vadd.f32 %v5442, %v5530
        %v5532 = vpop.f32.mrf.mxu0
        %v5533 = vpop.f32.mrf.mxu0
        %v5534 = vpop.f32.mrf.mxu0
        %5535 = vdwg.mxu0
        %v5536 = vmax.f32 %v5531, 0.0
        %v5537 = vpack.c.bf16 %v5536, %v5536
        %v5538 = vld [vmem:[%s13] sm:$0xf]
        %v5539 = vld [vmem:[%s13 + $0x4] sm:$0xf]
        %v5540 = vld [vmem:[%s13 + $0x8] sm:$0xf]
        %v5541 = vld [vmem:[%s13 + $0xc] sm:$0xf]
        %v5542 = vld [vmem:[%s13 + $0x10] sm:$0xf]
        %v5543 = vld [vmem:[%s13 + $0x14] sm:$0xf]
        %v5544 = vld [vmem:[%s13 + $0x18] sm:$0xf]
        %v5545 = vld [vmem:[%s13 + $0x1c] sm:$0xf]
        %v5546 = vld [vmem:[%s13 + $0x20] sm:$0xf]
        %v5547 = vld [vmem:[%s13 + $0x24] sm:$0xf]
        %v5548 = vld [vmem:[%s13 + $0x28] sm:$0x3]
        %v5549 = vld [vmem:[%s14] sm:$0x1]
        %v5551 = vlaneseq
        %v5552 = vshrl.u32 %v5551, 7
        %v5553 = vsub.s32 0, %v5552
        %v5554 = vrot.slane %v5549, %v5553
        %v5567 = vunpack.c.l.b16 %v5538
        %v5568 = vunpack.c.l.b16 %v5539
        %v5569 = vunpack.c.l.b16 %v5540
        %v5570 = vunpack.c.l.b16 %v5541
        %v5571 = vunpack.c.l.b16 %v5542
        %v5572 = vunpack.c.l.b16 %v5543
        %v5573 = vunpack.c.l.b16 %v5544
        %v5574 = vunpack.c.l.b16 %v5545
        %v5575 = vunpack.c.l.b16 %v5546
        %v5576 = vunpack.c.l.b16 %v5547
        %v5577 = vunpack.c.l.b16 %v5548
        %v5578 = vpack.c.b16 %v5568, %v5567
        %v5579 = vpack.c.b16 %v5570, %v5569
        %v5580 = vpack.c.b16 %v5572, %v5571
        %v5581 = vpack.c.b16 %v5574, %v5573
        %v5582 = vpack.c.b16 %v5576, %v5575
        %v5583 = vpack.c.b16 %v5577, %v5577
        %v5590 = vsel %vm3502, %v5537, 0
        %v5593 = vsel %vm3524, %v5583, 0
        %5595 = vmatprep.subr.bf16.mxu0 0
        %5596 = vmatpush1.bf16.msra.mxu0 0
        %5597 = vmatprep.subr.bf16.mxu0 0
        %5598 = vmatpush1.bf16.msra.mxu0 0
        %5599 = vmatprep.subr.bf16.mxu0 0
        %5600 = vmatpush1.bf16.msra.mxu0 %v5593
        %5601 = vmatprep.subr.bf16.mxu0 0
        %5602 = vmatpush1.bf16.msra.mxu0 %v5582
        %5603 = vmatprep.subr.bf16.mxu0 0
        %5604 = vmatpush1.bf16.msra.mxu0 %v5581
        %5605 = vmatprep.subr.bf16.mxu0 0
        %5606 = vmatpush1.bf16.msra.mxu0 %v5580
        %5607 = vmatprep.subr.bf16.mxu0 0
        %5608 = vmatpush1.bf16.msra.mxu0 %v5579
        %5609 = vmatprep.subr.bf16.mxu0 0
        %5610 = vmatpush1.bf16.msra.mxu0 %v5578
        %5611 = vmatprep.subr.bf16.mxu0 0
        %5612 = vmatpush2.bf16.msra.mxu0 0
        %5613 = vmatprep.subr.bf16.mxu0 0
        %5614 = vmatpush2.bf16.msra.mxu0 0
        %5615 = vmatprep.subr.bf16.mxu0 0
        %5616 = vmatpush2.bf16.msra.mxu0 0
        %5617 = vmatprep.subr.bf16.mxu0 0
        %5618 = vmatpush2.bf16.msra.mxu0 0
        %5619 = vmatprep.subr.bf16.mxu0 0
        %5620 = vmatpush2.bf16.msra.mxu0 0
        %5621 = vmatprep.subr.bf16.mxu0 0
        %5622 = vmatpush2.bf16.msra.mxu0 0
        %5623 = vmatprep.subr.bf16.mxu0 0
        %5624 = vmatpush2.bf16.msra.mxu0 0
        %5625 = vmatprep.subr.bf16.mxu0 0
        %5626 = vmatpush2.bf16.msra.mxu0 0
        %5627 = vmatprep.mubr.bf16.mxu0 0
        %5628 = vmatmul.mubr.bf16.gmra.mxu0 %v5590
        %v5629 = vpop.f32.mrf.mxu0
        %v5630 = vadd.f32 %v5554, %v5629
        %v5631 = vpop.f32.mrf.mxu0
        %v5632 = vpop.f32.mrf.mxu0
        %v5633 = vpop.f32.mrf.mxu0
        %5634 = vdwg.mxu0
        %5635 = vst [vmem:[%s488] sm:$0xff] %v5630
        %s5636 = sand.u32 %s357, 1
        %s5637 = scalar_lea.sflag [#allocation3], %s5636
        %s5638 = sand.u32 %s357, 1
        %s5639 = smul.addr %s5638, 8
        %s5640 = scalar_lea.vmem [#allocation2], %s5639
        // Predicated region
        $region81: #{net_forward.1} parent=79 // pred_check
          %p5641 = pneg %p367
        $region82: #{net_forward.1} parent=79 // pred_check_branch
          %5643 = sbr.rel (%p5641) target = $region84
        $region83: #{net_forward.1} parent=79 // pred_region
          %s5645 = ssub.s32 128, 128
          %5646 = vsyncadd %s5637, %s5645
          %s5647 = smul.addr %s29, 128
          %s5648 = scalar_lea.hbm %s15, %s5647
          %s5650 = sshll.u32 %s5640, 4
          %s5651 = int_to_ptr.vmem [resolvable:$true] %s5650
          %5653 = dma.vmem_to_hbm [thread:$0]  %s5651, 128, %s5648, %s5637
        $region84: #{net_forward.1} parent=79 // pred_fallthru
          _
      $region80: #{net_forward.1} parent=5 // pred_fallthru
        _
      %p5654 = scmp.le.s32.totalorder 2, %s24
      // Predicated region
      $region85: #{net_forward.1} parent=5 // pred_check
        %p5655 = pneg %p5654
      $region86: #{net_forward.1} parent=5 // pred_check_branch
        %5657 = sbr.rel (%p5655) target = $region88
      $region87: #{net_forward.1} parent=5 // pred_region
        %s5658 = ssub.s32 %s24, 2
        // Predicated region
        $region89: #{net_forward.1} parent=87 // pred_check
          %p5659 = pneg %p373
        $region90: #{net_forward.1} parent=87 // pred_check_branch
          %5661 = sbr.rel (%p5659) target = $region92
        $region91: #{net_forward.1} parent=87 // pred_region
          %s5662 = sand.u32 %s358, 1
          %s5663 = scalar_lea.sflag [#allocation3], %s5662
          %s5664 = sand.u32 %s358, 1
          %s5665 = smul.addr %s5664, 8
          %s5666 = scalar_lea.vmem [#allocation2], %s5665
          %5667 = dma.done %s5663, 128
        $region92: #{net_forward.1} parent=87 // pred_fallthru
          _
      $region88: #{net_forward.1} parent=5 // pred_fallthru
        _
    $region6: #{net_forward.1} parent=1 // loop_footer
      %s28 = sadd.s32 1, %s24
    $region7: #{net_forward.1} parent=1 // loop_footer_branch
      %23 = sbr.rel target = $region3
    $region8: #{net_forward.1} parent=1 // loop_exit
      _
    %5668 = vsyncpa [#allocation3], 1
    %s5669 = scalar_lea.sflag [#allocation3], 1
    %5670 = vsyncpa %s5669, 1

</llo_original>
